<compile_context>
chip_gen: v5e
topology: v5e:2x2
jax: 0.10.0
libtpu: 0.0.40
codegen_flags: <defaults>
</compile_context>

<pallas_src>
import functools

import numpy as np
import jax
import jax.numpy as jnp
from jax import lax
from jax.experimental import pallas as pl
from jax.experimental.pallas import tpu as pltpu

MIX_KERNELS = (3, 5, 7)
KMAX = max(MIX_KERNELS)
BN_EPS = 1e-5


# ----------------------------------------------------------------------------
# Fused Pallas kernel: MixConv(7x7 fused taps) + BN1 + ReLU + 1x1 + BN2 + ReLU
# ----------------------------------------------------------------------------
def _sepconv_kernel(xp_ref, wm_ref, s1_ref, b1_ref, wp_ref, s2_ref, b2_ref,
                    o_ref, acc_ref, *, kh, kw, th):
    """One (image, row-tile) of the fused SepConv block.

    xp_ref : (1, Hp, Wp, Cin)    bf16 padded input image (pad = KMAX // 2)
    wm_ref : (kh*kw, Cin, Cmid)  bf16 fused MixConv taps (raw conv weights)
    s1_ref : (1, Cmid)           f32 BN1 per-channel scale (gamma / sqrt(var+eps))
    b1_ref : (1, Cmid)           f32 folded conv-bias + BN1 bias
    wp_ref : (Cmid, Cout)        bf16 1x1 weights (raw)
    s2_ref : (1, Cout)           f32 BN2 per-channel scale
    b2_ref : (1, Cout)           f32 folded conv-bias + BN2 bias
    o_ref  : (1, th, W, Cout)    f32 output row tile
    acc_ref: (th*W, Cmid)        f32 VMEM scratch accumulator
    """
    ow = o_ref.shape[2]
    cout = o_ref.shape[3]
    cin = xp_ref.shape[3]
    m = th * ow

    r = pl.program_id(1)
    row0 = r * th
    if th % 8 == 0:
        row0 = pl.multiple_of(row0, 8)     # aligned halo-row loads

    acc_ref[...] = jnp.zeros_like(acc_ref)

    def dy_body(dy, carry):
        # (th, Wp, Cin) halo-row slab for this tap row; leading-dim dynamic
        # slice -> pure address math, no lane/sublane shuffle.
        rows = xp_ref[0, pl.ds(row0 + dy, th), :, :]
        for dx in range(kw):
            # TODO(synk): replace the sublane-offset slice with
            # pltpu.roll(rows, -dx, axis=1)[:, :ow, :] (XLU slot) once bf16
            # odd-shift sublane rolls are verified to lower cleanly.
            win = rows[:, dx:dx + ow, :].reshape(m, cin)   # (M, Cin) bf16
            w_tap = wm_ref[dy * kw + dx]                   # (Cin, Cmid) bf16
            # One full-height, non-batched MXU matmul per tap, accumulating
            # in f32 directly into the VMEM scratch (no register accumulator).
            # TODO(synk): tile Cmid in 128/256 column chunks for very wide
            # layers to cut the per-tap VMEM read-modify-write traffic.
            acc_ref[...] += jnp.dot(win, w_tap,
                                    preferred_element_type=jnp.float32)
        return carry

    lax.fori_loop(0, kh, dy_body, 0)

    # BN1 as f32 per-channel scale/bias applied post-matmul (kept out of the
    # bf16 weights for accuracy) + ReLU.
    mid = jnp.maximum(acc_ref[...] * s1_ref[...] + b1_ref[...], 0.0)

    # 1x1 projection + BN2 + ReLU while the intermediate is still in VMEM.
    y = jnp.dot(mid.astype(wp_ref.dtype), wp_ref[...],
                preferred_element_type=jnp.float32)
    y = jnp.maximum(y * s2_ref[...] + b2_ref[...], 0.0)

    # TODO(synk): for real MnasNet widths keep Cout a multiple of 128 (or
    # present a lane-dense (1, th, W*Cout) slab) so the store is unmasked.
    o_ref[...] = y.reshape(1, th, ow, cout).astype(o_ref.dtype)


# ----------------------------------------------------------------------------
# Parameter setup / BN preparation (plain JAX)
# ----------------------------------------------------------------------------
def _equal_ch_split(n_groups, out_ch):
    # torch.linspace(0, n_groups - 1e-6, out_ch).floor() channel split
    idx = np.floor(np.linspace(0.0, n_groups - 1e-6, out_ch)).astype(np.int64)
    return [int((idx == g).sum()) for g in range(n_groups)]


def bn_scale_bias(conv_bias, gamma, beta, mean, var, eps=BN_EPS):
    """Inference BN + conv bias as a per-channel f32 (scale, bias) pair."""
    inv = gamma / jnp.sqrt(var + eps)
    scale = inv
    bias = (conv_bias - mean) * inv + beta
    return (scale.reshape(1, -1).astype(jnp.float32),
            bias.reshape(1, -1).astype(jnp.float32))


def init_params(key, in_planes, out_planes):
    splits = _equal_ch_split(len(MIX_KERNELS), in_planes)
    keys = iter(jax.random.split(key, 32))

    def nrm(shape, s=0.1):
        return s * jax.random.normal(next(keys), shape, jnp.float32)

    def bn(c):
        return dict(
            gamma=1.0 + 0.1 * jax.random.normal(next(keys), (c,), jnp.float32),
            beta=nrm((c,)),
            mean=nrm((c,)),
            var=0.5 + jax.random.uniform(next(keys), (c,), jnp.float32),
        )

    return dict(
        mix=[dict(w=nrm((k, k, in_planes, cg)), b=nrm((cg,)))   # (kh,kw,Ci,Co)
             for k, cg in zip(MIX_KERNELS, splits)],
        bn1=bn(in_planes),
        w_pw=nrm((in_planes, out_planes)),                      # 1x1 as (Ci,Co)
        b_pw=nrm((out_planes,)),
        bn2=bn(out_planes),
        splits=splits,
    )


# ----------------------------------------------------------------------------
# Wrapper: layout plumbing + single pallas_call
# ----------------------------------------------------------------------------
def _pick_row_tile(h, w, target_m=256):
    """Smallest multiple-of-8 divisor of H with th*W >= target_m (MXU fill)."""
    for cand in range(8, h + 1, 8):
        if h % cand == 0 and cand * w >= target_m:
            return cand
    return h


def sepconv_forward(params, x_nchw, *, row_tile=None):
    n, cin, h, w = x_nchw.shape
    cmid = cin                                  # MixConv2d(in_planes, in_planes)
    cout = params["w_pw"].shape[1]
    pad = KMAX // 2

    # NCHW -> NHWC, cast to bf16 BEFORE padding (half the pad-pass bytes),
    # pad ONCE with the largest halo.
    # TODO(synk): fold the zero padding into an in-kernel halo DMA (pl.ANY +
    # make_async_copy with zero-filled VMEM halo) to drop this HBM pre-pass.
    x_nhwc = jnp.transpose(x_nchw, (0, 2, 3, 1)).astype(jnp.bfloat16)
    xp = jnp.pad(x_nhwc, ((0, 0), (pad, pad), (pad, pad), (0, 0)))
    hp, wp = h + 2 * pad, w + 2 * pad

    # Fuse the three MixConv branches into one KMAX x KMAX tap grid: smaller
    # kernels are zero-padded (centered), branch outputs land in their channel
    # columns -> one lane-dense Cmid-wide intermediate, no per-branch concat.
    # TODO(synk): when MXU-bound at large Cin, split per-branch tap loops
    # (9+25+49 taps) instead of multiplying the zero-padded taps.
    w7 = jnp.zeros((KMAX, KMAX, cin, cmid), jnp.float32)
    off = 0
    for branch, k, cg in zip(params["mix"], MIX_KERNELS, params["splits"]):
        o = (KMAX - k) // 2
        w7 = w7.at[o:o + k, o:o + k, :, off:off + cg].set(branch["w"])
        off += cg
    w_mix = w7.reshape(KMAX * KMAX, cin, cmid).astype(jnp.bfloat16)
    b_mix_conv = jnp.concatenate([br["b"] for br in params["mix"]])

    s1, b1 = bn_scale_bias(b_mix_conv, **params["bn1"])
    s2, b2 = bn_scale_bias(params["b_pw"], **params["bn2"])
    w_pw = params["w_pw"].astype(jnp.bfloat16)

    # Row tiling: th*W >= 256 fills the 256-wide MXU M dimension on v6e/v7x
    # (two clean 128-passes on v5e) while keeping enough parallel grid steps.
    th = row_tile if row_tile is not None else _pick_row_tile(h, w)
    if h % th != 0:
        th = h   # TODO(synk): masked-tail cdiv grid instead of this fallback
    n_row = h // th
    m = th * w

    # Per-chip VMEM budget: tile-byte estimate with headroom, clamped to ~3/4
    # of physical VMEM (~48 MiB on v7x, ~96 MiB on v5e/v6e).
    est = (2 * hp * wp * cin * 2                  # double-buffered input block
           + 2 * m * cout * 4                     # double-buffered output tile
           + KMAX * KMAX * cin * cmid * 2 + cmid * cout * 2
           + m * cmid * 4                         # scratch accumulator
           + 2 * m * (cmid + cout) * 4)           # in-kernel live values
    try:
        cap = int(pltpu.get_tpu_info().vmem_capacity_bytes)
    except Exception:
        cap = 64 * 2 ** 20
    vmem_limit = int(min(max(4 * est, 32 * 2 ** 20), (3 * cap) // 4))

    # TODO(synk): for v7x-sized VMEM with large images, set
    # pipeline_mode=pl.Buffered(1) on the constant weight block / whole-image
    # block and row-tile the input via a manual halo-row DMA (pl.ANY +
    # make_async_copy + DMA semaphores) instead of the whole-image BlockSpec.
    out_nhwc = pl.pallas_call(
        functools.partial(_sepconv_kernel, kh=KMAX, kw=KMAX, th=th),
        out_shape=jax.ShapeDtypeStruct((n, h, w, cout), jnp.float32),
        grid_spec=pltpu.PrefetchScalarGridSpec(
            num_scalar_prefetch=0,
            grid=(n, n_row),
            in_specs=[
                pl.BlockSpec((1, hp, wp, cin), lambda b, r: (b, 0, 0, 0)),
                pl.BlockSpec((KMAX * KMAX, cin, cmid), lambda b, r: (0, 0, 0)),
                pl.BlockSpec((1, cmid), lambda b, r: (0, 0)),
                pl.BlockSpec((1, cmid), lambda b, r: (0, 0)),
                pl.BlockSpec((cmid, cout), lambda b, r: (0, 0)),
                pl.BlockSpec((1, cout), lambda b, r: (0, 0)),
                pl.BlockSpec((1, cout), lambda b, r: (0, 0)),
            ],
            out_specs=pl.BlockSpec((1, th, w, cout),
                                   lambda b, r: (b, r, 0, 0)),
            scratch_shapes=[pltpu.VMEM((m, cmid), jnp.float32)],
        ),
        compiler_params=pltpu.CompilerParams(
            dimension_semantics=("parallel", "parallel"),
            vmem_limit_bytes=vmem_limit),
    )(xp, w_mix, s1, b1, w_pw, s2, b2)

    return jnp.transpose(out_nhwc, (0, 3, 1, 2))


# ----------------------------------------------------------------------------
# Pure-JAX reference (f32, per-branch convs) for a correctness check
# ----------------------------------------------------------------------------
def reference_forward(params, x_nchw):
    x = x_nchw.astype(jnp.float32)

    def conv(inp, w_oihw, b, padding):
        y = lax.conv_general_dilated(
            inp, w_oihw, (1, 1), [(padding, padding), (padding, padding)],
            dimension_numbers=("NCHW", "OIHW", "NCHW"))
        return y + b[None, :, None, None]

    def bn(inp, p):
        g, be, m, v = p["gamma"], p["beta"], p["mean"], p["var"]
        return ((inp - m[None, :, None, None])
                / jnp.sqrt(v + BN_EPS)[None, :, None, None]
                * g[None, :, None, None] + be[None, :, None, None])

    # DwConvBNRelu: MixConv2d (three branches, channel concat) + BN + ReLU
    outs = []
    for branch, k in zip(params["mix"], MIX_KERNELS):
        wb = jnp.transpose(branch["w"], (3, 2, 0, 1))   # (kh,kw,Ci,Co) -> OIHW
        outs.append(conv(x, wb, branch["b"], k // 2))
    h1 = jax.nn.relu(bn(jnp.concatenate(outs, axis=1), params["bn1"]))

    # ConvBNRelu: 1x1 conv + BN + ReLU
    w2 = jnp.transpose(params["w_pw"], (1, 0))[:, :, None, None]
    h2 = jax.nn.relu(bn(conv(h1, w2, params["b_pw"], 0), params["bn2"]))
    return h2


if __name__ == "__main__":
    key = jax.random.PRNGKey(0)
    kx, kp = jax.random.split(key)
    in_planes, out_planes = 4, 8
    x = jax.random.normal(kx, (2, in_planes, 16, 16), jnp.float32)
    params = init_params(kp, in_planes, out_planes)

    y = jax.block_until_ready(sepconv_forward(params, x))
    y_ref = jax.block_until_ready(reference_forward(params, x))

    assert y.shape == (2, out_planes, 16, 16) and y.dtype == jnp.float32
    # bf16 operands with f32 accumulation -> bf16-appropriate tolerance.
    np.testing.assert_allclose(np.asarray(y), np.asarray(y_ref),
                               rtol=2e-2, atol=2e-2)
    print("KERNEL_OK")
</pallas_src>

<mosaic_0001>
module attributes {stable_mosaic.version = 11 : i64} {
  func.func @_sepconv_kernel(%arg0: i32, %arg1: i32, %arg2: memref<1x22x22x4xbf16, #tpu.memory_space<vmem>>, %arg3: memref<49x4x4xbf16, #tpu.memory_space<vmem>>, %arg4: memref<1x4xf32, #tpu.memory_space<vmem>>, %arg5: memref<1x4xf32, #tpu.memory_space<vmem>>, %arg6: memref<4x8xbf16, #tpu.memory_space<vmem>>, %arg7: memref<1x8xf32, #tpu.memory_space<vmem>>, %arg8: memref<1x8xf32, #tpu.memory_space<vmem>>, %arg9: memref<1x16x16x8xf32, #tpu.memory_space<vmem>>, %arg10: memref<256x4xf32, #tpu.memory_space<vmem>>) attributes {dimension_semantics = [#tpu.dimension_semantics<parallel>, #tpu.dimension_semantics<parallel>], iteration_bounds = array<i64: 2, 1>, scalar_prefetch = 0 : i64, scratch_operands = 1 : i64, tpu.core_type = #tpu.core_type<tc>, window_params = [{transform_indices = @transform_0, window_bounds = array<i64: 1, 22, 22, 4>}, {pipeline_mode = #tpu.pipeline_mode<synchronous>, transform_indices = @transform_1, window_bounds = array<i64: 49, 4, 4>}, {pipeline_mode = #tpu.pipeline_mode<synchronous>, transform_indices = @transform_2, window_bounds = array<i64: 1, 4>}, {pipeline_mode = #tpu.pipeline_mode<synchronous>, transform_indices = @transform_3, window_bounds = array<i64: 1, 4>}, {pipeline_mode = #tpu.pipeline_mode<synchronous>, transform_indices = @transform_4, window_bounds = array<i64: 4, 8>}, {pipeline_mode = #tpu.pipeline_mode<synchronous>, transform_indices = @transform_5, window_bounds = array<i64: 1, 8>}, {pipeline_mode = #tpu.pipeline_mode<synchronous>, transform_indices = @transform_6, window_bounds = array<i64: 1, 8>}, {transform_indices = @transform_7, window_bounds = array<i64: 1, 16, 16, 8>}]} {
    %c16_i32 = arith.constant 16 : i32
    %0 = arith.muli %arg1, %c16_i32 : i32
    %1 = tpu.assume_multiple %0, 8 : i32
    %cst = arith.constant 0.000000e+00 : f32
    %2 = vector.broadcast %cst : f32 to vector<256x4xf32>
    %c0 = arith.constant 0 : index
    %c0_0 = arith.constant 0 : index
    %3 = vector.load %arg10[%c0, %c0_0] : memref<256x4xf32, #tpu.memory_space<vmem>>, vector<256x4xf32>
    tpu.vector_store %arg10[%c0, %c0_0], %2 {strides = array<i32>} : memref<256x4xf32, #tpu.memory_space<vmem>>, vector<256x4xf32>,
    %c0_i32 = arith.constant 0 : i32
    %c7_i32 = arith.constant 7 : i32
    %4 = arith.addi %c0_i32, %c7_i32 : i32
    %c1_i32 = arith.constant 1 : i32
    scf.for %arg11 = %c0_i32 to %4 step %c1_i32  : i32 {
      %27 = arith.addi %1, %arg11 : i32
      %c0_21 = arith.constant 0 : index
      %28 = arith.index_cast %27 : i32 to index
      %c0_22 = arith.constant 0 : index
      %c0_23 = arith.constant 0 : index
      %29 = vector.load %arg2[%c0_21, %28, %c0_22, %c0_23] : memref<1x22x22x4xbf16, #tpu.memory_space<vmem>>, vector<1x16x22x4xbf16>
      %30 = vector.shape_cast %29 : vector<1x16x22x4xbf16> to vector<16x22x4xbf16>
      %31 = vector.extract_strided_slice %30 {offsets = [0, 0, 0], sizes = [16, 16, 4], strides = [1, 1, 1]} : vector<16x22x4xbf16> to vector<16x16x4xbf16>
      %32 = vector.shape_cast %31 : vector<16x16x4xbf16> to vector<256x4xbf16>
      %c7_i32_24 = arith.constant 7 : i32
      %33 = arith.muli %arg11, %c7_i32_24 : i32
      %c0_i32_25 = arith.constant 0 : i32
      %34 = arith.addi %33, %c0_i32_25 : i32
      %35 = arith.index_cast %34 : i32 to index
      %c0_26 = arith.constant 0 : index
      %c0_27 = arith.constant 0 : index
      %36 = vector.load %arg3[%35, %c0_26, %c0_27] : memref<49x4x4xbf16, #tpu.memory_space<vmem>>, vector<1x4x4xbf16>
      %37 = vector.shape_cast %36 : vector<1x4x4xbf16> to vector<4x4xbf16>
      %c0_28 = arith.constant 0 : index
      %c0_29 = arith.constant 0 : index
      %38 = vector.load %arg10[%c0_28, %c0_29] : memref<256x4xf32, #tpu.memory_space<vmem>>, vector<256x4xf32>
      %cst_30 = arith.constant dense<0.000000e+00> : vector<256x4xf32>
      %39 = tpu.matmul %32, %37, %cst_30 {dimension_numbers = #tpu.dot_dimension_numbers<[1], [0], [0], [1], [0, 0, 1, 1], [], []>} : vector<256x4xbf16>, vector<4x4xbf16>, vector<256x4xf32> -> vector<256x4xf32>
      %40 = arith.addf %38, %39 : vector<256x4xf32>
      %c0_31 = arith.constant 0 : index
      %c0_32 = arith.constant 0 : index
      %41 = vector.load %arg10[%c0_31, %c0_32] : memref<256x4xf32, #tpu.memory_space<vmem>>, vector<256x4xf32>
      tpu.vector_store %arg10[%c0_31, %c0_32], %40 {strides = array<i32>} : memref<256x4xf32, #tpu.memory_space<vmem>>, vector<256x4xf32>,
      %42 = vector.extract_strided_slice %30 {offsets = [0, 1, 0], sizes = [16, 16, 4], strides = [1, 1, 1]} : vector<16x22x4xbf16> to vector<16x16x4xbf16>
      %43 = vector.shape_cast %42 : vector<16x16x4xbf16> to vector<256x4xbf16>
      %c7_i32_33 = arith.constant 7 : i32
      %44 = arith.muli %arg11, %c7_i32_33 : i32
      %c1_i32_34 = arith.constant 1 : i32
      %45 = arith.addi %44, %c1_i32_34 : i32
      %46 = arith.index_cast %45 : i32 to index
      %c0_35 = arith.constant 0 : index
      %c0_36 = arith.constant 0 : index
      %47 = vector.load %arg3[%46, %c0_35, %c0_36] : memref<49x4x4xbf16, #tpu.memory_space<vmem>>, vector<1x4x4xbf16>
      %48 = vector.shape_cast %47 : vector<1x4x4xbf16> to vector<4x4xbf16>
      %c0_37 = arith.constant 0 : index
      %c0_38 = arith.constant 0 : index
      %49 = vector.load %arg10[%c0_37, %c0_38] : memref<256x4xf32, #tpu.memory_space<vmem>>, vector<256x4xf32>
      %cst_39 = arith.constant dense<0.000000e+00> : vector<256x4xf32>
      %50 = tpu.matmul %43, %48, %cst_39 {dimension_numbers = #tpu.dot_dimension_numbers<[1], [0], [0], [1], [0, 0, 1, 1], [], []>} : vector<256x4xbf16>, vector<4x4xbf16>, vector<256x4xf32> -> vector<256x4xf32>
      %51 = arith.addf %49, %50 : vector<256x4xf32>
      %c0_40 = arith.constant 0 : index
      %c0_41 = arith.constant 0 : index
      %52 = vector.load %arg10[%c0_40, %c0_41] : memref<256x4xf32, #tpu.memory_space<vmem>>, vector<256x4xf32>
      tpu.vector_store %arg10[%c0_40, %c0_41], %51 {strides = array<i32>} : memref<256x4xf32, #tpu.memory_space<vmem>>, vector<256x4xf32>,
      %53 = vector.extract_strided_slice %30 {offsets = [0, 2, 0], sizes = [16, 16, 4], strides = [1, 1, 1]} : vector<16x22x4xbf16> to vector<16x16x4xbf16>
      %54 = vector.shape_cast %53 : vector<16x16x4xbf16> to vector<256x4xbf16>
      %c7_i32_42 = arith.constant 7 : i32
      %55 = arith.muli %arg11, %c7_i32_42 : i32
      %c2_i32 = arith.constant 2 : i32
      %56 = arith.addi %55, %c2_i32 : i32
      %57 = arith.index_cast %56 : i32 to index
      %c0_43 = arith.constant 0 : index
      %c0_44 = arith.constant 0 : index
      %58 = vector.load %arg3[%57, %c0_43, %c0_44] : memref<49x4x4xbf16, #tpu.memory_space<vmem>>, vector<1x4x4xbf16>
      %59 = vector.shape_cast %58 : vector<1x4x4xbf16> to vector<4x4xbf16>
      %c0_45 = arith.constant 0 : index
      %c0_46 = arith.constant 0 : index
      %60 = vector.load %arg10[%c0_45, %c0_46] : memref<256x4xf32, #tpu.memory_space<vmem>>, vector<256x4xf32>
      %cst_47 = arith.constant dense<0.000000e+00> : vector<256x4xf32>
      %61 = tpu.matmul %54, %59, %cst_47 {dimension_numbers = #tpu.dot_dimension_numbers<[1], [0], [0], [1], [0, 0, 1, 1], [], []>} : vector<256x4xbf16>, vector<4x4xbf16>, vector<256x4xf32> -> vector<256x4xf32>
      %62 = arith.addf %60, %61 : vector<256x4xf32>
      %c0_48 = arith.constant 0 : index
      %c0_49 = arith.constant 0 : index
      %63 = vector.load %arg10[%c0_48, %c0_49] : memref<256x4xf32, #tpu.memory_space<vmem>>, vector<256x4xf32>
      tpu.vector_store %arg10[%c0_48, %c0_49], %62 {strides = array<i32>} : memref<256x4xf32, #tpu.memory_space<vmem>>, vector<256x4xf32>,
      %64 = vector.extract_strided_slice %30 {offsets = [0, 3, 0], sizes = [16, 16, 4], strides = [1, 1, 1]} : vector<16x22x4xbf16> to vector<16x16x4xbf16>
      %65 = vector.shape_cast %64 : vector<16x16x4xbf16> to vector<256x4xbf16>
      %c7_i32_50 = arith.constant 7 : i32
      %66 = arith.muli %arg11, %c7_i32_50 : i32
      %c3_i32 = arith.constant 3 : i32
      %67 = arith.addi %66, %c3_i32 : i32
      %68 = arith.index_cast %67 : i32 to index
      %c0_51 = arith.constant 0 : index
      %c0_52 = arith.constant 0 : index
      %69 = vector.load %arg3[%68, %c0_51, %c0_52] : memref<49x4x4xbf16, #tpu.memory_space<vmem>>, vector<1x4x4xbf16>
      %70 = vector.shape_cast %69 : vector<1x4x4xbf16> to vector<4x4xbf16>
      %c0_53 = arith.constant 0 : index
      %c0_54 = arith.constant 0 : index
      %71 = vector.load %arg10[%c0_53, %c0_54] : memref<256x4xf32, #tpu.memory_space<vmem>>, vector<256x4xf32>
      %cst_55 = arith.constant dense<0.000000e+00> : vector<256x4xf32>
      %72 = tpu.matmul %65, %70, %cst_55 {dimension_numbers = #tpu.dot_dimension_numbers<[1], [0], [0], [1], [0, 0, 1, 1], [], []>} : vector<256x4xbf16>, vector<4x4xbf16>, vector<256x4xf32> -> vector<256x4xf32>
      %73 = arith.addf %71, %72 : vector<256x4xf32>
      %c0_56 = arith.constant 0 : index
      %c0_57 = arith.constant 0 : index
      %74 = vector.load %arg10[%c0_56, %c0_57] : memref<256x4xf32, #tpu.memory_space<vmem>>, vector<256x4xf32>
      tpu.vector_store %arg10[%c0_56, %c0_57], %73 {strides = array<i32>} : memref<256x4xf32, #tpu.memory_space<vmem>>, vector<256x4xf32>,
      %75 = vector.extract_strided_slice %30 {offsets = [0, 4, 0], sizes = [16, 16, 4], strides = [1, 1, 1]} : vector<16x22x4xbf16> to vector<16x16x4xbf16>
      %76 = vector.shape_cast %75 : vector<16x16x4xbf16> to vector<256x4xbf16>
      %c7_i32_58 = arith.constant 7 : i32
      %77 = arith.muli %arg11, %c7_i32_58 : i32
      %c4_i32 = arith.constant 4 : i32
      %78 = arith.addi %77, %c4_i32 : i32
      %79 = arith.index_cast %78 : i32 to index
      %c0_59 = arith.constant 0 : index
      %c0_60 = arith.constant 0 : index
      %80 = vector.load %arg3[%79, %c0_59, %c0_60] : memref<49x4x4xbf16, #tpu.memory_space<vmem>>, vector<1x4x4xbf16>
      %81 = vector.shape_cast %80 : vector<1x4x4xbf16> to vector<4x4xbf16>
      %c0_61 = arith.constant 0 : index
      %c0_62 = arith.constant 0 : index
      %82 = vector.load %arg10[%c0_61, %c0_62] : memref<256x4xf32, #tpu.memory_space<vmem>>, vector<256x4xf32>
      %cst_63 = arith.constant dense<0.000000e+00> : vector<256x4xf32>
      %83 = tpu.matmul %76, %81, %cst_63 {dimension_numbers = #tpu.dot_dimension_numbers<[1], [0], [0], [1], [0, 0, 1, 1], [], []>} : vector<256x4xbf16>, vector<4x4xbf16>, vector<256x4xf32> -> vector<256x4xf32>
      %84 = arith.addf %82, %83 : vector<256x4xf32>
      %c0_64 = arith.constant 0 : index
      %c0_65 = arith.constant 0 : index
      %85 = vector.load %arg10[%c0_64, %c0_65] : memref<256x4xf32, #tpu.memory_space<vmem>>, vector<256x4xf32>
      tpu.vector_store %arg10[%c0_64, %c0_65], %84 {strides = array<i32>} : memref<256x4xf32, #tpu.memory_space<vmem>>, vector<256x4xf32>,
      %86 = vector.extract_strided_slice %30 {offsets = [0, 5, 0], sizes = [16, 16, 4], strides = [1, 1, 1]} : vector<16x22x4xbf16> to vector<16x16x4xbf16>
      %87 = vector.shape_cast %86 : vector<16x16x4xbf16> to vector<256x4xbf16>
      %c7_i32_66 = arith.constant 7 : i32
      %88 = arith.muli %arg11, %c7_i32_66 : i32
      %c5_i32 = arith.constant 5 : i32
      %89 = arith.addi %88, %c5_i32 : i32
      %90 = arith.index_cast %89 : i32 to index
      %c0_67 = arith.constant 0 : index
      %c0_68 = arith.constant 0 : index
      %91 = vector.load %arg3[%90, %c0_67, %c0_68] : memref<49x4x4xbf16, #tpu.memory_space<vmem>>, vector<1x4x4xbf16>
      %92 = vector.shape_cast %91 : vector<1x4x4xbf16> to vector<4x4xbf16>
      %c0_69 = arith.constant 0 : index
      %c0_70 = arith.constant 0 : index
      %93 = vector.load %arg10[%c0_69, %c0_70] : memref<256x4xf32, #tpu.memory_space<vmem>>, vector<256x4xf32>
      %cst_71 = arith.constant dense<0.000000e+00> : vector<256x4xf32>
      %94 = tpu.matmul %87, %92, %cst_71 {dimension_numbers = #tpu.dot_dimension_numbers<[1], [0], [0], [1], [0, 0, 1, 1], [], []>} : vector<256x4xbf16>, vector<4x4xbf16>, vector<256x4xf32> -> vector<256x4xf32>
      %95 = arith.addf %93, %94 : vector<256x4xf32>
      %c0_72 = arith.constant 0 : index
      %c0_73 = arith.constant 0 : index
      %96 = vector.load %arg10[%c0_72, %c0_73] : memref<256x4xf32, #tpu.memory_space<vmem>>, vector<256x4xf32>
      tpu.vector_store %arg10[%c0_72, %c0_73], %95 {strides = array<i32>} : memref<256x4xf32, #tpu.memory_space<vmem>>, vector<256x4xf32>,
      %97 = vector.extract_strided_slice %30 {offsets = [0, 6, 0], sizes = [16, 16, 4], strides = [1, 1, 1]} : vector<16x22x4xbf16> to vector<16x16x4xbf16>
      %98 = vector.shape_cast %97 : vector<16x16x4xbf16> to vector<256x4xbf16>
      %c7_i32_74 = arith.constant 7 : i32
      %99 = arith.muli %arg11, %c7_i32_74 : i32
      %c6_i32 = arith.constant 6 : i32
      %100 = arith.addi %99, %c6_i32 : i32
      %101 = arith.index_cast %100 : i32 to index
      %c0_75 = arith.constant 0 : index
      %c0_76 = arith.constant 0 : index
      %102 = vector.load %arg3[%101, %c0_75, %c0_76] : memref<49x4x4xbf16, #tpu.memory_space<vmem>>, vector<1x4x4xbf16>
      %103 = vector.shape_cast %102 : vector<1x4x4xbf16> to vector<4x4xbf16>
      %c0_77 = arith.constant 0 : index
      %c0_78 = arith.constant 0 : index
      %104 = vector.load %arg10[%c0_77, %c0_78] : memref<256x4xf32, #tpu.memory_space<vmem>>, vector<256x4xf32>
      %cst_79 = arith.constant dense<0.000000e+00> : vector<256x4xf32>
      %105 = tpu.matmul %98, %103, %cst_79 {dimension_numbers = #tpu.dot_dimension_numbers<[1], [0], [0], [1], [0, 0, 1, 1], [], []>} : vector<256x4xbf16>, vector<4x4xbf16>, vector<256x4xf32> -> vector<256x4xf32>
      %106 = arith.addf %104, %105 : vector<256x4xf32>
      %c0_80 = arith.constant 0 : index
      %c0_81 = arith.constant 0 : index
      %107 = vector.load %arg10[%c0_80, %c0_81] : memref<256x4xf32, #tpu.memory_space<vmem>>, vector<256x4xf32>
      tpu.vector_store %arg10[%c0_80, %c0_81], %106 {strides = array<i32>} : memref<256x4xf32, #tpu.memory_space<vmem>>, vector<256x4xf32>,
    }
    %c7_i32_1 = arith.constant 7 : i32
    %c0_2 = arith.constant 0 : index
    %c0_3 = arith.constant 0 : index
    %5 = vector.load %arg10[%c0_2, %c0_3] : memref<256x4xf32, #tpu.memory_space<vmem>>, vector<256x4xf32>
    %c0_4 = arith.constant 0 : index
    %c0_5 = arith.constant 0 : index
    %6 = vector.load %arg4[%c0_4, %c0_5] : memref<1x4xf32, #tpu.memory_space<vmem>>, vector<1x4xf32>
    %7 = vector.broadcast %6 : vector<1x4xf32> to vector<256x4xf32>
    %8 = arith.mulf %5, %7 : vector<256x4xf32>
    %c0_6 = arith.constant 0 : index
    %c0_7 = arith.constant 0 : index
    %9 = vector.load %arg5[%c0_6, %c0_7] : memref<1x4xf32, #tpu.memory_space<vmem>>, vector<1x4xf32>
    %10 = vector.broadcast %9 : vector<1x4xf32> to vector<256x4xf32>
    %11 = arith.addf %8, %10 : vector<256x4xf32>
    %cst_8 = arith.constant 0.000000e+00 : f32
    %12 = vector.broadcast %cst_8 : f32 to vector<256x4xf32>
    %13 = arith.maximumf %11, %12 : vector<256x4xf32>
    %14 = arith.truncf %13 : vector<256x4xf32> to vector<256x4xbf16>
    %c0_9 = arith.constant 0 : index
    %c0_10 = arith.constant 0 : index
    %15 = vector.load %arg6[%c0_9, %c0_10] : memref<4x8xbf16, #tpu.memory_space<vmem>>, vector<4x8xbf16>
    %cst_11 = arith.constant dense<0.000000e+00> : vector<256x8xf32>
    %16 = tpu.matmul %14, %15, %cst_11 {dimension_numbers = #tpu.dot_dimension_numbers<[1], [0], [0], [1], [0, 0, 1, 1], [], []>} : vector<256x4xbf16>, vector<4x8xbf16>, vector<256x8xf32> -> vector<256x8xf32>
    %c0_12 = arith.constant 0 : index
    %c0_13 = arith.constant 0 : index
    %17 = vector.load %arg7[%c0_12, %c0_13] : memref<1x8xf32, #tpu.memory_space<vmem>>, vector<1x8xf32>
    %18 = vector.broadcast %17 : vector<1x8xf32> to vector<256x8xf32>
    %19 = arith.mulf %16, %18 : vector<256x8xf32>
    %c0_14 = arith.constant 0 : index
    %c0_15 = arith.constant 0 : index
    %20 = vector.load %arg8[%c0_14, %c0_15] : memref<1x8xf32, #tpu.memory_space<vmem>>, vector<1x8xf32>
    %21 = vector.broadcast %20 : vector<1x8xf32> to vector<256x8xf32>
    %22 = arith.addf %19, %21 : vector<256x8xf32>
    %cst_16 = arith.constant 0.000000e+00 : f32
    %23 = vector.broadcast %cst_16 : f32 to vector<256x8xf32>
    %24 = arith.maximumf %22, %23 : vector<256x8xf32>
    %25 = vector.shape_cast %24 : vector<256x8xf32> to vector<1x16x16x8xf32>
    %c0_17 = arith.constant 0 : index
    %c0_18 = arith.constant 0 : index
    %c0_19 = arith.constant 0 : index
    %c0_20 = arith.constant 0 : index
    %26 = vector.load %arg9[%c0_17, %c0_18, %c0_19, %c0_20] : memref<1x16x16x8xf32, #tpu.memory_space<vmem>>, vector<1x16x16x8xf32>
    tpu.vector_store %arg9[%c0_17, %c0_18, %c0_19, %c0_20], %25 {strides = array<i32>} : memref<1x16x16x8xf32, #tpu.memory_space<vmem>>, vector<1x16x16x8xf32>,
    return
  }
  func.func @transform_0(%arg0: i32, %arg1: i32) -> (i32, i32, i32, i32) {
    %c0_i32 = arith.constant 0 : i32
    %c0_i32_0 = arith.constant 0 : i32
    %c0_i32_1 = arith.constant 0 : i32
    %c0_i32_2 = arith.constant 0 : i32
    return %arg0, %c0_i32, %c0_i32_0, %c0_i32_1 : i32, i32, i32, i32
  }
  func.func @transform_1(%arg0: i32, %arg1: i32) -> (i32, i32, i32) {
    %c0_i32 = arith.constant 0 : i32
    %c0_i32_0 = arith.constant 0 : i32
    %c0_i32_1 = arith.constant 0 : i32
    %c0_i32_2 = arith.constant 0 : i32
    return %c0_i32, %c0_i32_0, %c0_i32_1 : i32, i32, i32
  }
  func.func @transform_2(%arg0: i32, %arg1: i32) -> (i32, i32) {
    %c0_i32 = arith.constant 0 : i32
    %c0_i32_0 = arith.constant 0 : i32
    %c0_i32_1 = arith.constant 0 : i32
    return %c0_i32, %c0_i32_0 : i32, i32
  }
  func.func @transform_3(%arg0: i32, %arg1: i32) -> (i32, i32) {
    %c0_i32 = arith.constant 0 : i32
    %c0_i32_0 = arith.constant 0 : i32
    %c0_i32_1 = arith.constant 0 : i32
    return %c0_i32, %c0_i32_0 : i32, i32
  }
  func.func @transform_4(%arg0: i32, %arg1: i32) -> (i32, i32) {
    %c0_i32 = arith.constant 0 : i32
    %c0_i32_0 = arith.constant 0 : i32
    %c0_i32_1 = arith.constant 0 : i32
    return %c0_i32, %c0_i32_0 : i32, i32
  }
  func.func @transform_5(%arg0: i32, %arg1: i32) -> (i32, i32) {
    %c0_i32 = arith.constant 0 : i32
    %c0_i32_0 = arith.constant 0 : i32
    %c0_i32_1 = arith.constant 0 : i32
    return %c0_i32, %c0_i32_0 : i32, i32
  }
  func.func @transform_6(%arg0: i32, %arg1: i32) -> (i32, i32) {
    %c0_i32 = arith.constant 0 : i32
    %c0_i32_0 = arith.constant 0 : i32
    %c0_i32_1 = arith.constant 0 : i32
    return %c0_i32, %c0_i32_0 : i32, i32
  }
  func.func @transform_7(%arg0: i32, %arg1: i32) -> (i32, i32, i32, i32) {
    %c0_i32 = arith.constant 0 : i32
    %c0_i32_0 = arith.constant 0 : i32
    %c0_i32_1 = arith.constant 0 : i32
    return %arg0, %arg1, %c0_i32, %c0_i32_0 : i32, i32, i32, i32
  }
}

</mosaic_0001>

<llo_original>
// kernel: tpu_custom_call.1
$region0: #{tpu_custom_call.1}
  #allocation0 [shape = 'u32[]', space=smem, size = 0x4, offset = 0x4, fixed_abs, tag = 'smem constant byte address 0x4 - core index']
  #allocation1 [shape = 'u32[72,128]{1,0:T(1,128)}', space=vmem, size = 0x9000, scoped, tag = 'internal scratch']
  #allocation2 [shape = 'f32[256,4]{1,0:T(8,128)}', space=vmem, size = 0x20000, scoped, tag = 'scratch operand']
  %s0 = inlined_call_operand.vmem [shape: bf16[2,22,22,4], index: 0, kind: input, shape index: {}]
  %s1 = inlined_call_operand.vmem [shape: bf16[49,4,4], index: 1, kind: input, shape index: {}]
  %s2 = inlined_call_operand.vmem [shape: f32[1,4], index: 2, kind: input, shape index: {}]
  %s3 = inlined_call_operand.vmem [shape: f32[1,4], index: 3, kind: input, shape index: {}]
  %s4 = inlined_call_operand.vmem [shape: bf16[4,8], index: 4, kind: input, shape index: {}]
  %s5 = inlined_call_operand.vmem [shape: f32[1,8], index: 5, kind: input, shape index: {}]
  %s6 = inlined_call_operand.vmem [shape: f32[1,8], index: 6, kind: input, shape index: {}]
  %s7 = inlined_call_operand.vmem [shape: f32[2,16,16,8], index: 7, kind: output, shape index: {}]
  %s8 = sld [smem:[#allocation0]]
  $region68: #{tpu_custom_call.1} parent=0
    _
  %s10 = ssub.s32 1, %s8
  %s11 = scalar_select 0, %s10, %s8
  loop: start=0, step=1, limit=4
  $region2: #{tpu_custom_call.1} parent=0 // loop_pre_header
    _
  $region3: #{tpu_custom_call.1} parent=0 // loop_header
    %s13 = sphi 0, %s17
    %p14 = scmp.ge.s32.totalorder %s13, 4
    %s20 = sphi 0, %s32
    %s21 = sphi 0, %s28
    %s22 = sphi 0, %s20
    %s23 = sphi 0, %s21
    %s24 = sphi 0, %s22
    %s25 = sphi 0, %s23
    %s35 = sphi 0, %s37
    %s38 = sphi 0, %s35
    %s39 = sphi 0, %s38
    %s55 = sphi 0, %s39
    %s59 = sphi 0, %s59
    %s61 = sphi 0, %s59
    %s62 = sphi 0, %s61
    %s76 = sphi 0, %s62
    %s80 = sphi 0, %s80
    %s82 = sphi 0, %s80
    %s83 = sphi 0, %s82
    %s97 = sphi 0, %s83
    %s101 = sphi 0, %s101
    %s103 = sphi 0, %s101
    %s104 = sphi 0, %s103
    %s118 = sphi 0, %s104
    %s122 = sphi 0, %s122
    %s124 = sphi 0, %s122
    %s125 = sphi 0, %s124
    %s139 = sphi 0, %s125
    %s143 = sphi 0, %s143
    %s145 = sphi 0, %s143
    %s146 = sphi 0, %s145
    %s160 = sphi 0, %s146
    %s164 = sphi 0, %s164
    %s166 = sphi 0, %s164
    %s167 = sphi 0, %s166
    %s181 = sphi 0, %s167
    %s189 = sphi 0, %s191
    %s192 = sphi 0, %s189
    %s193 = sphi 0, %s192
    %s209 = sphi 0, %s193
  $region4: #{tpu_custom_call.1} parent=0 // loop_header_branch
    %16 = sbr.rel (%p14) target = $region8
  $region5: #{tpu_custom_call.1} parent=0 // loop_body
    %s18 = ssub.s32 %s13, 1
    %s19 = ssub.s32 %s13, 2
    %s26 = sadd.s32 1, %s21
    %p27 = scmp.ge.s32.totalorder %s26, 1
    %s28 = scalar_select %p27, 0, %s26
    %s29 = sadd.s32 1, %s20
    %s30 = scalar_select %p27, %s29, %s20
    %p31 = scmp.ge.s32.totalorder %s30, 2
    %s32 = scalar_select %p31, 0, %s30
    %s33 = ssub.s32 %s20, %s32
    %p34 = scmp.eq.s32.totalorder %s33, 0
    %s36 = sadd.s32 %s35, 1
    %s37 = scalar_select %p34, %s35, %s36
    %p40 = pneg %p34
    %p41 = scmp.eq.s32.totalorder %s13, 1
    %p42 = por %p40, %p41
    %p43 = scmp.ne.s32.totalorder %s35, %s38
    %p44 = scmp.eq.s32.totalorder %s13, 0
    %p45 = por %p43, %p44
    %p46 = scmp.ne.s32.totalorder %s35, %s38
    %p47 = scmp.eq.s32.totalorder %s18, 1
    %p48 = por %p46, %p47
    %p49 = scmp.ne.s32.totalorder %s38, %s39
    %p50 = scmp.eq.s32.totalorder %s18, 0
    %p51 = por %p49, %p50
    %p52 = scmp.ne.s32.totalorder %s38, %s39
    %p53 = scmp.eq.s32.totalorder %s19, 1
    %p54 = por %p52, %p53
    %p56 = scmp.ne.s32.totalorder %s39, %s55
    %p57 = scmp.eq.s32.totalorder %s19, 0
    %p58 = por %p56, %p57
    %s60 = sadd.s32 %s59, 1
    %p63 = scmp.eq.s32.totalorder %s13, 1
    %p64 = scmp.ne.s32.totalorder %s59, %s61
    %p65 = scmp.eq.s32.totalorder %s13, 0
    %p66 = por %p64, %p65
    %p67 = scmp.ne.s32.totalorder %s59, %s61
    %p68 = scmp.eq.s32.totalorder %s18, 1
    %p69 = por %p67, %p68
    %p70 = scmp.ne.s32.totalorder %s61, %s62
    %p71 = scmp.eq.s32.totalorder %s18, 0
    %p72 = por %p70, %p71
    %p73 = scmp.ne.s32.totalorder %s61, %s62
    %p74 = scmp.eq.s32.totalorder %s19, 1
    %p75 = por %p73, %p74
    %p77 = scmp.ne.s32.totalorder %s62, %s76
    %p78 = scmp.eq.s32.totalorder %s19, 0
    %p79 = por %p77, %p78
    %s81 = sadd.s32 %s80, 1
    %p84 = scmp.eq.s32.totalorder %s13, 1
    %p85 = scmp.ne.s32.totalorder %s80, %s82
    %p86 = scmp.eq.s32.totalorder %s13, 0
    %p87 = por %p85, %p86
    %p88 = scmp.ne.s32.totalorder %s80, %s82
    %p89 = scmp.eq.s32.totalorder %s18, 1
    %p90 = por %p88, %p89
    %p91 = scmp.ne.s32.totalorder %s82, %s83
    %p92 = scmp.eq.s32.totalorder %s18, 0
    %p93 = por %p91, %p92
    %p94 = scmp.ne.s32.totalorder %s82, %s83
    %p95 = scmp.eq.s32.totalorder %s19, 1
    %p96 = por %p94, %p95
    %p98 = scmp.ne.s32.totalorder %s83, %s97
    %p99 = scmp.eq.s32.totalorder %s19, 0
    %p100 = por %p98, %p99
    %s102 = sadd.s32 %s101, 1
    %p105 = scmp.eq.s32.totalorder %s13, 1
    %p106 = scmp.ne.s32.totalorder %s101, %s103
    %p107 = scmp.eq.s32.totalorder %s13, 0
    %p108 = por %p106, %p107
    %p109 = scmp.ne.s32.totalorder %s101, %s103
    %p110 = scmp.eq.s32.totalorder %s18, 1
    %p111 = por %p109, %p110
    %p112 = scmp.ne.s32.totalorder %s103, %s104
    %p113 = scmp.eq.s32.totalorder %s18, 0
    %p114 = por %p112, %p113
    %p115 = scmp.ne.s32.totalorder %s103, %s104
    %p116 = scmp.eq.s32.totalorder %s19, 1
    %p117 = por %p115, %p116
    %p119 = scmp.ne.s32.totalorder %s104, %s118
    %p120 = scmp.eq.s32.totalorder %s19, 0
    %p121 = por %p119, %p120
    %s123 = sadd.s32 %s122, 1
    %p126 = scmp.eq.s32.totalorder %s13, 1
    %p127 = scmp.ne.s32.totalorder %s122, %s124
    %p128 = scmp.eq.s32.totalorder %s13, 0
    %p129 = por %p127, %p128
    %p130 = scmp.ne.s32.totalorder %s122, %s124
    %p131 = scmp.eq.s32.totalorder %s18, 1
    %p132 = por %p130, %p131
    %p133 = scmp.ne.s32.totalorder %s124, %s125
    %p134 = scmp.eq.s32.totalorder %s18, 0
    %p135 = por %p133, %p134
    %p136 = scmp.ne.s32.totalorder %s124, %s125
    %p137 = scmp.eq.s32.totalorder %s19, 1
    %p138 = por %p136, %p137
    %p140 = scmp.ne.s32.totalorder %s125, %s139
    %p141 = scmp.eq.s32.totalorder %s19, 0
    %p142 = por %p140, %p141
    %s144 = sadd.s32 %s143, 1
    %p147 = scmp.eq.s32.totalorder %s13, 1
    %p148 = scmp.ne.s32.totalorder %s143, %s145
    %p149 = scmp.eq.s32.totalorder %s13, 0
    %p150 = por %p148, %p149
    %p151 = scmp.ne.s32.totalorder %s143, %s145
    %p152 = scmp.eq.s32.totalorder %s18, 1
    %p153 = por %p151, %p152
    %p154 = scmp.ne.s32.totalorder %s145, %s146
    %p155 = scmp.eq.s32.totalorder %s18, 0
    %p156 = por %p154, %p155
    %p157 = scmp.ne.s32.totalorder %s145, %s146
    %p158 = scmp.eq.s32.totalorder %s19, 1
    %p159 = por %p157, %p158
    %p161 = scmp.ne.s32.totalorder %s146, %s160
    %p162 = scmp.eq.s32.totalorder %s19, 0
    %p163 = por %p161, %p162
    %s165 = sadd.s32 %s164, 1
    %p168 = scmp.eq.s32.totalorder %s13, 1
    %p169 = scmp.ne.s32.totalorder %s164, %s166
    %p170 = scmp.eq.s32.totalorder %s13, 0
    %p171 = por %p169, %p170
    %p172 = scmp.ne.s32.totalorder %s164, %s166
    %p173 = scmp.eq.s32.totalorder %s18, 1
    %p174 = por %p172, %p173
    %p175 = scmp.ne.s32.totalorder %s166, %s167
    %p176 = scmp.eq.s32.totalorder %s18, 0
    %p177 = por %p175, %p176
    %p178 = scmp.ne.s32.totalorder %s166, %s167
    %p179 = scmp.eq.s32.totalorder %s19, 1
    %p180 = por %p178, %p179
    %p182 = scmp.ne.s32.totalorder %s167, %s181
    %p183 = scmp.eq.s32.totalorder %s19, 0
    %p184 = por %p182, %p183
    %s185 = ssub.s32 %s20, %s32
    %s186 = ssub.s32 %s21, %s28
    %s187 = sor.u32 %s185, %s186
    %p188 = scmp.eq.s32.totalorder %s187, 0
    %s190 = sadd.s32 %s189, 1
    %s191 = scalar_select %p188, %s189, %s190
    %p194 = pneg %p188
    %p195 = scmp.eq.s32.totalorder %s13, 1
    %p196 = por %p194, %p195
    %p197 = scmp.ne.s32.totalorder %s189, %s192
    %p198 = scmp.eq.s32.totalorder %s13, 0
    %p199 = por %p197, %p198
    %p200 = scmp.ne.s32.totalorder %s189, %s192
    %p201 = scmp.eq.s32.totalorder %s18, 1
    %p202 = por %p200, %p201
    %p203 = scmp.ne.s32.totalorder %s192, %s193
    %p204 = scmp.eq.s32.totalorder %s18, 0
    %p205 = por %p203, %p204
    %p206 = scmp.ne.s32.totalorder %s192, %s193
    %p207 = scmp.eq.s32.totalorder %s19, 1
    %p208 = por %p206, %p207
    %p210 = scmp.ne.s32.totalorder %s193, %s209
    %p211 = scmp.eq.s32.totalorder %s19, 0
    %p212 = por %p210, %p211
    %p213 = scmp.le.s32.totalorder 1, %s13
    %p214 = scmp.lt.s32.totalorder %s13, 3
    %p215 = pnand %p213, %p214
    %p216 = pneg %p215
    // Predicated region
    $region9: #{tpu_custom_call.1} parent=5 // pred_check
      _
    $region10: #{tpu_custom_call.1} parent=5 // pred_check_branch
      %218 = sbr.rel (%p215) target = $region12
    $region11: #{tpu_custom_call.1} parent=5 // pred_region
      %s219 = ssub.s32 %s13, 1
      // Predicated region
      $region13: #{tpu_custom_call.1} parent=11 // pred_check
        %p220 = pneg %p72
      $region14: #{tpu_custom_call.1} parent=11 // pred_check_branch
        %222 = sbr.rel (%p220) target = $region16
      $region15: #{tpu_custom_call.1} parent=11 // pred_region
        _
      $region16: #{tpu_custom_call.1} parent=11 // pred_fallthru
        _
      // Predicated region
      $region17: #{tpu_custom_call.1} parent=11 // pred_check
        %p223 = pneg %p93
      $region18: #{tpu_custom_call.1} parent=11 // pred_check_branch
        %225 = sbr.rel (%p223) target = $region20
      $region19: #{tpu_custom_call.1} parent=11 // pred_region
        _
      $region20: #{tpu_custom_call.1} parent=11 // pred_fallthru
        _
      // Predicated region
      $region21: #{tpu_custom_call.1} parent=11 // pred_check
        %p226 = pneg %p114
      $region22: #{tpu_custom_call.1} parent=11 // pred_check_branch
        %228 = sbr.rel (%p226) target = $region24
      $region23: #{tpu_custom_call.1} parent=11 // pred_region
        _
      $region24: #{tpu_custom_call.1} parent=11 // pred_fallthru
        _
      // Predicated region
      $region25: #{tpu_custom_call.1} parent=11 // pred_check
        %p229 = pneg %p135
      $region26: #{tpu_custom_call.1} parent=11 // pred_check_branch
        %231 = sbr.rel (%p229) target = $region28
      $region27: #{tpu_custom_call.1} parent=11 // pred_region
        _
      $region28: #{tpu_custom_call.1} parent=11 // pred_fallthru
        _
      // Predicated region
      $region29: #{tpu_custom_call.1} parent=11 // pred_check
        %p232 = pneg %p156
      $region30: #{tpu_custom_call.1} parent=11 // pred_check_branch
        %234 = sbr.rel (%p232) target = $region32
      $region31: #{tpu_custom_call.1} parent=11 // pred_region
        _
      $region32: #{tpu_custom_call.1} parent=11 // pred_fallthru
        _
      // Predicated region
      $region33: #{tpu_custom_call.1} parent=11 // pred_check
        %p235 = pneg %p177
      $region34: #{tpu_custom_call.1} parent=11 // pred_check_branch
        %237 = sbr.rel (%p235) target = $region36
      $region35: #{tpu_custom_call.1} parent=11 // pred_region
        _
      $region36: #{tpu_custom_call.1} parent=11 // pred_fallthru
        _
    $region12: #{tpu_custom_call.1} parent=5 // pred_fallthru
      _
    %p238 = scmp.lt.s32.totalorder %s13, 2
    // Predicated region
    $region37: #{tpu_custom_call.1} parent=5 // pred_check
      %p239 = pneg %p238
    $region38: #{tpu_custom_call.1} parent=5 // pred_check_branch
      %241 = sbr.rel (%p239) target = $region40
    $region39: #{tpu_custom_call.1} parent=5 // pred_region
      // Predicated region
      $region41: #{tpu_custom_call.1} parent=39 // pred_check
        %p242 = pneg %p45
      $region42: #{tpu_custom_call.1} parent=39 // pred_check_branch
        %244 = sbr.rel (%p242) target = $region44
      $region43: #{tpu_custom_call.1} parent=39 // pred_region
        %p245 = scmp.lt.s32.totalorder %s20, 1
        %s246 = scalar_select %p245, %s20, 1
        %s247 = smul.addr %s246, 66
        %s248 = smul.addr %s247, 4
        %s249 = scalar_lea.vmem %s0, %s248
      $region44: #{tpu_custom_call.1} parent=39 // pred_fallthru
        _
    $region40: #{tpu_custom_call.1} parent=5 // pred_fallthru
      _
    %p250 = scmp.le.s32.totalorder 1, %s13
    %p251 = scmp.lt.s32.totalorder %s13, 3
    %p252 = pnand %p250, %p251
    %p253 = pneg %p252
    // Predicated region
    $region45: #{tpu_custom_call.1} parent=5 // pred_check
      _
    $region46: #{tpu_custom_call.1} parent=5 // pred_check_branch
      %255 = sbr.rel (%p252) target = $region48
    $region47: #{tpu_custom_call.1} parent=5 // pred_region
      %s256 = ssub.s32 %s13, 1
      %p257 = scmp.lt.s32.totalorder %s22, 1
      %s258 = scalar_select %p257, %s22, 1
      %s259 = smul.addr %s258, 66
      %s260 = smul.addr %s259, 4
      %s261 = scalar_lea.vmem %s0, %s260
      %p262 = pneg %p51
      %p263 = pneg %p48
      %p264 = pneg %p72
      %p265 = pneg %p69
      %p266 = pneg %p93
      %p267 = pneg %p90
      %p268 = pneg %p114
      %p269 = pneg %p111
      %p270 = pneg %p135
      %p271 = pneg %p132
      %p272 = pneg %p156
      %p273 = pneg %p153
      %p274 = pneg %p177
      %p275 = pneg %p174
      %p276 = pneg %p205
      %p277 = pneg %p202
      %s278 = smul.u32 16, %s23
      %p279 = scmp.lt.s32.totalorder %s22, 1
      %s280 = scalar_select %p279, %s22, 1
      %p281 = scmp.lt.s32.totalorder %s278, 15
      %s282 = scalar_select %p281, %s278, 15
      %s283 = smul.addr %s282, 2
      %s284 = smul.addr %s280, 32
      %s285 = sadd.s32 %s283, %s284
      %s286 = smul.addr %s285, 8
      %s287 = scalar_lea.vmem %s7, %s286
      %p288 = scmp.lt.s32.totalorder %s22, 1
      %s289 = scalar_select %p288, %s22, 1
      %s290 = smul.addr %s289, 66
      %s291 = smul.addr %s290, 4
      %s292 = scalar_lea.vmem %s0, %s291
      %s293 = smul.u32 16, %s23
      %p294 = scmp.lt.s32.totalorder %s22, 1
      %s295 = scalar_select %p294, %s22, 1
      %p296 = scmp.lt.s32.totalorder %s293, 15
      %s297 = scalar_select %p296, %s293, 15
      %s298 = smul.addr %s297, 2
      %s299 = smul.addr %s295, 32
      %s300 = sadd.s32 %s298, %s299
      %s301 = smul.addr %s300, 8
      %s302 = scalar_lea.vmem %s7, %s301
      %s303 = smul.u32 16, %s23
      %s305 = smul.u32 %s23, 16
      %vm306 = vcmask 31744
      %307 = vst.msk [vmem:[#allocation2] sm:$0xff] %vm306, 0.0
      %308 = vst.msk [vmem:[#allocation2 + $0x8] sm:$0xff] %vm306, 0.0
      %309 = vst.msk [vmem:[#allocation2 + $0x10] sm:$0xff] %vm306, 0.0
      %310 = vst.msk [vmem:[#allocation2 + $0x18] sm:$0xff] %vm306, 0.0
      %311 = vst.msk [vmem:[#allocation2 + $0x20] sm:$0xff] %vm306, 0.0
      %312 = vst.msk [vmem:[#allocation2 + $0x28] sm:$0xff] %vm306, 0.0
      %313 = vst.msk [vmem:[#allocation2 + $0x30] sm:$0xff] %vm306, 0.0
      %314 = vst.msk [vmem:[#allocation2 + $0x38] sm:$0xff] %vm306, 0.0
      %315 = vst.msk [vmem:[#allocation2 + $0x40] sm:$0xff] %vm306, 0.0
      %316 = vst.msk [vmem:[#allocation2 + $0x48] sm:$0xff] %vm306, 0.0
      %317 = vst.msk [vmem:[#allocation2 + $0x50] sm:$0xff] %vm306, 0.0
      %318 = vst.msk [vmem:[#allocation2 + $0x58] sm:$0xff] %vm306, 0.0
      %319 = vst.msk [vmem:[#allocation2 + $0x60] sm:$0xff] %vm306, 0.0
      %320 = vst.msk [vmem:[#allocation2 + $0x68] sm:$0xff] %vm306, 0.0
      %321 = vst.msk [vmem:[#allocation2 + $0x70] sm:$0xff] %vm306, 0.0
      %322 = vst.msk [vmem:[#allocation2 + $0x78] sm:$0xff] %vm306, 0.0
      %323 = vst.msk [vmem:[#allocation2 + $0x80] sm:$0xff] %vm306, 0.0
      %324 = vst.msk [vmem:[#allocation2 + $0x88] sm:$0xff] %vm306, 0.0
      %325 = vst.msk [vmem:[#allocation2 + $0x90] sm:$0xff] %vm306, 0.0
      %326 = vst.msk [vmem:[#allocation2 + $0x98] sm:$0xff] %vm306, 0.0
      %327 = vst.msk [vmem:[#allocation2 + $0xa0] sm:$0xff] %vm306, 0.0
      %328 = vst.msk [vmem:[#allocation2 + $0xa8] sm:$0xff] %vm306, 0.0
      %329 = vst.msk [vmem:[#allocation2 + $0xb0] sm:$0xff] %vm306, 0.0
      %330 = vst.msk [vmem:[#allocation2 + $0xb8] sm:$0xff] %vm306, 0.0
      %331 = vst.msk [vmem:[#allocation2 + $0xc0] sm:$0xff] %vm306, 0.0
      %332 = vst.msk [vmem:[#allocation2 + $0xc8] sm:$0xff] %vm306, 0.0
      %333 = vst.msk [vmem:[#allocation2 + $0xd0] sm:$0xff] %vm306, 0.0
      %334 = vst.msk [vmem:[#allocation2 + $0xd8] sm:$0xff] %vm306, 0.0
      %335 = vst.msk [vmem:[#allocation2 + $0xe0] sm:$0xff] %vm306, 0.0
      %336 = vst.msk [vmem:[#allocation2 + $0xe8] sm:$0xff] %vm306, 0.0
      %337 = vst.msk [vmem:[#allocation2 + $0xf0] sm:$0xff] %vm306, 0.0
      %338 = vst.msk [vmem:[#allocation2 + $0xf8] sm:$0xff] %vm306, 0.0
      loop: start=0, step=1, limit=7
      $region49: #{tpu_custom_call.1} parent=47 // loop_pre_header
        _
      $region50: #{tpu_custom_call.1} parent=47 // loop_header
        %s340 = sphi 0, %s344
        %p341 = scmp.ge.s32.totalorder %s340, 7
      $region51: #{tpu_custom_call.1} parent=47 // loop_header_branch
        %343 = sbr.rel (%p341) target = $region55
      $region52: #{tpu_custom_call.1} parent=47 // loop_body
        %s345 = sadd.s32 %s305, %s340
        %s346 = smul.u32 %s345, 3
        %s347 = smul.addr %s346, 4
        %s348 = scalar_lea.vmem %s292, %s347
        %v349 = vld [vmem:[%s348] sm:$0xf]
        %v350 = vld [vmem:[%s348 + $0x4] sm:$0xf]
        %v351 = vld [vmem:[%s348 + $0x8] sm:$0x7]
        %v352 = vld [vmem:[%s348 + $0xc] sm:$0xf]
        %v353 = vld [vmem:[%s348 + $0x10] sm:$0xf]
        %v354 = vld [vmem:[%s348 + $0x14] sm:$0x7]
        %v355 = vld [vmem:[%s348 + $0x18] sm:$0xf]
        %v356 = vld [vmem:[%s348 + $0x1c] sm:$0xf]
        %v357 = vld [vmem:[%s348 + $0x20] sm:$0x7]
        %v358 = vld [vmem:[%s348 + $0x24] sm:$0xf]
        %v359 = vld [vmem:[%s348 + $0x28] sm:$0xf]
        %v360 = vld [vmem:[%s348 + $0x2c] sm:$0x7]
        %v361 = vld [vmem:[%s348 + $0x30] sm:$0xf]
        %v362 = vld [vmem:[%s348 + $0x34] sm:$0xf]
        %v363 = vld [vmem:[%s348 + $0x38] sm:$0x7]
        %v364 = vld [vmem:[%s348 + $0x3c] sm:$0xf]
        %v365 = vld [vmem:[%s348 + $0x40] sm:$0xf]
        %v366 = vld [vmem:[%s348 + $0x44] sm:$0x7]
        %v367 = vld [vmem:[%s348 + $0x48] sm:$0xf]
        %v368 = vld [vmem:[%s348 + $0x4c] sm:$0xf]
        %v369 = vld [vmem:[%s348 + $0x50] sm:$0x7]
        %v370 = vld [vmem:[%s348 + $0x54] sm:$0xf]
        %v371 = vld [vmem:[%s348 + $0x58] sm:$0xf]
        %v372 = vld [vmem:[%s348 + $0x5c] sm:$0x7]
        %v373 = vld [vmem:[%s348 + $0x60] sm:$0xf]
        %v374 = vld [vmem:[%s348 + $0x64] sm:$0xf]
        %v375 = vld [vmem:[%s348 + $0x68] sm:$0x7]
        %v376 = vld [vmem:[%s348 + $0x6c] sm:$0xf]
        %v377 = vld [vmem:[%s348 + $0x70] sm:$0xf]
        %v378 = vld [vmem:[%s348 + $0x74] sm:$0x7]
        %v379 = vld [vmem:[%s348 + $0x78] sm:$0xf]
        %v380 = vld [vmem:[%s348 + $0x7c] sm:$0xf]
        %v381 = vld [vmem:[%s348 + $0x80] sm:$0x7]
        %v382 = vld [vmem:[%s348 + $0x84] sm:$0xf]
        %v383 = vld [vmem:[%s348 + $0x88] sm:$0xf]
        %v384 = vld [vmem:[%s348 + $0x8c] sm:$0x7]
        %v385 = vld [vmem:[%s348 + $0x90] sm:$0xf]
        %v386 = vld [vmem:[%s348 + $0x94] sm:$0xf]
        %v387 = vld [vmem:[%s348 + $0x98] sm:$0x7]
        %v388 = vld [vmem:[%s348 + $0x9c] sm:$0xf]
        %v389 = vld [vmem:[%s348 + $0xa0] sm:$0xf]
        %v390 = vld [vmem:[%s348 + $0xa4] sm:$0x7]
        %v391 = vld [vmem:[%s348 + $0xa8] sm:$0xf]
        %v392 = vld [vmem:[%s348 + $0xac] sm:$0xf]
        %v393 = vld [vmem:[%s348 + $0xb0] sm:$0x7]
        %v394 = vld [vmem:[%s348 + $0xb4] sm:$0xf]
        %v395 = vld [vmem:[%s348 + $0xb8] sm:$0xf]
        %v396 = vld [vmem:[%s348 + $0xbc] sm:$0x7]
        %s397 = smul.u32 %s340, 7
        %s398 = smul.addr %s397, 2
        %s399 = scalar_lea.vmem %s1, %s398
        %v400 = vld [vmem:[%s399] sm:$0x3]
        %v401 = vld [vmem:[#allocation2] sm:$0xff]
        %v402 = vld [vmem:[#allocation2 + $0x8] sm:$0xff]
        %v403 = vld [vmem:[#allocation2 + $0x10] sm:$0xff]
        %v404 = vld [vmem:[#allocation2 + $0x18] sm:$0xff]
        %v405 = vld [vmem:[#allocation2 + $0x20] sm:$0xff]
        %v406 = vld [vmem:[#allocation2 + $0x28] sm:$0xff]
        %v407 = vld [vmem:[#allocation2 + $0x30] sm:$0xff]
        %v408 = vld [vmem:[#allocation2 + $0x38] sm:$0xff]
        %v409 = vld [vmem:[#allocation2 + $0x40] sm:$0xff]
        %v410 = vld [vmem:[#allocation2 + $0x48] sm:$0xff]
        %v411 = vld [vmem:[#allocation2 + $0x50] sm:$0xff]
        %v412 = vld [vmem:[#allocation2 + $0x58] sm:$0xff]
        %v413 = vld [vmem:[#allocation2 + $0x60] sm:$0xff]
        %v414 = vld [vmem:[#allocation2 + $0x68] sm:$0xff]
        %v415 = vld [vmem:[#allocation2 + $0x70] sm:$0xff]
        %v416 = vld [vmem:[#allocation2 + $0x78] sm:$0xff]
        %v417 = vld [vmem:[#allocation2 + $0x80] sm:$0xff]
        %v418 = vld [vmem:[#allocation2 + $0x88] sm:$0xff]
        %v419 = vld [vmem:[#allocation2 + $0x90] sm:$0xff]
        %v420 = vld [vmem:[#allocation2 + $0x98] sm:$0xff]
        %v421 = vld [vmem:[#allocation2 + $0xa0] sm:$0xff]
        %v422 = vld [vmem:[#allocation2 + $0xa8] sm:$0xff]
        %v423 = vld [vmem:[#allocation2 + $0xb0] sm:$0xff]
        %v424 = vld [vmem:[#allocation2 + $0xb8] sm:$0xff]
        %v425 = vld [vmem:[#allocation2 + $0xc0] sm:$0xff]
        %v426 = vld [vmem:[#allocation2 + $0xc8] sm:$0xff]
        %v427 = vld [vmem:[#allocation2 + $0xd0] sm:$0xff]
        %v428 = vld [vmem:[#allocation2 + $0xd8] sm:$0xff]
        %v429 = vld [vmem:[#allocation2 + $0xe0] sm:$0xff]
        %v430 = vld [vmem:[#allocation2 + $0xe8] sm:$0xff]
        %v431 = vld [vmem:[#allocation2 + $0xf0] sm:$0xff]
        %v432 = vld [vmem:[#allocation2 + $0xf8] sm:$0xff]
        %v465 = vunpack.c.l.b16 %v349
        %v466 = vunpack.c.l.b16 %v350
        %v467 = vunpack.c.l.b16 %v352
        %v468 = vunpack.c.l.b16 %v353
        %v469 = vunpack.c.l.b16 %v355
        %v470 = vunpack.c.l.b16 %v356
        %v471 = vunpack.c.l.b16 %v358
        %v472 = vunpack.c.l.b16 %v359
        %v473 = vunpack.c.l.b16 %v361
        %v474 = vunpack.c.l.b16 %v362
        %v475 = vunpack.c.l.b16 %v364
        %v476 = vunpack.c.l.b16 %v365
        %v477 = vunpack.c.l.b16 %v367
        %v478 = vunpack.c.l.b16 %v368
        %v479 = vunpack.c.l.b16 %v370
        %v480 = vunpack.c.l.b16 %v371
        %v481 = vunpack.c.l.b16 %v373
        %v482 = vunpack.c.l.b16 %v374
        %v483 = vunpack.c.l.b16 %v376
        %v484 = vunpack.c.l.b16 %v377
        %v485 = vunpack.c.l.b16 %v379
        %v486 = vunpack.c.l.b16 %v380
        %v487 = vunpack.c.l.b16 %v382
        %v488 = vunpack.c.l.b16 %v383
        %v489 = vunpack.c.l.b16 %v385
        %v490 = vunpack.c.l.b16 %v386
        %v491 = vunpack.c.l.b16 %v388
        %v492 = vunpack.c.l.b16 %v389
        %v493 = vunpack.c.l.b16 %v391
        %v494 = vunpack.c.l.b16 %v392
        %v495 = vunpack.c.l.b16 %v394
        %v496 = vunpack.c.l.b16 %v395
        %v497 = vpack.c.b16 %v466, %v465
        %v498 = vpack.c.b16 %v468, %v467
        %v499 = vpack.c.b16 %v470, %v469
        %v500 = vpack.c.b16 %v472, %v471
        %v501 = vpack.c.b16 %v474, %v473
        %v502 = vpack.c.b16 %v476, %v475
        %v503 = vpack.c.b16 %v478, %v477
        %v504 = vpack.c.b16 %v480, %v479
        %v505 = vpack.c.b16 %v482, %v481
        %v506 = vpack.c.b16 %v484, %v483
        %v507 = vpack.c.b16 %v486, %v485
        %v508 = vpack.c.b16 %v488, %v487
        %v509 = vpack.c.b16 %v490, %v489
        %v510 = vpack.c.b16 %v492, %v491
        %v511 = vpack.c.b16 %v494, %v493
        %v512 = vpack.c.b16 %v496, %v495
        %v514 = vsel %vm306, %v497, 0
        %v517 = vsel %vm306, %v498, 0
        %v520 = vsel %vm306, %v499, 0
        %v523 = vsel %vm306, %v500, 0
        %v526 = vsel %vm306, %v501, 0
        %v529 = vsel %vm306, %v502, 0
        %v532 = vsel %vm306, %v503, 0
        %v535 = vsel %vm306, %v504, 0
        %v538 = vsel %vm306, %v505, 0
        %v541 = vsel %vm306, %v506, 0
        %v544 = vsel %vm306, %v507, 0
        %v547 = vsel %vm306, %v508, 0
        %v550 = vsel %vm306, %v509, 0
        %v553 = vsel %vm306, %v510, 0
        %v556 = vsel %vm306, %v511, 0
        %v559 = vsel %vm306, %v512, 0
        %vm561 = vcmask 1041408
        %v563 = vsel %vm561, %v400, 0
        %565 = vmatpush.bf16.msra.mxu0 0
        %566 = vmatpush.bf16.msra.mxu0 0
        %567 = vmatpush.bf16.msra.mxu0 0
        %568 = vmatpush.bf16.msra.mxu0 0
        %569 = vmatpush.bf16.msra.mxu0 0
        %570 = vmatpush.bf16.msra.mxu0 0
        %571 = vmatpush.bf16.msra.mxu0 0
        %572 = vmatpush.bf16.msra.mxu0 %v563
        %573 = vmatmul.bf16.gmra.mxu0 %v514
        %v574 = vpop.f32.mrf.mxu0
        %v575 = vadd.f32 0.0, %v574
        %v576 = vpop.f32.mrf.mxu0
        %v577 = vadd.f32 0.0, %v576
        %578 = vmatmul.bf16.gmra.mxu0 %v517
        %v579 = vpop.f32.mrf.mxu0
        %v580 = vadd.f32 0.0, %v579
        %v581 = vpop.f32.mrf.mxu0
        %v582 = vadd.f32 0.0, %v581
        %583 = vmatmul.bf16.gmra.mxu0 %v520
        %v584 = vpop.f32.mrf.mxu0
        %v585 = vadd.f32 0.0, %v584
        %v586 = vpop.f32.mrf.mxu0
        %v587 = vadd.f32 0.0, %v586
        %588 = vmatmul.bf16.gmra.mxu0 %v523
        %v589 = vpop.f32.mrf.mxu0
        %v590 = vadd.f32 0.0, %v589
        %v591 = vpop.f32.mrf.mxu0
        %v592 = vadd.f32 0.0, %v591
        %593 = vmatmul.bf16.gmra.mxu0 %v526
        %v594 = vpop.f32.mrf.mxu0
        %v595 = vadd.f32 0.0, %v594
        %v596 = vpop.f32.mrf.mxu0
        %v597 = vadd.f32 0.0, %v596
        %598 = vmatmul.bf16.gmra.mxu0 %v529
        %v599 = vpop.f32.mrf.mxu0
        %v600 = vadd.f32 0.0, %v599
        %v601 = vpop.f32.mrf.mxu0
        %v602 = vadd.f32 0.0, %v601
        %603 = vmatmul.bf16.gmra.mxu0 %v532
        %v604 = vpop.f32.mrf.mxu0
        %v605 = vadd.f32 0.0, %v604
        %v606 = vpop.f32.mrf.mxu0
        %v607 = vadd.f32 0.0, %v606
        %608 = vmatmul.bf16.gmra.mxu0 %v535
        %v609 = vpop.f32.mrf.mxu0
        %v610 = vadd.f32 0.0, %v609
        %v611 = vpop.f32.mrf.mxu0
        %v612 = vadd.f32 0.0, %v611
        %613 = vmatmul.bf16.gmra.mxu0 %v538
        %v614 = vpop.f32.mrf.mxu0
        %v615 = vadd.f32 0.0, %v614
        %v616 = vpop.f32.mrf.mxu0
        %v617 = vadd.f32 0.0, %v616
        %618 = vmatmul.bf16.gmra.mxu0 %v541
        %v619 = vpop.f32.mrf.mxu0
        %v620 = vadd.f32 0.0, %v619
        %v621 = vpop.f32.mrf.mxu0
        %v622 = vadd.f32 0.0, %v621
        %623 = vmatmul.bf16.gmra.mxu0 %v544
        %v624 = vpop.f32.mrf.mxu0
        %v625 = vadd.f32 0.0, %v624
        %v626 = vpop.f32.mrf.mxu0
        %v627 = vadd.f32 0.0, %v626
        %628 = vmatmul.bf16.gmra.mxu0 %v547
        %v629 = vpop.f32.mrf.mxu0
        %v630 = vadd.f32 0.0, %v629
        %v631 = vpop.f32.mrf.mxu0
        %v632 = vadd.f32 0.0, %v631
        %633 = vmatmul.bf16.gmra.mxu0 %v550
        %v634 = vpop.f32.mrf.mxu0
        %v635 = vadd.f32 0.0, %v634
        %v636 = vpop.f32.mrf.mxu0
        %v637 = vadd.f32 0.0, %v636
        %638 = vmatmul.bf16.gmra.mxu0 %v553
        %v639 = vpop.f32.mrf.mxu0
        %v640 = vadd.f32 0.0, %v639
        %v641 = vpop.f32.mrf.mxu0
        %v642 = vadd.f32 0.0, %v641
        %643 = vmatmul.bf16.gmra.mxu0 %v556
        %v644 = vpop.f32.mrf.mxu0
        %v645 = vadd.f32 0.0, %v644
        %v646 = vpop.f32.mrf.mxu0
        %v647 = vadd.f32 0.0, %v646
        %648 = vmatmul.bf16.gmra.mxu0 %v559
        %v649 = vpop.f32.mrf.mxu0
        %v650 = vadd.f32 0.0, %v649
        %v651 = vpop.f32.mrf.mxu0
        %v652 = vadd.f32 0.0, %v651
        %653 = vdwg.mxu0
        %v654 = vadd.f32 %v401, %v575
        %v655 = vadd.f32 %v402, %v577
        %v656 = vadd.f32 %v403, %v580
        %v657 = vadd.f32 %v404, %v582
        %v658 = vadd.f32 %v405, %v585
        %v659 = vadd.f32 %v406, %v587
        %v660 = vadd.f32 %v407, %v590
        %v661 = vadd.f32 %v408, %v592
        %v662 = vadd.f32 %v409, %v595
        %v663 = vadd.f32 %v410, %v597
        %v664 = vadd.f32 %v411, %v600
        %v665 = vadd.f32 %v412, %v602
        %v666 = vadd.f32 %v413, %v605
        %v667 = vadd.f32 %v414, %v607
        %v668 = vadd.f32 %v415, %v610
        %v669 = vadd.f32 %v416, %v612
        %v670 = vadd.f32 %v417, %v615
        %v671 = vadd.f32 %v418, %v617
        %v672 = vadd.f32 %v419, %v620
        %v673 = vadd.f32 %v420, %v622
        %v674 = vadd.f32 %v421, %v625
        %v675 = vadd.f32 %v422, %v627
        %v676 = vadd.f32 %v423, %v630
        %v677 = vadd.f32 %v424, %v632
        %v678 = vadd.f32 %v425, %v635
        %v679 = vadd.f32 %v426, %v637
        %v680 = vadd.f32 %v427, %v640
        %v681 = vadd.f32 %v428, %v642
        %v682 = vadd.f32 %v429, %v645
        %v683 = vadd.f32 %v430, %v647
        %v684 = vadd.f32 %v431, %v650
        %v685 = vadd.f32 %v432, %v652
        %686 = vst.msk [vmem:[#allocation2] sm:$0xff] %vm306, %v654
        %687 = vst.msk [vmem:[#allocation2 + $0x8] sm:$0xff] %vm306, %v655
        %688 = vst.msk [vmem:[#allocation2 + $0x10] sm:$0xff] %vm306, %v656
        %689 = vst.msk [vmem:[#allocation2 + $0x18] sm:$0xff] %vm306, %v657
        %690 = vst.msk [vmem:[#allocation2 + $0x20] sm:$0xff] %vm306, %v658
        %691 = vst.msk [vmem:[#allocation2 + $0x28] sm:$0xff] %vm306, %v659
        %692 = vst.msk [vmem:[#allocation2 + $0x30] sm:$0xff] %vm306, %v660
        %693 = vst.msk [vmem:[#allocation2 + $0x38] sm:$0xff] %vm306, %v661
        %694 = vst.msk [vmem:[#allocation2 + $0x40] sm:$0xff] %vm306, %v662
        %695 = vst.msk [vmem:[#allocation2 + $0x48] sm:$0xff] %vm306, %v663
        %696 = vst.msk [vmem:[#allocation2 + $0x50] sm:$0xff] %vm306, %v664
        %697 = vst.msk [vmem:[#allocation2 + $0x58] sm:$0xff] %vm306, %v665
        %698 = vst.msk [vmem:[#allocation2 + $0x60] sm:$0xff] %vm306, %v666
        %699 = vst.msk [vmem:[#allocation2 + $0x68] sm:$0xff] %vm306, %v667
        %700 = vst.msk [vmem:[#allocation2 + $0x70] sm:$0xff] %vm306, %v668
        %701 = vst.msk [vmem:[#allocation2 + $0x78] sm:$0xff] %vm306, %v669
        %702 = vst.msk [vmem:[#allocation2 + $0x80] sm:$0xff] %vm306, %v670
        %703 = vst.msk [vmem:[#allocation2 + $0x88] sm:$0xff] %vm306, %v671
        %704 = vst.msk [vmem:[#allocation2 + $0x90] sm:$0xff] %vm306, %v672
        %705 = vst.msk [vmem:[#allocation2 + $0x98] sm:$0xff] %vm306, %v673
        %706 = vst.msk [vmem:[#allocation2 + $0xa0] sm:$0xff] %vm306, %v674
        %707 = vst.msk [vmem:[#allocation2 + $0xa8] sm:$0xff] %vm306, %v675
        %708 = vst.msk [vmem:[#allocation2 + $0xb0] sm:$0xff] %vm306, %v676
        %709 = vst.msk [vmem:[#allocation2 + $0xb8] sm:$0xff] %vm306, %v677
        %710 = vst.msk [vmem:[#allocation2 + $0xc0] sm:$0xff] %vm306, %v678
        %711 = vst.msk [vmem:[#allocation2 + $0xc8] sm:$0xff] %vm306, %v679
        %712 = vst.msk [vmem:[#allocation2 + $0xd0] sm:$0xff] %vm306, %v680
        %713 = vst.msk [vmem:[#allocation2 + $0xd8] sm:$0xff] %vm306, %v681
        %714 = vst.msk [vmem:[#allocation2 + $0xe0] sm:$0xff] %vm306, %v682
        %715 = vst.msk [vmem:[#allocation2 + $0xe8] sm:$0xff] %vm306, %v683
        %716 = vst.msk [vmem:[#allocation2 + $0xf0] sm:$0xff] %vm306, %v684
        %717 = vst.msk [vmem:[#allocation2 + $0xf8] sm:$0xff] %vm306, %v685
        %vm718 = vsmask.f32 3328
        %vm719 = vsmask.f32 7440
        %vm720 = vmor %vm718, %vm719
        %v722 = vshrl.u32 %v349, 16
        %v724 = vrot.slane %v722, 4
        %v725 = vshll.u32 %v349, 16
        %v727 = vrot.slane %v725, 5
        %v728 = vor.u32 %v724, %v727
        %v729 = vrot.slane %v728, 4
        %v731 = vshll.u32 %v350, 16
        %v733 = vrot.slane %v731, 5
        %v734 = vsel %vm720, %v729, %v733
        %v735 = vshrl.u32 %v350, 16
        %v737 = vrot.slane %v735, 4
        %v738 = vor.u32 %v737, %v733
        %v739 = vrot.slane %v738, 4
        %v741 = vshll.u32 %v351, 16
        %v743 = vrot.slane %v741, 5
        %v744 = vsel %vm720, %v739, %v743
        %v746 = vshrl.u32 %v352, 16
        %v748 = vrot.slane %v746, 4
        %v749 = vshll.u32 %v352, 16
        %v751 = vrot.slane %v749, 5
        %v752 = vor.u32 %v748, %v751
        %v753 = vrot.slane %v752, 4
        %v755 = vshll.u32 %v353, 16
        %v757 = vrot.slane %v755, 5
        %v758 = vsel %vm720, %v753, %v757
        %v759 = vshrl.u32 %v353, 16
        %v761 = vrot.slane %v759, 4
        %v762 = vor.u32 %v761, %v757
        %v763 = vrot.slane %v762, 4
        %v765 = vshll.u32 %v354, 16
        %v767 = vrot.slane %v765, 5
        %v768 = vsel %vm720, %v763, %v767
        %v770 = vshrl.u32 %v355, 16
        %v772 = vrot.slane %v770, 4
        %v773 = vshll.u32 %v355, 16
        %v775 = vrot.slane %v773, 5
        %v776 = vor.u32 %v772, %v775
        %v777 = vrot.slane %v776, 4
        %v779 = vshll.u32 %v356, 16
        %v781 = vrot.slane %v779, 5
        %v782 = vsel %vm720, %v777, %v781
        %v783 = vshrl.u32 %v356, 16
        %v785 = vrot.slane %v783, 4
        %v786 = vor.u32 %v785, %v781
        %v787 = vrot.slane %v786, 4
        %v789 = vshll.u32 %v357, 16
        %v791 = vrot.slane %v789, 5
        %v792 = vsel %vm720, %v787, %v791
        %v794 = vshrl.u32 %v358, 16
        %v796 = vrot.slane %v794, 4
        %v797 = vshll.u32 %v358, 16
        %v799 = vrot.slane %v797, 5
        %v800 = vor.u32 %v796, %v799
        %v801 = vrot.slane %v800, 4
        %v803 = vshll.u32 %v359, 16
        %v805 = vrot.slane %v803, 5
        %v806 = vsel %vm720, %v801, %v805
        %v807 = vshrl.u32 %v359, 16
        %v809 = vrot.slane %v807, 4
        %v810 = vor.u32 %v809, %v805
        %v811 = vrot.slane %v810, 4
        %v813 = vshll.u32 %v360, 16
        %v815 = vrot.slane %v813, 5
        %v816 = vsel %vm720, %v811, %v815
        %v818 = vshrl.u32 %v361, 16
        %v820 = vrot.slane %v818, 4
        %v821 = vshll.u32 %v361, 16
        %v823 = vrot.slane %v821, 5
        %v824 = vor.u32 %v820, %v823
        %v825 = vrot.slane %v824, 4
        %v827 = vshll.u32 %v362, 16
        %v829 = vrot.slane %v827, 5
        %v830 = vsel %vm720, %v825, %v829
        %v831 = vshrl.u32 %v362, 16
        %v833 = vrot.slane %v831, 4
        %v834 = vor.u32 %v833, %v829
        %v835 = vrot.slane %v834, 4
        %v837 = vshll.u32 %v363, 16
        %v839 = vrot.slane %v837, 5
        %v840 = vsel %vm720, %v835, %v839
        %v842 = vshrl.u32 %v364, 16
        %v844 = vrot.slane %v842, 4
        %v845 = vshll.u32 %v364, 16
        %v847 = vrot.slane %v845, 5
        %v848 = vor.u32 %v844, %v847
        %v849 = vrot.slane %v848, 4
        %v851 = vshll.u32 %v365, 16
        %v853 = vrot.slane %v851, 5
        %v854 = vsel %vm720, %v849, %v853
        %v855 = vshrl.u32 %v365, 16
        %v857 = vrot.slane %v855, 4
        %v858 = vor.u32 %v857, %v853
        %v859 = vrot.slane %v858, 4
        %v861 = vshll.u32 %v366, 16
        %v863 = vrot.slane %v861, 5
        %v864 = vsel %vm720, %v859, %v863
        %v866 = vshrl.u32 %v367, 16
        %v868 = vrot.slane %v866, 4
        %v869 = vshll.u32 %v367, 16
        %v871 = vrot.slane %v869, 5
        %v872 = vor.u32 %v868, %v871
        %v873 = vrot.slane %v872, 4
        %v875 = vshll.u32 %v368, 16
        %v877 = vrot.slane %v875, 5
        %v878 = vsel %vm720, %v873, %v877
        %v879 = vshrl.u32 %v368, 16
        %v881 = vrot.slane %v879, 4
        %v882 = vor.u32 %v881, %v877
        %v883 = vrot.slane %v882, 4
        %v885 = vshll.u32 %v369, 16
        %v887 = vrot.slane %v885, 5
        %v888 = vsel %vm720, %v883, %v887
        %v890 = vshrl.u32 %v370, 16
        %v892 = vrot.slane %v890, 4
        %v893 = vshll.u32 %v370, 16
        %v895 = vrot.slane %v893, 5
        %v896 = vor.u32 %v892, %v895
        %v897 = vrot.slane %v896, 4
        %v899 = vshll.u32 %v371, 16
        %v901 = vrot.slane %v899, 5
        %v902 = vsel %vm720, %v897, %v901
        %v903 = vshrl.u32 %v371, 16
        %v905 = vrot.slane %v903, 4
        %v906 = vor.u32 %v905, %v901
        %v907 = vrot.slane %v906, 4
        %v909 = vshll.u32 %v372, 16
        %v911 = vrot.slane %v909, 5
        %v912 = vsel %vm720, %v907, %v911
        %v914 = vshrl.u32 %v373, 16
        %v916 = vrot.slane %v914, 4
        %v917 = vshll.u32 %v373, 16
        %v919 = vrot.slane %v917, 5
        %v920 = vor.u32 %v916, %v919
        %v921 = vrot.slane %v920, 4
        %v923 = vshll.u32 %v374, 16
        %v925 = vrot.slane %v923, 5
        %v926 = vsel %vm720, %v921, %v925
        %v927 = vshrl.u32 %v374, 16
        %v929 = vrot.slane %v927, 4
        %v930 = vor.u32 %v929, %v925
        %v931 = vrot.slane %v930, 4
        %v933 = vshll.u32 %v375, 16
        %v935 = vrot.slane %v933, 5
        %v936 = vsel %vm720, %v931, %v935
        %v938 = vshrl.u32 %v376, 16
        %v940 = vrot.slane %v938, 4
        %v941 = vshll.u32 %v376, 16
        %v943 = vrot.slane %v941, 5
        %v944 = vor.u32 %v940, %v943
        %v945 = vrot.slane %v944, 4
        %v947 = vshll.u32 %v377, 16
        %v949 = vrot.slane %v947, 5
        %v950 = vsel %vm720, %v945, %v949
        %v951 = vshrl.u32 %v377, 16
        %v953 = vrot.slane %v951, 4
        %v954 = vor.u32 %v953, %v949
        %v955 = vrot.slane %v954, 4
        %v957 = vshll.u32 %v378, 16
        %v959 = vrot.slane %v957, 5
        %v960 = vsel %vm720, %v955, %v959
        %v962 = vshrl.u32 %v379, 16
        %v964 = vrot.slane %v962, 4
        %v965 = vshll.u32 %v379, 16
        %v967 = vrot.slane %v965, 5
        %v968 = vor.u32 %v964, %v967
        %v969 = vrot.slane %v968, 4
        %v971 = vshll.u32 %v380, 16
        %v973 = vrot.slane %v971, 5
        %v974 = vsel %vm720, %v969, %v973
        %v975 = vshrl.u32 %v380, 16
        %v977 = vrot.slane %v975, 4
        %v978 = vor.u32 %v977, %v973
        %v979 = vrot.slane %v978, 4
        %v981 = vshll.u32 %v381, 16
        %v983 = vrot.slane %v981, 5
        %v984 = vsel %vm720, %v979, %v983
        %v986 = vshrl.u32 %v382, 16
        %v988 = vrot.slane %v986, 4
        %v989 = vshll.u32 %v382, 16
        %v991 = vrot.slane %v989, 5
        %v992 = vor.u32 %v988, %v991
        %v993 = vrot.slane %v992, 4
        %v995 = vshll.u32 %v383, 16
        %v997 = vrot.slane %v995, 5
        %v998 = vsel %vm720, %v993, %v997
        %v999 = vshrl.u32 %v383, 16
        %v1001 = vrot.slane %v999, 4
        %v1002 = vor.u32 %v1001, %v997
        %v1003 = vrot.slane %v1002, 4
        %v1005 = vshll.u32 %v384, 16
        %v1007 = vrot.slane %v1005, 5
        %v1008 = vsel %vm720, %v1003, %v1007
        %v1010 = vshrl.u32 %v385, 16
        %v1012 = vrot.slane %v1010, 4
        %v1013 = vshll.u32 %v385, 16
        %v1015 = vrot.slane %v1013, 5
        %v1016 = vor.u32 %v1012, %v1015
        %v1017 = vrot.slane %v1016, 4
        %v1019 = vshll.u32 %v386, 16
        %v1021 = vrot.slane %v1019, 5
        %v1022 = vsel %vm720, %v1017, %v1021
        %v1023 = vshrl.u32 %v386, 16
        %v1025 = vrot.slane %v1023, 4
        %v1026 = vor.u32 %v1025, %v1021
        %v1027 = vrot.slane %v1026, 4
        %v1029 = vshll.u32 %v387, 16
        %v1031 = vrot.slane %v1029, 5
        %v1032 = vsel %vm720, %v1027, %v1031
        %v1034 = vshrl.u32 %v388, 16
        %v1036 = vrot.slane %v1034, 4
        %v1037 = vshll.u32 %v388, 16
        %v1039 = vrot.slane %v1037, 5
        %v1040 = vor.u32 %v1036, %v1039
        %v1041 = vrot.slane %v1040, 4
        %v1043 = vshll.u32 %v389, 16
        %v1045 = vrot.slane %v1043, 5
        %v1046 = vsel %vm720, %v1041, %v1045
        %v1047 = vshrl.u32 %v389, 16
        %v1049 = vrot.slane %v1047, 4
        %v1050 = vor.u32 %v1049, %v1045
        %v1051 = vrot.slane %v1050, 4
        %v1053 = vshll.u32 %v390, 16
        %v1055 = vrot.slane %v1053, 5
        %v1056 = vsel %vm720, %v1051, %v1055
        %v1058 = vshrl.u32 %v391, 16
        %v1060 = vrot.slane %v1058, 4
        %v1061 = vshll.u32 %v391, 16
        %v1063 = vrot.slane %v1061, 5
        %v1064 = vor.u32 %v1060, %v1063
        %v1065 = vrot.slane %v1064, 4
        %v1067 = vshll.u32 %v392, 16
        %v1069 = vrot.slane %v1067, 5
        %v1070 = vsel %vm720, %v1065, %v1069
        %v1071 = vshrl.u32 %v392, 16
        %v1073 = vrot.slane %v1071, 4
        %v1074 = vor.u32 %v1073, %v1069
        %v1075 = vrot.slane %v1074, 4
        %v1077 = vshll.u32 %v393, 16
        %v1079 = vrot.slane %v1077, 5
        %v1080 = vsel %vm720, %v1075, %v1079
        %v1082 = vshrl.u32 %v394, 16
        %v1084 = vrot.slane %v1082, 4
        %v1085 = vshll.u32 %v394, 16
        %v1087 = vrot.slane %v1085, 5
        %v1088 = vor.u32 %v1084, %v1087
        %v1089 = vrot.slane %v1088, 4
        %v1091 = vshll.u32 %v395, 16
        %v1093 = vrot.slane %v1091, 5
        %v1094 = vsel %vm720, %v1089, %v1093
        %v1095 = vshrl.u32 %v395, 16
        %v1097 = vrot.slane %v1095, 4
        %v1098 = vor.u32 %v1097, %v1093
        %v1099 = vrot.slane %v1098, 4
        %v1101 = vshll.u32 %v396, 16
        %v1103 = vrot.slane %v1101, 5
        %v1104 = vsel %vm720, %v1099, %v1103
        %s1105 = sadd.s32 %s397, 1
        %s1106 = smul.addr %s1105, 2
        %s1107 = scalar_lea.vmem %s1, %s1106
        %v1108 = vld [vmem:[%s1107] sm:$0x3]
        %v1109 = vld [vmem:[#allocation2] sm:$0xff]
        %v1110 = vld [vmem:[#allocation2 + $0x8] sm:$0xff]
        %v1111 = vld [vmem:[#allocation2 + $0x10] sm:$0xff]
        %v1112 = vld [vmem:[#allocation2 + $0x18] sm:$0xff]
        %v1113 = vld [vmem:[#allocation2 + $0x20] sm:$0xff]
        %v1114 = vld [vmem:[#allocation2 + $0x28] sm:$0xff]
        %v1115 = vld [vmem:[#allocation2 + $0x30] sm:$0xff]
        %v1116 = vld [vmem:[#allocation2 + $0x38] sm:$0xff]
        %v1117 = vld [vmem:[#allocation2 + $0x40] sm:$0xff]
        %v1118 = vld [vmem:[#allocation2 + $0x48] sm:$0xff]
        %v1119 = vld [vmem:[#allocation2 + $0x50] sm:$0xff]
        %v1120 = vld [vmem:[#allocation2 + $0x58] sm:$0xff]
        %v1121 = vld [vmem:[#allocation2 + $0x60] sm:$0xff]
        %v1122 = vld [vmem:[#allocation2 + $0x68] sm:$0xff]
        %v1123 = vld [vmem:[#allocation2 + $0x70] sm:$0xff]
        %v1124 = vld [vmem:[#allocation2 + $0x78] sm:$0xff]
        %v1125 = vld [vmem:[#allocation2 + $0x80] sm:$0xff]
        %v1126 = vld [vmem:[#allocation2 + $0x88] sm:$0xff]
        %v1127 = vld [vmem:[#allocation2 + $0x90] sm:$0xff]
        %v1128 = vld [vmem:[#allocation2 + $0x98] sm:$0xff]
        %v1129 = vld [vmem:[#allocation2 + $0xa0] sm:$0xff]
        %v1130 = vld [vmem:[#allocation2 + $0xa8] sm:$0xff]
        %v1131 = vld [vmem:[#allocation2 + $0xb0] sm:$0xff]
        %v1132 = vld [vmem:[#allocation2 + $0xb8] sm:$0xff]
        %v1133 = vld [vmem:[#allocation2 + $0xc0] sm:$0xff]
        %v1134 = vld [vmem:[#allocation2 + $0xc8] sm:$0xff]
        %v1135 = vld [vmem:[#allocation2 + $0xd0] sm:$0xff]
        %v1136 = vld [vmem:[#allocation2 + $0xd8] sm:$0xff]
        %v1137 = vld [vmem:[#allocation2 + $0xe0] sm:$0xff]
        %v1138 = vld [vmem:[#allocation2 + $0xe8] sm:$0xff]
        %v1139 = vld [vmem:[#allocation2 + $0xf0] sm:$0xff]
        %v1140 = vld [vmem:[#allocation2 + $0xf8] sm:$0xff]
        %v1141 = vunpack.c.l.b16 %v734
        %v1142 = vunpack.c.l.b16 %v744
        %v1143 = vunpack.c.l.b16 %v758
        %v1144 = vunpack.c.l.b16 %v768
        %v1145 = vunpack.c.l.b16 %v782
        %v1146 = vunpack.c.l.b16 %v792
        %v1147 = vunpack.c.l.b16 %v806
        %v1148 = vunpack.c.l.b16 %v816
        %v1149 = vunpack.c.l.b16 %v830
        %v1150 = vunpack.c.l.b16 %v840
        %v1151 = vunpack.c.l.b16 %v854
        %v1152 = vunpack.c.l.b16 %v864
        %v1153 = vunpack.c.l.b16 %v878
        %v1154 = vunpack.c.l.b16 %v888
        %v1155 = vunpack.c.l.b16 %v902
        %v1156 = vunpack.c.l.b16 %v912
        %v1157 = vunpack.c.l.b16 %v926
        %v1158 = vunpack.c.l.b16 %v936
        %v1159 = vunpack.c.l.b16 %v950
        %v1160 = vunpack.c.l.b16 %v960
        %v1161 = vunpack.c.l.b16 %v974
        %v1162 = vunpack.c.l.b16 %v984
        %v1163 = vunpack.c.l.b16 %v998
        %v1164 = vunpack.c.l.b16 %v1008
        %v1165 = vunpack.c.l.b16 %v1022
        %v1166 = vunpack.c.l.b16 %v1032
        %v1167 = vunpack.c.l.b16 %v1046
        %v1168 = vunpack.c.l.b16 %v1056
        %v1169 = vunpack.c.l.b16 %v1070
        %v1170 = vunpack.c.l.b16 %v1080
        %v1171 = vunpack.c.l.b16 %v1094
        %v1172 = vunpack.c.l.b16 %v1104
        %v1173 = vpack.c.b16 %v1142, %v1141
        %v1174 = vpack.c.b16 %v1144, %v1143
        %v1175 = vpack.c.b16 %v1146, %v1145
        %v1176 = vpack.c.b16 %v1148, %v1147
        %v1177 = vpack.c.b16 %v1150, %v1149
        %v1178 = vpack.c.b16 %v1152, %v1151
        %v1179 = vpack.c.b16 %v1154, %v1153
        %v1180 = vpack.c.b16 %v1156, %v1155
        %v1181 = vpack.c.b16 %v1158, %v1157
        %v1182 = vpack.c.b16 %v1160, %v1159
        %v1183 = vpack.c.b16 %v1162, %v1161
        %v1184 = vpack.c.b16 %v1164, %v1163
        %v1185 = vpack.c.b16 %v1166, %v1165
        %v1186 = vpack.c.b16 %v1168, %v1167
        %v1187 = vpack.c.b16 %v1170, %v1169
        %v1188 = vpack.c.b16 %v1172, %v1171
        %v1190 = vsel %vm306, %v1173, 0
        %v1193 = vsel %vm306, %v1174, 0
        %v1196 = vsel %vm306, %v1175, 0
        %v1199 = vsel %vm306, %v1176, 0
        %v1202 = vsel %vm306, %v1177, 0
        %v1205 = vsel %vm306, %v1178, 0
        %v1208 = vsel %vm306, %v1179, 0
        %v1211 = vsel %vm306, %v1180, 0
        %v1214 = vsel %vm306, %v1181, 0
        %v1217 = vsel %vm306, %v1182, 0
        %v1220 = vsel %vm306, %v1183, 0
        %v1223 = vsel %vm306, %v1184, 0
        %v1226 = vsel %vm306, %v1185, 0
        %v1229 = vsel %vm306, %v1186, 0
        %v1232 = vsel %vm306, %v1187, 0
        %v1235 = vsel %vm306, %v1188, 0
        %v1238 = vsel %vm561, %v1108, 0
        %1240 = vmatpush.bf16.msra.mxu0 0
        %1241 = vmatpush.bf16.msra.mxu0 0
        %1242 = vmatpush.bf16.msra.mxu0 0
        %1243 = vmatpush.bf16.msra.mxu0 0
        %1244 = vmatpush.bf16.msra.mxu0 0
        %1245 = vmatpush.bf16.msra.mxu0 0
        %1246 = vmatpush.bf16.msra.mxu0 0
        %1247 = vmatpush.bf16.msra.mxu0 %v1238
        %1248 = vmatmul.bf16.gmra.mxu0 %v1190
        %v1249 = vpop.f32.mrf.mxu0
        %v1250 = vadd.f32 0.0, %v1249
        %v1251 = vpop.f32.mrf.mxu0
        %v1252 = vadd.f32 0.0, %v1251
        %1253 = vmatmul.bf16.gmra.mxu0 %v1193
        %v1254 = vpop.f32.mrf.mxu0
        %v1255 = vadd.f32 0.0, %v1254
        %v1256 = vpop.f32.mrf.mxu0
        %v1257 = vadd.f32 0.0, %v1256
        %1258 = vmatmul.bf16.gmra.mxu0 %v1196
        %v1259 = vpop.f32.mrf.mxu0
        %v1260 = vadd.f32 0.0, %v1259
        %v1261 = vpop.f32.mrf.mxu0
        %v1262 = vadd.f32 0.0, %v1261
        %1263 = vmatmul.bf16.gmra.mxu0 %v1199
        %v1264 = vpop.f32.mrf.mxu0
        %v1265 = vadd.f32 0.0, %v1264
        %v1266 = vpop.f32.mrf.mxu0
        %v1267 = vadd.f32 0.0, %v1266
        %1268 = vmatmul.bf16.gmra.mxu0 %v1202
        %v1269 = vpop.f32.mrf.mxu0
        %v1270 = vadd.f32 0.0, %v1269
        %v1271 = vpop.f32.mrf.mxu0
        %v1272 = vadd.f32 0.0, %v1271
        %1273 = vmatmul.bf16.gmra.mxu0 %v1205
        %v1274 = vpop.f32.mrf.mxu0
        %v1275 = vadd.f32 0.0, %v1274
        %v1276 = vpop.f32.mrf.mxu0
        %v1277 = vadd.f32 0.0, %v1276
        %1278 = vmatmul.bf16.gmra.mxu0 %v1208
        %v1279 = vpop.f32.mrf.mxu0
        %v1280 = vadd.f32 0.0, %v1279
        %v1281 = vpop.f32.mrf.mxu0
        %v1282 = vadd.f32 0.0, %v1281
        %1283 = vmatmul.bf16.gmra.mxu0 %v1211
        %v1284 = vpop.f32.mrf.mxu0
        %v1285 = vadd.f32 0.0, %v1284
        %v1286 = vpop.f32.mrf.mxu0
        %v1287 = vadd.f32 0.0, %v1286
        %1288 = vmatmul.bf16.gmra.mxu0 %v1214
        %v1289 = vpop.f32.mrf.mxu0
        %v1290 = vadd.f32 0.0, %v1289
        %v1291 = vpop.f32.mrf.mxu0
        %v1292 = vadd.f32 0.0, %v1291
        %1293 = vmatmul.bf16.gmra.mxu0 %v1217
        %v1294 = vpop.f32.mrf.mxu0
        %v1295 = vadd.f32 0.0, %v1294
        %v1296 = vpop.f32.mrf.mxu0
        %v1297 = vadd.f32 0.0, %v1296
        %1298 = vmatmul.bf16.gmra.mxu0 %v1220
        %v1299 = vpop.f32.mrf.mxu0
        %v1300 = vadd.f32 0.0, %v1299
        %v1301 = vpop.f32.mrf.mxu0
        %v1302 = vadd.f32 0.0, %v1301
        %1303 = vmatmul.bf16.gmra.mxu0 %v1223
        %v1304 = vpop.f32.mrf.mxu0
        %v1305 = vadd.f32 0.0, %v1304
        %v1306 = vpop.f32.mrf.mxu0
        %v1307 = vadd.f32 0.0, %v1306
        %1308 = vmatmul.bf16.gmra.mxu0 %v1226
        %v1309 = vpop.f32.mrf.mxu0
        %v1310 = vadd.f32 0.0, %v1309
        %v1311 = vpop.f32.mrf.mxu0
        %v1312 = vadd.f32 0.0, %v1311
        %1313 = vmatmul.bf16.gmra.mxu0 %v1229
        %v1314 = vpop.f32.mrf.mxu0
        %v1315 = vadd.f32 0.0, %v1314
        %v1316 = vpop.f32.mrf.mxu0
        %v1317 = vadd.f32 0.0, %v1316
        %1318 = vmatmul.bf16.gmra.mxu0 %v1232
        %v1319 = vpop.f32.mrf.mxu0
        %v1320 = vadd.f32 0.0, %v1319
        %v1321 = vpop.f32.mrf.mxu0
        %v1322 = vadd.f32 0.0, %v1321
        %1323 = vmatmul.bf16.gmra.mxu0 %v1235
        %v1324 = vpop.f32.mrf.mxu0
        %v1325 = vadd.f32 0.0, %v1324
        %v1326 = vpop.f32.mrf.mxu0
        %v1327 = vadd.f32 0.0, %v1326
        %1328 = vdwg.mxu0
        %v1329 = vadd.f32 %v1109, %v1250
        %v1330 = vadd.f32 %v1110, %v1252
        %v1331 = vadd.f32 %v1111, %v1255
        %v1332 = vadd.f32 %v1112, %v1257
        %v1333 = vadd.f32 %v1113, %v1260
        %v1334 = vadd.f32 %v1114, %v1262
        %v1335 = vadd.f32 %v1115, %v1265
        %v1336 = vadd.f32 %v1116, %v1267
        %v1337 = vadd.f32 %v1117, %v1270
        %v1338 = vadd.f32 %v1118, %v1272
        %v1339 = vadd.f32 %v1119, %v1275
        %v1340 = vadd.f32 %v1120, %v1277
        %v1341 = vadd.f32 %v1121, %v1280
        %v1342 = vadd.f32 %v1122, %v1282
        %v1343 = vadd.f32 %v1123, %v1285
        %v1344 = vadd.f32 %v1124, %v1287
        %v1345 = vadd.f32 %v1125, %v1290
        %v1346 = vadd.f32 %v1126, %v1292
        %v1347 = vadd.f32 %v1127, %v1295
        %v1348 = vadd.f32 %v1128, %v1297
        %v1349 = vadd.f32 %v1129, %v1300
        %v1350 = vadd.f32 %v1130, %v1302
        %v1351 = vadd.f32 %v1131, %v1305
        %v1352 = vadd.f32 %v1132, %v1307
        %v1353 = vadd.f32 %v1133, %v1310
        %v1354 = vadd.f32 %v1134, %v1312
        %v1355 = vadd.f32 %v1135, %v1315
        %v1356 = vadd.f32 %v1136, %v1317
        %v1357 = vadd.f32 %v1137, %v1320
        %v1358 = vadd.f32 %v1138, %v1322
        %v1359 = vadd.f32 %v1139, %v1325
        %v1360 = vadd.f32 %v1140, %v1327
        %1361 = vst.msk [vmem:[#allocation2] sm:$0xff] %vm306, %v1329
        %1362 = vst.msk [vmem:[#allocation2 + $0x8] sm:$0xff] %vm306, %v1330
        %1363 = vst.msk [vmem:[#allocation2 + $0x10] sm:$0xff] %vm306, %v1331
        %1364 = vst.msk [vmem:[#allocation2 + $0x18] sm:$0xff] %vm306, %v1332
        %1365 = vst.msk [vmem:[#allocation2 + $0x20] sm:$0xff] %vm306, %v1333
        %1366 = vst.msk [vmem:[#allocation2 + $0x28] sm:$0xff] %vm306, %v1334
        %1367 = vst.msk [vmem:[#allocation2 + $0x30] sm:$0xff] %vm306, %v1335
        %1368 = vst.msk [vmem:[#allocation2 + $0x38] sm:$0xff] %vm306, %v1336
        %1369 = vst.msk [vmem:[#allocation2 + $0x40] sm:$0xff] %vm306, %v1337
        %1370 = vst.msk [vmem:[#allocation2 + $0x48] sm:$0xff] %vm306, %v1338
        %1371 = vst.msk [vmem:[#allocation2 + $0x50] sm:$0xff] %vm306, %v1339
        %1372 = vst.msk [vmem:[#allocation2 + $0x58] sm:$0xff] %vm306, %v1340
        %1373 = vst.msk [vmem:[#allocation2 + $0x60] sm:$0xff] %vm306, %v1341
        %1374 = vst.msk [vmem:[#allocation2 + $0x68] sm:$0xff] %vm306, %v1342
        %1375 = vst.msk [vmem:[#allocation2 + $0x70] sm:$0xff] %vm306, %v1343
        %1376 = vst.msk [vmem:[#allocation2 + $0x78] sm:$0xff] %vm306, %v1344
        %1377 = vst.msk [vmem:[#allocation2 + $0x80] sm:$0xff] %vm306, %v1345
        %1378 = vst.msk [vmem:[#allocation2 + $0x88] sm:$0xff] %vm306, %v1346
        %1379 = vst.msk [vmem:[#allocation2 + $0x90] sm:$0xff] %vm306, %v1347
        %1380 = vst.msk [vmem:[#allocation2 + $0x98] sm:$0xff] %vm306, %v1348
        %1381 = vst.msk [vmem:[#allocation2 + $0xa0] sm:$0xff] %vm306, %v1349
        %1382 = vst.msk [vmem:[#allocation2 + $0xa8] sm:$0xff] %vm306, %v1350
        %1383 = vst.msk [vmem:[#allocation2 + $0xb0] sm:$0xff] %vm306, %v1351
        %1384 = vst.msk [vmem:[#allocation2 + $0xb8] sm:$0xff] %vm306, %v1352
        %1385 = vst.msk [vmem:[#allocation2 + $0xc0] sm:$0xff] %vm306, %v1353
        %1386 = vst.msk [vmem:[#allocation2 + $0xc8] sm:$0xff] %vm306, %v1354
        %1387 = vst.msk [vmem:[#allocation2 + $0xd0] sm:$0xff] %vm306, %v1355
        %1388 = vst.msk [vmem:[#allocation2 + $0xd8] sm:$0xff] %vm306, %v1356
        %1389 = vst.msk [vmem:[#allocation2 + $0xe0] sm:$0xff] %vm306, %v1357
        %1390 = vst.msk [vmem:[#allocation2 + $0xe8] sm:$0xff] %vm306, %v1358
        %1391 = vst.msk [vmem:[#allocation2 + $0xf0] sm:$0xff] %vm306, %v1359
        %1392 = vst.msk [vmem:[#allocation2 + $0xf8] sm:$0xff] %vm306, %v1360
        %vm1409 = vcmask 1042432
        %vm1410 = vcmask 1046532
        %vm1411 = vmor %vm1409, %vm1410
        %v1412 = vrot.slane %v349, 5
        %v1413 = vrot.slane %v1412, 4
        %v1414 = vrot.slane %v350, 5
        %v1415 = vsel %vm1411, %v1413, %v1414
        %v1416 = vrot.slane %v1414, 4
        %v1417 = vrot.slane %v351, 5
        %v1418 = vsel %vm1411, %v1416, %v1417
        %v1419 = vrot.slane %v352, 5
        %v1420 = vrot.slane %v1419, 4
        %v1421 = vrot.slane %v353, 5
        %v1422 = vsel %vm1411, %v1420, %v1421
        %v1423 = vrot.slane %v1421, 4
        %v1424 = vrot.slane %v354, 5
        %v1425 = vsel %vm1411, %v1423, %v1424
        %v1426 = vrot.slane %v355, 5
        %v1427 = vrot.slane %v1426, 4
        %v1428 = vrot.slane %v356, 5
        %v1429 = vsel %vm1411, %v1427, %v1428
        %v1430 = vrot.slane %v1428, 4
        %v1431 = vrot.slane %v357, 5
        %v1432 = vsel %vm1411, %v1430, %v1431
        %v1433 = vrot.slane %v358, 5
        %v1434 = vrot.slane %v1433, 4
        %v1435 = vrot.slane %v359, 5
        %v1436 = vsel %vm1411, %v1434, %v1435
        %v1437 = vrot.slane %v1435, 4
        %v1438 = vrot.slane %v360, 5
        %v1439 = vsel %vm1411, %v1437, %v1438
        %v1440 = vrot.slane %v361, 5
        %v1441 = vrot.slane %v1440, 4
        %v1442 = vrot.slane %v362, 5
        %v1443 = vsel %vm1411, %v1441, %v1442
        %v1444 = vrot.slane %v1442, 4
        %v1445 = vrot.slane %v363, 5
        %v1446 = vsel %vm1411, %v1444, %v1445
        %v1447 = vrot.slane %v364, 5
        %v1448 = vrot.slane %v1447, 4
        %v1449 = vrot.slane %v365, 5
        %v1450 = vsel %vm1411, %v1448, %v1449
        %v1451 = vrot.slane %v1449, 4
        %v1452 = vrot.slane %v366, 5
        %v1453 = vsel %vm1411, %v1451, %v1452
        %v1454 = vrot.slane %v367, 5
        %v1455 = vrot.slane %v1454, 4
        %v1456 = vrot.slane %v368, 5
        %v1457 = vsel %vm1411, %v1455, %v1456
        %v1458 = vrot.slane %v1456, 4
        %v1459 = vrot.slane %v369, 5
        %v1460 = vsel %vm1411, %v1458, %v1459
        %v1461 = vrot.slane %v370, 5
        %v1462 = vrot.slane %v1461, 4
        %v1463 = vrot.slane %v371, 5
        %v1464 = vsel %vm1411, %v1462, %v1463
        %v1465 = vrot.slane %v1463, 4
        %v1466 = vrot.slane %v372, 5
        %v1467 = vsel %vm1411, %v1465, %v1466
        %v1468 = vrot.slane %v373, 5
        %v1469 = vrot.slane %v1468, 4
        %v1470 = vrot.slane %v374, 5
        %v1471 = vsel %vm1411, %v1469, %v1470
        %v1472 = vrot.slane %v1470, 4
        %v1473 = vrot.slane %v375, 5
        %v1474 = vsel %vm1411, %v1472, %v1473
        %v1475 = vrot.slane %v376, 5
        %v1476 = vrot.slane %v1475, 4
        %v1477 = vrot.slane %v377, 5
        %v1478 = vsel %vm1411, %v1476, %v1477
        %v1479 = vrot.slane %v1477, 4
        %v1480 = vrot.slane %v378, 5
        %v1481 = vsel %vm1411, %v1479, %v1480
        %v1482 = vrot.slane %v379, 5
        %v1483 = vrot.slane %v1482, 4
        %v1484 = vrot.slane %v380, 5
        %v1485 = vsel %vm1411, %v1483, %v1484
        %v1486 = vrot.slane %v1484, 4
        %v1487 = vrot.slane %v381, 5
        %v1488 = vsel %vm1411, %v1486, %v1487
        %v1489 = vrot.slane %v382, 5
        %v1490 = vrot.slane %v1489, 4
        %v1491 = vrot.slane %v383, 5
        %v1492 = vsel %vm1411, %v1490, %v1491
        %v1493 = vrot.slane %v1491, 4
        %v1494 = vrot.slane %v384, 5
        %v1495 = vsel %vm1411, %v1493, %v1494
        %v1496 = vrot.slane %v385, 5
        %v1497 = vrot.slane %v1496, 4
        %v1498 = vrot.slane %v386, 5
        %v1499 = vsel %vm1411, %v1497, %v1498
        %v1500 = vrot.slane %v1498, 4
        %v1501 = vrot.slane %v387, 5
        %v1502 = vsel %vm1411, %v1500, %v1501
        %v1503 = vrot.slane %v388, 5
        %v1504 = vrot.slane %v1503, 4
        %v1505 = vrot.slane %v389, 5
        %v1506 = vsel %vm1411, %v1504, %v1505
        %v1507 = vrot.slane %v1505, 4
        %v1508 = vrot.slane %v390, 5
        %v1509 = vsel %vm1411, %v1507, %v1508
        %v1510 = vrot.slane %v391, 5
        %v1511 = vrot.slane %v1510, 4
        %v1512 = vrot.slane %v392, 5
        %v1513 = vsel %vm1411, %v1511, %v1512
        %v1514 = vrot.slane %v1512, 4
        %v1515 = vrot.slane %v393, 5
        %v1516 = vsel %vm1411, %v1514, %v1515
        %v1517 = vrot.slane %v394, 5
        %v1518 = vrot.slane %v1517, 4
        %v1519 = vrot.slane %v395, 5
        %v1520 = vsel %vm1411, %v1518, %v1519
        %v1521 = vrot.slane %v1519, 4
        %v1522 = vrot.slane %v396, 5
        %v1523 = vsel %vm1411, %v1521, %v1522
        %s1524 = sadd.s32 %s397, 2
        %s1525 = smul.addr %s1524, 2
        %s1526 = scalar_lea.vmem %s1, %s1525
        %v1527 = vld [vmem:[%s1526] sm:$0x3]
        %v1528 = vld [vmem:[#allocation2] sm:$0xff]
        %v1529 = vld [vmem:[#allocation2 + $0x8] sm:$0xff]
        %v1530 = vld [vmem:[#allocation2 + $0x10] sm:$0xff]
        %v1531 = vld [vmem:[#allocation2 + $0x18] sm:$0xff]
        %v1532 = vld [vmem:[#allocation2 + $0x20] sm:$0xff]
        %v1533 = vld [vmem:[#allocation2 + $0x28] sm:$0xff]
        %v1534 = vld [vmem:[#allocation2 + $0x30] sm:$0xff]
        %v1535 = vld [vmem:[#allocation2 + $0x38] sm:$0xff]
        %v1536 = vld [vmem:[#allocation2 + $0x40] sm:$0xff]
        %v1537 = vld [vmem:[#allocation2 + $0x48] sm:$0xff]
        %v1538 = vld [vmem:[#allocation2 + $0x50] sm:$0xff]
        %v1539 = vld [vmem:[#allocation2 + $0x58] sm:$0xff]
        %v1540 = vld [vmem:[#allocation2 + $0x60] sm:$0xff]
        %v1541 = vld [vmem:[#allocation2 + $0x68] sm:$0xff]
        %v1542 = vld [vmem:[#allocation2 + $0x70] sm:$0xff]
        %v1543 = vld [vmem:[#allocation2 + $0x78] sm:$0xff]
        %v1544 = vld [vmem:[#allocation2 + $0x80] sm:$0xff]
        %v1545 = vld [vmem:[#allocation2 + $0x88] sm:$0xff]
        %v1546 = vld [vmem:[#allocation2 + $0x90] sm:$0xff]
        %v1547 = vld [vmem:[#allocation2 + $0x98] sm:$0xff]
        %v1548 = vld [vmem:[#allocation2 + $0xa0] sm:$0xff]
        %v1549 = vld [vmem:[#allocation2 + $0xa8] sm:$0xff]
        %v1550 = vld [vmem:[#allocation2 + $0xb0] sm:$0xff]
        %v1551 = vld [vmem:[#allocation2 + $0xb8] sm:$0xff]
        %v1552 = vld [vmem:[#allocation2 + $0xc0] sm:$0xff]
        %v1553 = vld [vmem:[#allocation2 + $0xc8] sm:$0xff]
        %v1554 = vld [vmem:[#allocation2 + $0xd0] sm:$0xff]
        %v1555 = vld [vmem:[#allocation2 + $0xd8] sm:$0xff]
        %v1556 = vld [vmem:[#allocation2 + $0xe0] sm:$0xff]
        %v1557 = vld [vmem:[#allocation2 + $0xe8] sm:$0xff]
        %v1558 = vld [vmem:[#allocation2 + $0xf0] sm:$0xff]
        %v1559 = vld [vmem:[#allocation2 + $0xf8] sm:$0xff]
        %v1560 = vunpack.c.l.b16 %v1415
        %v1561 = vunpack.c.l.b16 %v1418
        %v1562 = vunpack.c.l.b16 %v1422
        %v1563 = vunpack.c.l.b16 %v1425
        %v1564 = vunpack.c.l.b16 %v1429
        %v1565 = vunpack.c.l.b16 %v1432
        %v1566 = vunpack.c.l.b16 %v1436
        %v1567 = vunpack.c.l.b16 %v1439
        %v1568 = vunpack.c.l.b16 %v1443
        %v1569 = vunpack.c.l.b16 %v1446
        %v1570 = vunpack.c.l.b16 %v1450
        %v1571 = vunpack.c.l.b16 %v1453
        %v1572 = vunpack.c.l.b16 %v1457
        %v1573 = vunpack.c.l.b16 %v1460
        %v1574 = vunpack.c.l.b16 %v1464
        %v1575 = vunpack.c.l.b16 %v1467
        %v1576 = vunpack.c.l.b16 %v1471
        %v1577 = vunpack.c.l.b16 %v1474
        %v1578 = vunpack.c.l.b16 %v1478
        %v1579 = vunpack.c.l.b16 %v1481
        %v1580 = vunpack.c.l.b16 %v1485
        %v1581 = vunpack.c.l.b16 %v1488
        %v1582 = vunpack.c.l.b16 %v1492
        %v1583 = vunpack.c.l.b16 %v1495
        %v1584 = vunpack.c.l.b16 %v1499
        %v1585 = vunpack.c.l.b16 %v1502
        %v1586 = vunpack.c.l.b16 %v1506
        %v1587 = vunpack.c.l.b16 %v1509
        %v1588 = vunpack.c.l.b16 %v1513
        %v1589 = vunpack.c.l.b16 %v1516
        %v1590 = vunpack.c.l.b16 %v1520
        %v1591 = vunpack.c.l.b16 %v1523
        %v1592 = vpack.c.b16 %v1561, %v1560
        %v1593 = vpack.c.b16 %v1563, %v1562
        %v1594 = vpack.c.b16 %v1565, %v1564
        %v1595 = vpack.c.b16 %v1567, %v1566
        %v1596 = vpack.c.b16 %v1569, %v1568
        %v1597 = vpack.c.b16 %v1571, %v1570
        %v1598 = vpack.c.b16 %v1573, %v1572
        %v1599 = vpack.c.b16 %v1575, %v1574
        %v1600 = vpack.c.b16 %v1577, %v1576
        %v1601 = vpack.c.b16 %v1579, %v1578
        %v1602 = vpack.c.b16 %v1581, %v1580
        %v1603 = vpack.c.b16 %v1583, %v1582
        %v1604 = vpack.c.b16 %v1585, %v1584
        %v1605 = vpack.c.b16 %v1587, %v1586
        %v1606 = vpack.c.b16 %v1589, %v1588
        %v1607 = vpack.c.b16 %v1591, %v1590
        %v1609 = vsel %vm306, %v1592, 0
        %v1612 = vsel %vm306, %v1593, 0
        %v1615 = vsel %vm306, %v1594, 0
        %v1618 = vsel %vm306, %v1595, 0
        %v1621 = vsel %vm306, %v1596, 0
        %v1624 = vsel %vm306, %v1597, 0
        %v1627 = vsel %vm306, %v1598, 0
        %v1630 = vsel %vm306, %v1599, 0
        %v1633 = vsel %vm306, %v1600, 0
        %v1636 = vsel %vm306, %v1601, 0
        %v1639 = vsel %vm306, %v1602, 0
        %v1642 = vsel %vm306, %v1603, 0
        %v1645 = vsel %vm306, %v1604, 0
        %v1648 = vsel %vm306, %v1605, 0
        %v1651 = vsel %vm306, %v1606, 0
        %v1654 = vsel %vm306, %v1607, 0
        %v1657 = vsel %vm561, %v1527, 0
        %1659 = vmatpush.bf16.msra.mxu0 0
        %1660 = vmatpush.bf16.msra.mxu0 0
        %1661 = vmatpush.bf16.msra.mxu0 0
        %1662 = vmatpush.bf16.msra.mxu0 0
        %1663 = vmatpush.bf16.msra.mxu0 0
        %1664 = vmatpush.bf16.msra.mxu0 0
        %1665 = vmatpush.bf16.msra.mxu0 0
        %1666 = vmatpush.bf16.msra.mxu0 %v1657
        %1667 = vmatmul.bf16.gmra.mxu0 %v1609
        %v1668 = vpop.f32.mrf.mxu0
        %v1669 = vadd.f32 0.0, %v1668
        %v1670 = vpop.f32.mrf.mxu0
        %v1671 = vadd.f32 0.0, %v1670
        %1672 = vmatmul.bf16.gmra.mxu0 %v1612
        %v1673 = vpop.f32.mrf.mxu0
        %v1674 = vadd.f32 0.0, %v1673
        %v1675 = vpop.f32.mrf.mxu0
        %v1676 = vadd.f32 0.0, %v1675
        %1677 = vmatmul.bf16.gmra.mxu0 %v1615
        %v1678 = vpop.f32.mrf.mxu0
        %v1679 = vadd.f32 0.0, %v1678
        %v1680 = vpop.f32.mrf.mxu0
        %v1681 = vadd.f32 0.0, %v1680
        %1682 = vmatmul.bf16.gmra.mxu0 %v1618
        %v1683 = vpop.f32.mrf.mxu0
        %v1684 = vadd.f32 0.0, %v1683
        %v1685 = vpop.f32.mrf.mxu0
        %v1686 = vadd.f32 0.0, %v1685
        %1687 = vmatmul.bf16.gmra.mxu0 %v1621
        %v1688 = vpop.f32.mrf.mxu0
        %v1689 = vadd.f32 0.0, %v1688
        %v1690 = vpop.f32.mrf.mxu0
        %v1691 = vadd.f32 0.0, %v1690
        %1692 = vmatmul.bf16.gmra.mxu0 %v1624
        %v1693 = vpop.f32.mrf.mxu0
        %v1694 = vadd.f32 0.0, %v1693
        %v1695 = vpop.f32.mrf.mxu0
        %v1696 = vadd.f32 0.0, %v1695
        %1697 = vmatmul.bf16.gmra.mxu0 %v1627
        %v1698 = vpop.f32.mrf.mxu0
        %v1699 = vadd.f32 0.0, %v1698
        %v1700 = vpop.f32.mrf.mxu0
        %v1701 = vadd.f32 0.0, %v1700
        %1702 = vmatmul.bf16.gmra.mxu0 %v1630
        %v1703 = vpop.f32.mrf.mxu0
        %v1704 = vadd.f32 0.0, %v1703
        %v1705 = vpop.f32.mrf.mxu0
        %v1706 = vadd.f32 0.0, %v1705
        %1707 = vmatmul.bf16.gmra.mxu0 %v1633
        %v1708 = vpop.f32.mrf.mxu0
        %v1709 = vadd.f32 0.0, %v1708
        %v1710 = vpop.f32.mrf.mxu0
        %v1711 = vadd.f32 0.0, %v1710
        %1712 = vmatmul.bf16.gmra.mxu0 %v1636
        %v1713 = vpop.f32.mrf.mxu0
        %v1714 = vadd.f32 0.0, %v1713
        %v1715 = vpop.f32.mrf.mxu0
        %v1716 = vadd.f32 0.0, %v1715
        %1717 = vmatmul.bf16.gmra.mxu0 %v1639
        %v1718 = vpop.f32.mrf.mxu0
        %v1719 = vadd.f32 0.0, %v1718
        %v1720 = vpop.f32.mrf.mxu0
        %v1721 = vadd.f32 0.0, %v1720
        %1722 = vmatmul.bf16.gmra.mxu0 %v1642
        %v1723 = vpop.f32.mrf.mxu0
        %v1724 = vadd.f32 0.0, %v1723
        %v1725 = vpop.f32.mrf.mxu0
        %v1726 = vadd.f32 0.0, %v1725
        %1727 = vmatmul.bf16.gmra.mxu0 %v1645
        %v1728 = vpop.f32.mrf.mxu0
        %v1729 = vadd.f32 0.0, %v1728
        %v1730 = vpop.f32.mrf.mxu0
        %v1731 = vadd.f32 0.0, %v1730
        %1732 = vmatmul.bf16.gmra.mxu0 %v1648
        %v1733 = vpop.f32.mrf.mxu0
        %v1734 = vadd.f32 0.0, %v1733
        %v1735 = vpop.f32.mrf.mxu0
        %v1736 = vadd.f32 0.0, %v1735
        %1737 = vmatmul.bf16.gmra.mxu0 %v1651
        %v1738 = vpop.f32.mrf.mxu0
        %v1739 = vadd.f32 0.0, %v1738
        %v1740 = vpop.f32.mrf.mxu0
        %v1741 = vadd.f32 0.0, %v1740
        %1742 = vmatmul.bf16.gmra.mxu0 %v1654
        %v1743 = vpop.f32.mrf.mxu0
        %v1744 = vadd.f32 0.0, %v1743
        %v1745 = vpop.f32.mrf.mxu0
        %v1746 = vadd.f32 0.0, %v1745
        %1747 = vdwg.mxu0
        %v1748 = vadd.f32 %v1528, %v1669
        %v1749 = vadd.f32 %v1529, %v1671
        %v1750 = vadd.f32 %v1530, %v1674
        %v1751 = vadd.f32 %v1531, %v1676
        %v1752 = vadd.f32 %v1532, %v1679
        %v1753 = vadd.f32 %v1533, %v1681
        %v1754 = vadd.f32 %v1534, %v1684
        %v1755 = vadd.f32 %v1535, %v1686
        %v1756 = vadd.f32 %v1536, %v1689
        %v1757 = vadd.f32 %v1537, %v1691
        %v1758 = vadd.f32 %v1538, %v1694
        %v1759 = vadd.f32 %v1539, %v1696
        %v1760 = vadd.f32 %v1540, %v1699
        %v1761 = vadd.f32 %v1541, %v1701
        %v1762 = vadd.f32 %v1542, %v1704
        %v1763 = vadd.f32 %v1543, %v1706
        %v1764 = vadd.f32 %v1544, %v1709
        %v1765 = vadd.f32 %v1545, %v1711
        %v1766 = vadd.f32 %v1546, %v1714
        %v1767 = vadd.f32 %v1547, %v1716
        %v1768 = vadd.f32 %v1548, %v1719
        %v1769 = vadd.f32 %v1549, %v1721
        %v1770 = vadd.f32 %v1550, %v1724
        %v1771 = vadd.f32 %v1551, %v1726
        %v1772 = vadd.f32 %v1552, %v1729
        %v1773 = vadd.f32 %v1553, %v1731
        %v1774 = vadd.f32 %v1554, %v1734
        %v1775 = vadd.f32 %v1555, %v1736
        %v1776 = vadd.f32 %v1556, %v1739
        %v1777 = vadd.f32 %v1557, %v1741
        %v1778 = vadd.f32 %v1558, %v1744
        %v1779 = vadd.f32 %v1559, %v1746
        %1780 = vst.msk [vmem:[#allocation2] sm:$0xff] %vm306, %v1748
        %1781 = vst.msk [vmem:[#allocation2 + $0x8] sm:$0xff] %vm306, %v1749
        %1782 = vst.msk [vmem:[#allocation2 + $0x10] sm:$0xff] %vm306, %v1750
        %1783 = vst.msk [vmem:[#allocation2 + $0x18] sm:$0xff] %vm306, %v1751
        %1784 = vst.msk [vmem:[#allocation2 + $0x20] sm:$0xff] %vm306, %v1752
        %1785 = vst.msk [vmem:[#allocation2 + $0x28] sm:$0xff] %vm306, %v1753
        %1786 = vst.msk [vmem:[#allocation2 + $0x30] sm:$0xff] %vm306, %v1754
        %1787 = vst.msk [vmem:[#allocation2 + $0x38] sm:$0xff] %vm306, %v1755
        %1788 = vst.msk [vmem:[#allocation2 + $0x40] sm:$0xff] %vm306, %v1756
        %1789 = vst.msk [vmem:[#allocation2 + $0x48] sm:$0xff] %vm306, %v1757
        %1790 = vst.msk [vmem:[#allocation2 + $0x50] sm:$0xff] %vm306, %v1758
        %1791 = vst.msk [vmem:[#allocation2 + $0x58] sm:$0xff] %vm306, %v1759
        %1792 = vst.msk [vmem:[#allocation2 + $0x60] sm:$0xff] %vm306, %v1760
        %1793 = vst.msk [vmem:[#allocation2 + $0x68] sm:$0xff] %vm306, %v1761
        %1794 = vst.msk [vmem:[#allocation2 + $0x70] sm:$0xff] %vm306, %v1762
        %1795 = vst.msk [vmem:[#allocation2 + $0x78] sm:$0xff] %vm306, %v1763
        %1796 = vst.msk [vmem:[#allocation2 + $0x80] sm:$0xff] %vm306, %v1764
        %1797 = vst.msk [vmem:[#allocation2 + $0x88] sm:$0xff] %vm306, %v1765
        %1798 = vst.msk [vmem:[#allocation2 + $0x90] sm:$0xff] %vm306, %v1766
        %1799 = vst.msk [vmem:[#allocation2 + $0x98] sm:$0xff] %vm306, %v1767
        %1800 = vst.msk [vmem:[#allocation2 + $0xa0] sm:$0xff] %vm306, %v1768
        %1801 = vst.msk [vmem:[#allocation2 + $0xa8] sm:$0xff] %vm306, %v1769
        %1802 = vst.msk [vmem:[#allocation2 + $0xb0] sm:$0xff] %vm306, %v1770
        %1803 = vst.msk [vmem:[#allocation2 + $0xb8] sm:$0xff] %vm306, %v1771
        %1804 = vst.msk [vmem:[#allocation2 + $0xc0] sm:$0xff] %vm306, %v1772
        %1805 = vst.msk [vmem:[#allocation2 + $0xc8] sm:$0xff] %vm306, %v1773
        %1806 = vst.msk [vmem:[#allocation2 + $0xd0] sm:$0xff] %vm306, %v1774
        %1807 = vst.msk [vmem:[#allocation2 + $0xd8] sm:$0xff] %vm306, %v1775
        %1808 = vst.msk [vmem:[#allocation2 + $0xe0] sm:$0xff] %vm306, %v1776
        %1809 = vst.msk [vmem:[#allocation2 + $0xe8] sm:$0xff] %vm306, %v1777
        %1810 = vst.msk [vmem:[#allocation2 + $0xf0] sm:$0xff] %vm306, %v1778
        %1811 = vst.msk [vmem:[#allocation2 + $0xf8] sm:$0xff] %vm306, %v1779
        %vm1812 = vsmask.f32 2304
        %vm1813 = vsmask.f32 6416
        %vm1814 = vmor %vm1812, %vm1813
        %v1815 = vrot.slane %v722, 5
        %v1816 = vrot.slane %v725, 6
        %v1817 = vor.u32 %v1815, %v1816
        %v1818 = vrot.slane %v1817, 4
        %v1819 = vrot.slane %v735, 5
        %v1820 = vrot.slane %v731, 6
        %v1821 = vor.u32 %v1819, %v1820
        %v1822 = vsel %vm1814, %v1818, %v1821
        %v1823 = vrot.slane %v1821, 4
        %v1824 = vshrl.u32 %v351, 16
        %v1826 = vrot.slane %v1824, 5
        %v1827 = vrot.slane %v741, 6
        %v1828 = vor.u32 %v1826, %v1827
        %v1829 = vsel %vm1814, %v1823, %v1828
        %v1830 = vrot.slane %v746, 5
        %v1831 = vrot.slane %v749, 6
        %v1832 = vor.u32 %v1830, %v1831
        %v1833 = vrot.slane %v1832, 4
        %v1834 = vrot.slane %v759, 5
        %v1835 = vrot.slane %v755, 6
        %v1836 = vor.u32 %v1834, %v1835
        %v1837 = vsel %vm1814, %v1833, %v1836
        %v1838 = vrot.slane %v1836, 4
        %v1839 = vshrl.u32 %v354, 16
        %v1841 = vrot.slane %v1839, 5
        %v1842 = vrot.slane %v765, 6
        %v1843 = vor.u32 %v1841, %v1842
        %v1844 = vsel %vm1814, %v1838, %v1843
        %v1845 = vrot.slane %v770, 5
        %v1846 = vrot.slane %v773, 6
        %v1847 = vor.u32 %v1845, %v1846
        %v1848 = vrot.slane %v1847, 4
        %v1849 = vrot.slane %v783, 5
        %v1850 = vrot.slane %v779, 6
        %v1851 = vor.u32 %v1849, %v1850
        %v1852 = vsel %vm1814, %v1848, %v1851
        %v1853 = vrot.slane %v1851, 4
        %v1854 = vshrl.u32 %v357, 16
        %v1856 = vrot.slane %v1854, 5
        %v1857 = vrot.slane %v789, 6
        %v1858 = vor.u32 %v1856, %v1857
        %v1859 = vsel %vm1814, %v1853, %v1858
        %v1860 = vrot.slane %v794, 5
        %v1861 = vrot.slane %v797, 6
        %v1862 = vor.u32 %v1860, %v1861
        %v1863 = vrot.slane %v1862, 4
        %v1864 = vrot.slane %v807, 5
        %v1865 = vrot.slane %v803, 6
        %v1866 = vor.u32 %v1864, %v1865
        %v1867 = vsel %vm1814, %v1863, %v1866
        %v1868 = vrot.slane %v1866, 4
        %v1869 = vshrl.u32 %v360, 16
        %v1871 = vrot.slane %v1869, 5
        %v1872 = vrot.slane %v813, 6
        %v1873 = vor.u32 %v1871, %v1872
        %v1874 = vsel %vm1814, %v1868, %v1873
        %v1875 = vrot.slane %v818, 5
        %v1876 = vrot.slane %v821, 6
        %v1877 = vor.u32 %v1875, %v1876
        %v1878 = vrot.slane %v1877, 4
        %v1879 = vrot.slane %v831, 5
        %v1880 = vrot.slane %v827, 6
        %v1881 = vor.u32 %v1879, %v1880
        %v1882 = vsel %vm1814, %v1878, %v1881
        %v1883 = vrot.slane %v1881, 4
        %v1884 = vshrl.u32 %v363, 16
        %v1886 = vrot.slane %v1884, 5
        %v1887 = vrot.slane %v837, 6
        %v1888 = vor.u32 %v1886, %v1887
        %v1889 = vsel %vm1814, %v1883, %v1888
        %v1890 = vrot.slane %v842, 5
        %v1891 = vrot.slane %v845, 6
        %v1892 = vor.u32 %v1890, %v1891
        %v1893 = vrot.slane %v1892, 4
        %v1894 = vrot.slane %v855, 5
        %v1895 = vrot.slane %v851, 6
        %v1896 = vor.u32 %v1894, %v1895
        %v1897 = vsel %vm1814, %v1893, %v1896
        %v1898 = vrot.slane %v1896, 4
        %v1899 = vshrl.u32 %v366, 16
        %v1901 = vrot.slane %v1899, 5
        %v1902 = vrot.slane %v861, 6
        %v1903 = vor.u32 %v1901, %v1902
        %v1904 = vsel %vm1814, %v1898, %v1903
        %v1905 = vrot.slane %v866, 5
        %v1906 = vrot.slane %v869, 6
        %v1907 = vor.u32 %v1905, %v1906
        %v1908 = vrot.slane %v1907, 4
        %v1909 = vrot.slane %v879, 5
        %v1910 = vrot.slane %v875, 6
        %v1911 = vor.u32 %v1909, %v1910
        %v1912 = vsel %vm1814, %v1908, %v1911
        %v1913 = vrot.slane %v1911, 4
        %v1914 = vshrl.u32 %v369, 16
        %v1916 = vrot.slane %v1914, 5
        %v1917 = vrot.slane %v885, 6
        %v1918 = vor.u32 %v1916, %v1917
        %v1919 = vsel %vm1814, %v1913, %v1918
        %v1920 = vrot.slane %v890, 5
        %v1921 = vrot.slane %v893, 6
        %v1922 = vor.u32 %v1920, %v1921
        %v1923 = vrot.slane %v1922, 4
        %v1924 = vrot.slane %v903, 5
        %v1925 = vrot.slane %v899, 6
        %v1926 = vor.u32 %v1924, %v1925
        %v1927 = vsel %vm1814, %v1923, %v1926
        %v1928 = vrot.slane %v1926, 4
        %v1929 = vshrl.u32 %v372, 16
        %v1931 = vrot.slane %v1929, 5
        %v1932 = vrot.slane %v909, 6
        %v1933 = vor.u32 %v1931, %v1932
        %v1934 = vsel %vm1814, %v1928, %v1933
        %v1935 = vrot.slane %v914, 5
        %v1936 = vrot.slane %v917, 6
        %v1937 = vor.u32 %v1935, %v1936
        %v1938 = vrot.slane %v1937, 4
        %v1939 = vrot.slane %v927, 5
        %v1940 = vrot.slane %v923, 6
        %v1941 = vor.u32 %v1939, %v1940
        %v1942 = vsel %vm1814, %v1938, %v1941
        %v1943 = vrot.slane %v1941, 4
        %v1944 = vshrl.u32 %v375, 16
        %v1946 = vrot.slane %v1944, 5
        %v1947 = vrot.slane %v933, 6
        %v1948 = vor.u32 %v1946, %v1947
        %v1949 = vsel %vm1814, %v1943, %v1948
        %v1950 = vrot.slane %v938, 5
        %v1951 = vrot.slane %v941, 6
        %v1952 = vor.u32 %v1950, %v1951
        %v1953 = vrot.slane %v1952, 4
        %v1954 = vrot.slane %v951, 5
        %v1955 = vrot.slane %v947, 6
        %v1956 = vor.u32 %v1954, %v1955
        %v1957 = vsel %vm1814, %v1953, %v1956
        %v1958 = vrot.slane %v1956, 4
        %v1959 = vshrl.u32 %v378, 16
        %v1961 = vrot.slane %v1959, 5
        %v1962 = vrot.slane %v957, 6
        %v1963 = vor.u32 %v1961, %v1962
        %v1964 = vsel %vm1814, %v1958, %v1963
        %v1965 = vrot.slane %v962, 5
        %v1966 = vrot.slane %v965, 6
        %v1967 = vor.u32 %v1965, %v1966
        %v1968 = vrot.slane %v1967, 4
        %v1969 = vrot.slane %v975, 5
        %v1970 = vrot.slane %v971, 6
        %v1971 = vor.u32 %v1969, %v1970
        %v1972 = vsel %vm1814, %v1968, %v1971
        %v1973 = vrot.slane %v1971, 4
        %v1974 = vshrl.u32 %v381, 16
        %v1976 = vrot.slane %v1974, 5
        %v1977 = vrot.slane %v981, 6
        %v1978 = vor.u32 %v1976, %v1977
        %v1979 = vsel %vm1814, %v1973, %v1978
        %v1980 = vrot.slane %v986, 5
        %v1981 = vrot.slane %v989, 6
        %v1982 = vor.u32 %v1980, %v1981
        %v1983 = vrot.slane %v1982, 4
        %v1984 = vrot.slane %v999, 5
        %v1985 = vrot.slane %v995, 6
        %v1986 = vor.u32 %v1984, %v1985
        %v1987 = vsel %vm1814, %v1983, %v1986
        %v1988 = vrot.slane %v1986, 4
        %v1989 = vshrl.u32 %v384, 16
        %v1991 = vrot.slane %v1989, 5
        %v1992 = vrot.slane %v1005, 6
        %v1993 = vor.u32 %v1991, %v1992
        %v1994 = vsel %vm1814, %v1988, %v1993
        %v1995 = vrot.slane %v1010, 5
        %v1996 = vrot.slane %v1013, 6
        %v1997 = vor.u32 %v1995, %v1996
        %v1998 = vrot.slane %v1997, 4
        %v1999 = vrot.slane %v1023, 5
        %v2000 = vrot.slane %v1019, 6
        %v2001 = vor.u32 %v1999, %v2000
        %v2002 = vsel %vm1814, %v1998, %v2001
        %v2003 = vrot.slane %v2001, 4
        %v2004 = vshrl.u32 %v387, 16
        %v2006 = vrot.slane %v2004, 5
        %v2007 = vrot.slane %v1029, 6
        %v2008 = vor.u32 %v2006, %v2007
        %v2009 = vsel %vm1814, %v2003, %v2008
        %v2010 = vrot.slane %v1034, 5
        %v2011 = vrot.slane %v1037, 6
        %v2012 = vor.u32 %v2010, %v2011
        %v2013 = vrot.slane %v2012, 4
        %v2014 = vrot.slane %v1047, 5
        %v2015 = vrot.slane %v1043, 6
        %v2016 = vor.u32 %v2014, %v2015
        %v2017 = vsel %vm1814, %v2013, %v2016
        %v2018 = vrot.slane %v2016, 4
        %v2019 = vshrl.u32 %v390, 16
        %v2021 = vrot.slane %v2019, 5
        %v2022 = vrot.slane %v1053, 6
        %v2023 = vor.u32 %v2021, %v2022
        %v2024 = vsel %vm1814, %v2018, %v2023
        %v2025 = vrot.slane %v1058, 5
        %v2026 = vrot.slane %v1061, 6
        %v2027 = vor.u32 %v2025, %v2026
        %v2028 = vrot.slane %v2027, 4
        %v2029 = vrot.slane %v1071, 5
        %v2030 = vrot.slane %v1067, 6
        %v2031 = vor.u32 %v2029, %v2030
        %v2032 = vsel %vm1814, %v2028, %v2031
        %v2033 = vrot.slane %v2031, 4
        %v2034 = vshrl.u32 %v393, 16
        %v2036 = vrot.slane %v2034, 5
        %v2037 = vrot.slane %v1077, 6
        %v2038 = vor.u32 %v2036, %v2037
        %v2039 = vsel %vm1814, %v2033, %v2038
        %v2040 = vrot.slane %v1082, 5
        %v2041 = vrot.slane %v1085, 6
        %v2042 = vor.u32 %v2040, %v2041
        %v2043 = vrot.slane %v2042, 4
        %v2044 = vrot.slane %v1095, 5
        %v2045 = vrot.slane %v1091, 6
        %v2046 = vor.u32 %v2044, %v2045
        %v2047 = vsel %vm1814, %v2043, %v2046
        %v2048 = vrot.slane %v2046, 4
        %v2049 = vshrl.u32 %v396, 16
        %v2051 = vrot.slane %v2049, 5
        %v2052 = vrot.slane %v1101, 6
        %v2053 = vor.u32 %v2051, %v2052
        %v2054 = vsel %vm1814, %v2048, %v2053
        %s2055 = sadd.s32 %s397, 3
        %s2056 = smul.addr %s2055, 2
        %s2057 = scalar_lea.vmem %s1, %s2056
        %v2058 = vld [vmem:[%s2057] sm:$0x3]
        %v2059 = vld [vmem:[#allocation2] sm:$0xff]
        %v2060 = vld [vmem:[#allocation2 + $0x8] sm:$0xff]
        %v2061 = vld [vmem:[#allocation2 + $0x10] sm:$0xff]
        %v2062 = vld [vmem:[#allocation2 + $0x18] sm:$0xff]
        %v2063 = vld [vmem:[#allocation2 + $0x20] sm:$0xff]
        %v2064 = vld [vmem:[#allocation2 + $0x28] sm:$0xff]
        %v2065 = vld [vmem:[#allocation2 + $0x30] sm:$0xff]
        %v2066 = vld [vmem:[#allocation2 + $0x38] sm:$0xff]
        %v2067 = vld [vmem:[#allocation2 + $0x40] sm:$0xff]
        %v2068 = vld [vmem:[#allocation2 + $0x48] sm:$0xff]
        %v2069 = vld [vmem:[#allocation2 + $0x50] sm:$0xff]
        %v2070 = vld [vmem:[#allocation2 + $0x58] sm:$0xff]
        %v2071 = vld [vmem:[#allocation2 + $0x60] sm:$0xff]
        %v2072 = vld [vmem:[#allocation2 + $0x68] sm:$0xff]
        %v2073 = vld [vmem:[#allocation2 + $0x70] sm:$0xff]
        %v2074 = vld [vmem:[#allocation2 + $0x78] sm:$0xff]
        %v2075 = vld [vmem:[#allocation2 + $0x80] sm:$0xff]
        %v2076 = vld [vmem:[#allocation2 + $0x88] sm:$0xff]
        %v2077 = vld [vmem:[#allocation2 + $0x90] sm:$0xff]
        %v2078 = vld [vmem:[#allocation2 + $0x98] sm:$0xff]
        %v2079 = vld [vmem:[#allocation2 + $0xa0] sm:$0xff]
        %v2080 = vld [vmem:[#allocation2 + $0xa8] sm:$0xff]
        %v2081 = vld [vmem:[#allocation2 + $0xb0] sm:$0xff]
        %v2082 = vld [vmem:[#allocation2 + $0xb8] sm:$0xff]
        %v2083 = vld [vmem:[#allocation2 + $0xc0] sm:$0xff]
        %v2084 = vld [vmem:[#allocation2 + $0xc8] sm:$0xff]
        %v2085 = vld [vmem:[#allocation2 + $0xd0] sm:$0xff]
        %v2086 = vld [vmem:[#allocation2 + $0xd8] sm:$0xff]
        %v2087 = vld [vmem:[#allocation2 + $0xe0] sm:$0xff]
        %v2088 = vld [vmem:[#allocation2 + $0xe8] sm:$0xff]
        %v2089 = vld [vmem:[#allocation2 + $0xf0] sm:$0xff]
        %v2090 = vld [vmem:[#allocation2 + $0xf8] sm:$0xff]
        %v2091 = vunpack.c.l.b16 %v1822
        %v2092 = vunpack.c.l.b16 %v1829
        %v2093 = vunpack.c.l.b16 %v1837
        %v2094 = vunpack.c.l.b16 %v1844
        %v2095 = vunpack.c.l.b16 %v1852
        %v2096 = vunpack.c.l.b16 %v1859
        %v2097 = vunpack.c.l.b16 %v1867
        %v2098 = vunpack.c.l.b16 %v1874
        %v2099 = vunpack.c.l.b16 %v1882
        %v2100 = vunpack.c.l.b16 %v1889
        %v2101 = vunpack.c.l.b16 %v1897
        %v2102 = vunpack.c.l.b16 %v1904
        %v2103 = vunpack.c.l.b16 %v1912
        %v2104 = vunpack.c.l.b16 %v1919
        %v2105 = vunpack.c.l.b16 %v1927
        %v2106 = vunpack.c.l.b16 %v1934
        %v2107 = vunpack.c.l.b16 %v1942
        %v2108 = vunpack.c.l.b16 %v1949
        %v2109 = vunpack.c.l.b16 %v1957
        %v2110 = vunpack.c.l.b16 %v1964
        %v2111 = vunpack.c.l.b16 %v1972
        %v2112 = vunpack.c.l.b16 %v1979
        %v2113 = vunpack.c.l.b16 %v1987
        %v2114 = vunpack.c.l.b16 %v1994
        %v2115 = vunpack.c.l.b16 %v2002
        %v2116 = vunpack.c.l.b16 %v2009
        %v2117 = vunpack.c.l.b16 %v2017
        %v2118 = vunpack.c.l.b16 %v2024
        %v2119 = vunpack.c.l.b16 %v2032
        %v2120 = vunpack.c.l.b16 %v2039
        %v2121 = vunpack.c.l.b16 %v2047
        %v2122 = vunpack.c.l.b16 %v2054
        %v2123 = vpack.c.b16 %v2092, %v2091
        %v2124 = vpack.c.b16 %v2094, %v2093
        %v2125 = vpack.c.b16 %v2096, %v2095
        %v2126 = vpack.c.b16 %v2098, %v2097
        %v2127 = vpack.c.b16 %v2100, %v2099
        %v2128 = vpack.c.b16 %v2102, %v2101
        %v2129 = vpack.c.b16 %v2104, %v2103
        %v2130 = vpack.c.b16 %v2106, %v2105
        %v2131 = vpack.c.b16 %v2108, %v2107
        %v2132 = vpack.c.b16 %v2110, %v2109
        %v2133 = vpack.c.b16 %v2112, %v2111
        %v2134 = vpack.c.b16 %v2114, %v2113
        %v2135 = vpack.c.b16 %v2116, %v2115
        %v2136 = vpack.c.b16 %v2118, %v2117
        %v2137 = vpack.c.b16 %v2120, %v2119
        %v2138 = vpack.c.b16 %v2122, %v2121
        %v2140 = vsel %vm306, %v2123, 0
        %v2143 = vsel %vm306, %v2124, 0
        %v2146 = vsel %vm306, %v2125, 0
        %v2149 = vsel %vm306, %v2126, 0
        %v2152 = vsel %vm306, %v2127, 0
        %v2155 = vsel %vm306, %v2128, 0
        %v2158 = vsel %vm306, %v2129, 0
        %v2161 = vsel %vm306, %v2130, 0
        %v2164 = vsel %vm306, %v2131, 0
        %v2167 = vsel %vm306, %v2132, 0
        %v2170 = vsel %vm306, %v2133, 0
        %v2173 = vsel %vm306, %v2134, 0
        %v2176 = vsel %vm306, %v2135, 0
        %v2179 = vsel %vm306, %v2136, 0
        %v2182 = vsel %vm306, %v2137, 0
        %v2185 = vsel %vm306, %v2138, 0
        %v2188 = vsel %vm561, %v2058, 0
        %2190 = vmatpush.bf16.msra.mxu0 0
        %2191 = vmatpush.bf16.msra.mxu0 0
        %2192 = vmatpush.bf16.msra.mxu0 0
        %2193 = vmatpush.bf16.msra.mxu0 0
        %2194 = vmatpush.bf16.msra.mxu0 0
        %2195 = vmatpush.bf16.msra.mxu0 0
        %2196 = vmatpush.bf16.msra.mxu0 0
        %2197 = vmatpush.bf16.msra.mxu0 %v2188
        %2198 = vmatmul.bf16.gmra.mxu0 %v2140
        %v2199 = vpop.f32.mrf.mxu0
        %v2200 = vadd.f32 0.0, %v2199
        %v2201 = vpop.f32.mrf.mxu0
        %v2202 = vadd.f32 0.0, %v2201
        %2203 = vmatmul.bf16.gmra.mxu0 %v2143
        %v2204 = vpop.f32.mrf.mxu0
        %v2205 = vadd.f32 0.0, %v2204
        %v2206 = vpop.f32.mrf.mxu0
        %v2207 = vadd.f32 0.0, %v2206
        %2208 = vmatmul.bf16.gmra.mxu0 %v2146
        %v2209 = vpop.f32.mrf.mxu0
        %v2210 = vadd.f32 0.0, %v2209
        %v2211 = vpop.f32.mrf.mxu0
        %v2212 = vadd.f32 0.0, %v2211
        %2213 = vmatmul.bf16.gmra.mxu0 %v2149
        %v2214 = vpop.f32.mrf.mxu0
        %v2215 = vadd.f32 0.0, %v2214
        %v2216 = vpop.f32.mrf.mxu0
        %v2217 = vadd.f32 0.0, %v2216
        %2218 = vmatmul.bf16.gmra.mxu0 %v2152
        %v2219 = vpop.f32.mrf.mxu0
        %v2220 = vadd.f32 0.0, %v2219
        %v2221 = vpop.f32.mrf.mxu0
        %v2222 = vadd.f32 0.0, %v2221
        %2223 = vmatmul.bf16.gmra.mxu0 %v2155
        %v2224 = vpop.f32.mrf.mxu0
        %v2225 = vadd.f32 0.0, %v2224
        %v2226 = vpop.f32.mrf.mxu0
        %v2227 = vadd.f32 0.0, %v2226
        %2228 = vmatmul.bf16.gmra.mxu0 %v2158
        %v2229 = vpop.f32.mrf.mxu0
        %v2230 = vadd.f32 0.0, %v2229
        %v2231 = vpop.f32.mrf.mxu0
        %v2232 = vadd.f32 0.0, %v2231
        %2233 = vmatmul.bf16.gmra.mxu0 %v2161
        %v2234 = vpop.f32.mrf.mxu0
        %v2235 = vadd.f32 0.0, %v2234
        %v2236 = vpop.f32.mrf.mxu0
        %v2237 = vadd.f32 0.0, %v2236
        %2238 = vmatmul.bf16.gmra.mxu0 %v2164
        %v2239 = vpop.f32.mrf.mxu0
        %v2240 = vadd.f32 0.0, %v2239
        %v2241 = vpop.f32.mrf.mxu0
        %v2242 = vadd.f32 0.0, %v2241
        %2243 = vmatmul.bf16.gmra.mxu0 %v2167
        %v2244 = vpop.f32.mrf.mxu0
        %v2245 = vadd.f32 0.0, %v2244
        %v2246 = vpop.f32.mrf.mxu0
        %v2247 = vadd.f32 0.0, %v2246
        %2248 = vmatmul.bf16.gmra.mxu0 %v2170
        %v2249 = vpop.f32.mrf.mxu0
        %v2250 = vadd.f32 0.0, %v2249
        %v2251 = vpop.f32.mrf.mxu0
        %v2252 = vadd.f32 0.0, %v2251
        %2253 = vmatmul.bf16.gmra.mxu0 %v2173
        %v2254 = vpop.f32.mrf.mxu0
        %v2255 = vadd.f32 0.0, %v2254
        %v2256 = vpop.f32.mrf.mxu0
        %v2257 = vadd.f32 0.0, %v2256
        %2258 = vmatmul.bf16.gmra.mxu0 %v2176
        %v2259 = vpop.f32.mrf.mxu0
        %v2260 = vadd.f32 0.0, %v2259
        %v2261 = vpop.f32.mrf.mxu0
        %v2262 = vadd.f32 0.0, %v2261
        %2263 = vmatmul.bf16.gmra.mxu0 %v2179
        %v2264 = vpop.f32.mrf.mxu0
        %v2265 = vadd.f32 0.0, %v2264
        %v2266 = vpop.f32.mrf.mxu0
        %v2267 = vadd.f32 0.0, %v2266
        %2268 = vmatmul.bf16.gmra.mxu0 %v2182
        %v2269 = vpop.f32.mrf.mxu0
        %v2270 = vadd.f32 0.0, %v2269
        %v2271 = vpop.f32.mrf.mxu0
        %v2272 = vadd.f32 0.0, %v2271
        %2273 = vmatmul.bf16.gmra.mxu0 %v2185
        %v2274 = vpop.f32.mrf.mxu0
        %v2275 = vadd.f32 0.0, %v2274
        %v2276 = vpop.f32.mrf.mxu0
        %v2277 = vadd.f32 0.0, %v2276
        %2278 = vdwg.mxu0
        %v2279 = vadd.f32 %v2059, %v2200
        %v2280 = vadd.f32 %v2060, %v2202
        %v2281 = vadd.f32 %v2061, %v2205
        %v2282 = vadd.f32 %v2062, %v2207
        %v2283 = vadd.f32 %v2063, %v2210
        %v2284 = vadd.f32 %v2064, %v2212
        %v2285 = vadd.f32 %v2065, %v2215
        %v2286 = vadd.f32 %v2066, %v2217
        %v2287 = vadd.f32 %v2067, %v2220
        %v2288 = vadd.f32 %v2068, %v2222
        %v2289 = vadd.f32 %v2069, %v2225
        %v2290 = vadd.f32 %v2070, %v2227
        %v2291 = vadd.f32 %v2071, %v2230
        %v2292 = vadd.f32 %v2072, %v2232
        %v2293 = vadd.f32 %v2073, %v2235
        %v2294 = vadd.f32 %v2074, %v2237
        %v2295 = vadd.f32 %v2075, %v2240
        %v2296 = vadd.f32 %v2076, %v2242
        %v2297 = vadd.f32 %v2077, %v2245
        %v2298 = vadd.f32 %v2078, %v2247
        %v2299 = vadd.f32 %v2079, %v2250
        %v2300 = vadd.f32 %v2080, %v2252
        %v2301 = vadd.f32 %v2081, %v2255
        %v2302 = vadd.f32 %v2082, %v2257
        %v2303 = vadd.f32 %v2083, %v2260
        %v2304 = vadd.f32 %v2084, %v2262
        %v2305 = vadd.f32 %v2085, %v2265
        %v2306 = vadd.f32 %v2086, %v2267
        %v2307 = vadd.f32 %v2087, %v2270
        %v2308 = vadd.f32 %v2088, %v2272
        %v2309 = vadd.f32 %v2089, %v2275
        %v2310 = vadd.f32 %v2090, %v2277
        %2311 = vst.msk [vmem:[#allocation2] sm:$0xff] %vm306, %v2279
        %2312 = vst.msk [vmem:[#allocation2 + $0x8] sm:$0xff] %vm306, %v2280
        %2313 = vst.msk [vmem:[#allocation2 + $0x10] sm:$0xff] %vm306, %v2281
        %2314 = vst.msk [vmem:[#allocation2 + $0x18] sm:$0xff] %vm306, %v2282
        %2315 = vst.msk [vmem:[#allocation2 + $0x20] sm:$0xff] %vm306, %v2283
        %2316 = vst.msk [vmem:[#allocation2 + $0x28] sm:$0xff] %vm306, %v2284
        %2317 = vst.msk [vmem:[#allocation2 + $0x30] sm:$0xff] %vm306, %v2285
        %2318 = vst.msk [vmem:[#allocation2 + $0x38] sm:$0xff] %vm306, %v2286
        %2319 = vst.msk [vmem:[#allocation2 + $0x40] sm:$0xff] %vm306, %v2287
        %2320 = vst.msk [vmem:[#allocation2 + $0x48] sm:$0xff] %vm306, %v2288
        %2321 = vst.msk [vmem:[#allocation2 + $0x50] sm:$0xff] %vm306, %v2289
        %2322 = vst.msk [vmem:[#allocation2 + $0x58] sm:$0xff] %vm306, %v2290
        %2323 = vst.msk [vmem:[#allocation2 + $0x60] sm:$0xff] %vm306, %v2291
        %2324 = vst.msk [vmem:[#allocation2 + $0x68] sm:$0xff] %vm306, %v2292
        %2325 = vst.msk [vmem:[#allocation2 + $0x70] sm:$0xff] %vm306, %v2293
        %2326 = vst.msk [vmem:[#allocation2 + $0x78] sm:$0xff] %vm306, %v2294
        %2327 = vst.msk [vmem:[#allocation2 + $0x80] sm:$0xff] %vm306, %v2295
        %2328 = vst.msk [vmem:[#allocation2 + $0x88] sm:$0xff] %vm306, %v2296
        %2329 = vst.msk [vmem:[#allocation2 + $0x90] sm:$0xff] %vm306, %v2297
        %2330 = vst.msk [vmem:[#allocation2 + $0x98] sm:$0xff] %vm306, %v2298
        %2331 = vst.msk [vmem:[#allocation2 + $0xa0] sm:$0xff] %vm306, %v2299
        %2332 = vst.msk [vmem:[#allocation2 + $0xa8] sm:$0xff] %vm306, %v2300
        %2333 = vst.msk [vmem:[#allocation2 + $0xb0] sm:$0xff] %vm306, %v2301
        %2334 = vst.msk [vmem:[#allocation2 + $0xb8] sm:$0xff] %vm306, %v2302
        %2335 = vst.msk [vmem:[#allocation2 + $0xc0] sm:$0xff] %vm306, %v2303
        %2336 = vst.msk [vmem:[#allocation2 + $0xc8] sm:$0xff] %vm306, %v2304
        %2337 = vst.msk [vmem:[#allocation2 + $0xd0] sm:$0xff] %vm306, %v2305
        %2338 = vst.msk [vmem:[#allocation2 + $0xd8] sm:$0xff] %vm306, %v2306
        %2339 = vst.msk [vmem:[#allocation2 + $0xe0] sm:$0xff] %vm306, %v2307
        %2340 = vst.msk [vmem:[#allocation2 + $0xe8] sm:$0xff] %vm306, %v2308
        %2341 = vst.msk [vmem:[#allocation2 + $0xf0] sm:$0xff] %vm306, %v2309
        %2342 = vst.msk [vmem:[#allocation2 + $0xf8] sm:$0xff] %vm306, %v2310
        %vm2343 = vcmask 1041408
        %vm2344 = vcmask 1045508
        %vm2345 = vmor %vm2343, %vm2344
        %v2346 = vrot.slane %v349, 6
        %v2347 = vrot.slane %v2346, 4
        %v2348 = vrot.slane %v350, 6
        %v2349 = vsel %vm2345, %v2347, %v2348
        %v2350 = vrot.slane %v2348, 4
        %v2351 = vrot.slane %v351, 6
        %v2352 = vsel %vm2345, %v2350, %v2351
        %v2353 = vrot.slane %v352, 6
        %v2354 = vrot.slane %v2353, 4
        %v2355 = vrot.slane %v353, 6
        %v2356 = vsel %vm2345, %v2354, %v2355
        %v2357 = vrot.slane %v2355, 4
        %v2358 = vrot.slane %v354, 6
        %v2359 = vsel %vm2345, %v2357, %v2358
        %v2360 = vrot.slane %v355, 6
        %v2361 = vrot.slane %v2360, 4
        %v2362 = vrot.slane %v356, 6
        %v2363 = vsel %vm2345, %v2361, %v2362
        %v2364 = vrot.slane %v2362, 4
        %v2365 = vrot.slane %v357, 6
        %v2366 = vsel %vm2345, %v2364, %v2365
        %v2367 = vrot.slane %v358, 6
        %v2368 = vrot.slane %v2367, 4
        %v2369 = vrot.slane %v359, 6
        %v2370 = vsel %vm2345, %v2368, %v2369
        %v2371 = vrot.slane %v2369, 4
        %v2372 = vrot.slane %v360, 6
        %v2373 = vsel %vm2345, %v2371, %v2372
        %v2374 = vrot.slane %v361, 6
        %v2375 = vrot.slane %v2374, 4
        %v2376 = vrot.slane %v362, 6
        %v2377 = vsel %vm2345, %v2375, %v2376
        %v2378 = vrot.slane %v2376, 4
        %v2379 = vrot.slane %v363, 6
        %v2380 = vsel %vm2345, %v2378, %v2379
        %v2381 = vrot.slane %v364, 6
        %v2382 = vrot.slane %v2381, 4
        %v2383 = vrot.slane %v365, 6
        %v2384 = vsel %vm2345, %v2382, %v2383
        %v2385 = vrot.slane %v2383, 4
        %v2386 = vrot.slane %v366, 6
        %v2387 = vsel %vm2345, %v2385, %v2386
        %v2388 = vrot.slane %v367, 6
        %v2389 = vrot.slane %v2388, 4
        %v2390 = vrot.slane %v368, 6
        %v2391 = vsel %vm2345, %v2389, %v2390
        %v2392 = vrot.slane %v2390, 4
        %v2393 = vrot.slane %v369, 6
        %v2394 = vsel %vm2345, %v2392, %v2393
        %v2395 = vrot.slane %v370, 6
        %v2396 = vrot.slane %v2395, 4
        %v2397 = vrot.slane %v371, 6
        %v2398 = vsel %vm2345, %v2396, %v2397
        %v2399 = vrot.slane %v2397, 4
        %v2400 = vrot.slane %v372, 6
        %v2401 = vsel %vm2345, %v2399, %v2400
        %v2402 = vrot.slane %v373, 6
        %v2403 = vrot.slane %v2402, 4
        %v2404 = vrot.slane %v374, 6
        %v2405 = vsel %vm2345, %v2403, %v2404
        %v2406 = vrot.slane %v2404, 4
        %v2407 = vrot.slane %v375, 6
        %v2408 = vsel %vm2345, %v2406, %v2407
        %v2409 = vrot.slane %v376, 6
        %v2410 = vrot.slane %v2409, 4
        %v2411 = vrot.slane %v377, 6
        %v2412 = vsel %vm2345, %v2410, %v2411
        %v2413 = vrot.slane %v2411, 4
        %v2414 = vrot.slane %v378, 6
        %v2415 = vsel %vm2345, %v2413, %v2414
        %v2416 = vrot.slane %v379, 6
        %v2417 = vrot.slane %v2416, 4
        %v2418 = vrot.slane %v380, 6
        %v2419 = vsel %vm2345, %v2417, %v2418
        %v2420 = vrot.slane %v2418, 4
        %v2421 = vrot.slane %v381, 6
        %v2422 = vsel %vm2345, %v2420, %v2421
        %v2423 = vrot.slane %v382, 6
        %v2424 = vrot.slane %v2423, 4
        %v2425 = vrot.slane %v383, 6
        %v2426 = vsel %vm2345, %v2424, %v2425
        %v2427 = vrot.slane %v2425, 4
        %v2428 = vrot.slane %v384, 6
        %v2429 = vsel %vm2345, %v2427, %v2428
        %v2430 = vrot.slane %v385, 6
        %v2431 = vrot.slane %v2430, 4
        %v2432 = vrot.slane %v386, 6
        %v2433 = vsel %vm2345, %v2431, %v2432
        %v2434 = vrot.slane %v2432, 4
        %v2435 = vrot.slane %v387, 6
        %v2436 = vsel %vm2345, %v2434, %v2435
        %v2437 = vrot.slane %v388, 6
        %v2438 = vrot.slane %v2437, 4
        %v2439 = vrot.slane %v389, 6
        %v2440 = vsel %vm2345, %v2438, %v2439
        %v2441 = vrot.slane %v2439, 4
        %v2442 = vrot.slane %v390, 6
        %v2443 = vsel %vm2345, %v2441, %v2442
        %v2444 = vrot.slane %v391, 6
        %v2445 = vrot.slane %v2444, 4
        %v2446 = vrot.slane %v392, 6
        %v2447 = vsel %vm2345, %v2445, %v2446
        %v2448 = vrot.slane %v2446, 4
        %v2449 = vrot.slane %v393, 6
        %v2450 = vsel %vm2345, %v2448, %v2449
        %v2451 = vrot.slane %v394, 6
        %v2452 = vrot.slane %v2451, 4
        %v2453 = vrot.slane %v395, 6
        %v2454 = vsel %vm2345, %v2452, %v2453
        %v2455 = vrot.slane %v2453, 4
        %v2456 = vrot.slane %v396, 6
        %v2457 = vsel %vm2345, %v2455, %v2456
        %s2458 = sadd.s32 %s397, 4
        %s2459 = smul.addr %s2458, 2
        %s2460 = scalar_lea.vmem %s1, %s2459
        %v2461 = vld [vmem:[%s2460] sm:$0x3]
        %v2462 = vld [vmem:[#allocation2] sm:$0xff]
        %v2463 = vld [vmem:[#allocation2 + $0x8] sm:$0xff]
        %v2464 = vld [vmem:[#allocation2 + $0x10] sm:$0xff]
        %v2465 = vld [vmem:[#allocation2 + $0x18] sm:$0xff]
        %v2466 = vld [vmem:[#allocation2 + $0x20] sm:$0xff]
        %v2467 = vld [vmem:[#allocation2 + $0x28] sm:$0xff]
        %v2468 = vld [vmem:[#allocation2 + $0x30] sm:$0xff]
        %v2469 = vld [vmem:[#allocation2 + $0x38] sm:$0xff]
        %v2470 = vld [vmem:[#allocation2 + $0x40] sm:$0xff]
        %v2471 = vld [vmem:[#allocation2 + $0x48] sm:$0xff]
        %v2472 = vld [vmem:[#allocation2 + $0x50] sm:$0xff]
        %v2473 = vld [vmem:[#allocation2 + $0x58] sm:$0xff]
        %v2474 = vld [vmem:[#allocation2 + $0x60] sm:$0xff]
        %v2475 = vld [vmem:[#allocation2 + $0x68] sm:$0xff]
        %v2476 = vld [vmem:[#allocation2 + $0x70] sm:$0xff]
        %v2477 = vld [vmem:[#allocation2 + $0x78] sm:$0xff]
        %v2478 = vld [vmem:[#allocation2 + $0x80] sm:$0xff]
        %v2479 = vld [vmem:[#allocation2 + $0x88] sm:$0xff]
        %v2480 = vld [vmem:[#allocation2 + $0x90] sm:$0xff]
        %v2481 = vld [vmem:[#allocation2 + $0x98] sm:$0xff]
        %v2482 = vld [vmem:[#allocation2 + $0xa0] sm:$0xff]
        %v2483 = vld [vmem:[#allocation2 + $0xa8] sm:$0xff]
        %v2484 = vld [vmem:[#allocation2 + $0xb0] sm:$0xff]
        %v2485 = vld [vmem:[#allocation2 + $0xb8] sm:$0xff]
        %v2486 = vld [vmem:[#allocation2 + $0xc0] sm:$0xff]
        %v2487 = vld [vmem:[#allocation2 + $0xc8] sm:$0xff]
        %v2488 = vld [vmem:[#allocation2 + $0xd0] sm:$0xff]
        %v2489 = vld [vmem:[#allocation2 + $0xd8] sm:$0xff]
        %v2490 = vld [vmem:[#allocation2 + $0xe0] sm:$0xff]
        %v2491 = vld [vmem:[#allocation2 + $0xe8] sm:$0xff]
        %v2492 = vld [vmem:[#allocation2 + $0xf0] sm:$0xff]
        %v2493 = vld [vmem:[#allocation2 + $0xf8] sm:$0xff]
        %v2494 = vunpack.c.l.b16 %v2349
        %v2495 = vunpack.c.l.b16 %v2352
        %v2496 = vunpack.c.l.b16 %v2356
        %v2497 = vunpack.c.l.b16 %v2359
        %v2498 = vunpack.c.l.b16 %v2363
        %v2499 = vunpack.c.l.b16 %v2366
        %v2500 = vunpack.c.l.b16 %v2370
        %v2501 = vunpack.c.l.b16 %v2373
        %v2502 = vunpack.c.l.b16 %v2377
        %v2503 = vunpack.c.l.b16 %v2380
        %v2504 = vunpack.c.l.b16 %v2384
        %v2505 = vunpack.c.l.b16 %v2387
        %v2506 = vunpack.c.l.b16 %v2391
        %v2507 = vunpack.c.l.b16 %v2394
        %v2508 = vunpack.c.l.b16 %v2398
        %v2509 = vunpack.c.l.b16 %v2401
        %v2510 = vunpack.c.l.b16 %v2405
        %v2511 = vunpack.c.l.b16 %v2408
        %v2512 = vunpack.c.l.b16 %v2412
        %v2513 = vunpack.c.l.b16 %v2415
        %v2514 = vunpack.c.l.b16 %v2419
        %v2515 = vunpack.c.l.b16 %v2422
        %v2516 = vunpack.c.l.b16 %v2426
        %v2517 = vunpack.c.l.b16 %v2429
        %v2518 = vunpack.c.l.b16 %v2433
        %v2519 = vunpack.c.l.b16 %v2436
        %v2520 = vunpack.c.l.b16 %v2440
        %v2521 = vunpack.c.l.b16 %v2443
        %v2522 = vunpack.c.l.b16 %v2447
        %v2523 = vunpack.c.l.b16 %v2450
        %v2524 = vunpack.c.l.b16 %v2454
        %v2525 = vunpack.c.l.b16 %v2457
        %v2526 = vpack.c.b16 %v2495, %v2494
        %v2527 = vpack.c.b16 %v2497, %v2496
        %v2528 = vpack.c.b16 %v2499, %v2498
        %v2529 = vpack.c.b16 %v2501, %v2500
        %v2530 = vpack.c.b16 %v2503, %v2502
        %v2531 = vpack.c.b16 %v2505, %v2504
        %v2532 = vpack.c.b16 %v2507, %v2506
        %v2533 = vpack.c.b16 %v2509, %v2508
        %v2534 = vpack.c.b16 %v2511, %v2510
        %v2535 = vpack.c.b16 %v2513, %v2512
        %v2536 = vpack.c.b16 %v2515, %v2514
        %v2537 = vpack.c.b16 %v2517, %v2516
        %v2538 = vpack.c.b16 %v2519, %v2518
        %v2539 = vpack.c.b16 %v2521, %v2520
        %v2540 = vpack.c.b16 %v2523, %v2522
        %v2541 = vpack.c.b16 %v2525, %v2524
        %v2543 = vsel %vm306, %v2526, 0
        %v2546 = vsel %vm306, %v2527, 0
        %v2549 = vsel %vm306, %v2528, 0
        %v2552 = vsel %vm306, %v2529, 0
        %v2555 = vsel %vm306, %v2530, 0
        %v2558 = vsel %vm306, %v2531, 0
        %v2561 = vsel %vm306, %v2532, 0
        %v2564 = vsel %vm306, %v2533, 0
        %v2567 = vsel %vm306, %v2534, 0
        %v2570 = vsel %vm306, %v2535, 0
        %v2573 = vsel %vm306, %v2536, 0
        %v2576 = vsel %vm306, %v2537, 0
        %v2579 = vsel %vm306, %v2538, 0
        %v2582 = vsel %vm306, %v2539, 0
        %v2585 = vsel %vm306, %v2540, 0
        %v2588 = vsel %vm306, %v2541, 0
        %v2591 = vsel %vm561, %v2461, 0
        %2593 = vmatpush.bf16.msra.mxu0 0
        %2594 = vmatpush.bf16.msra.mxu0 0
        %2595 = vmatpush.bf16.msra.mxu0 0
        %2596 = vmatpush.bf16.msra.mxu0 0
        %2597 = vmatpush.bf16.msra.mxu0 0
        %2598 = vmatpush.bf16.msra.mxu0 0
        %2599 = vmatpush.bf16.msra.mxu0 0
        %2600 = vmatpush.bf16.msra.mxu0 %v2591
        %2601 = vmatmul.bf16.gmra.mxu0 %v2543
        %v2602 = vpop.f32.mrf.mxu0
        %v2603 = vadd.f32 0.0, %v2602
        %v2604 = vpop.f32.mrf.mxu0
        %v2605 = vadd.f32 0.0, %v2604
        %2606 = vmatmul.bf16.gmra.mxu0 %v2546
        %v2607 = vpop.f32.mrf.mxu0
        %v2608 = vadd.f32 0.0, %v2607
        %v2609 = vpop.f32.mrf.mxu0
        %v2610 = vadd.f32 0.0, %v2609
        %2611 = vmatmul.bf16.gmra.mxu0 %v2549
        %v2612 = vpop.f32.mrf.mxu0
        %v2613 = vadd.f32 0.0, %v2612
        %v2614 = vpop.f32.mrf.mxu0
        %v2615 = vadd.f32 0.0, %v2614
        %2616 = vmatmul.bf16.gmra.mxu0 %v2552
        %v2617 = vpop.f32.mrf.mxu0
        %v2618 = vadd.f32 0.0, %v2617
        %v2619 = vpop.f32.mrf.mxu0
        %v2620 = vadd.f32 0.0, %v2619
        %2621 = vmatmul.bf16.gmra.mxu0 %v2555
        %v2622 = vpop.f32.mrf.mxu0
        %v2623 = vadd.f32 0.0, %v2622
        %v2624 = vpop.f32.mrf.mxu0
        %v2625 = vadd.f32 0.0, %v2624
        %2626 = vmatmul.bf16.gmra.mxu0 %v2558
        %v2627 = vpop.f32.mrf.mxu0
        %v2628 = vadd.f32 0.0, %v2627
        %v2629 = vpop.f32.mrf.mxu0
        %v2630 = vadd.f32 0.0, %v2629
        %2631 = vmatmul.bf16.gmra.mxu0 %v2561
        %v2632 = vpop.f32.mrf.mxu0
        %v2633 = vadd.f32 0.0, %v2632
        %v2634 = vpop.f32.mrf.mxu0
        %v2635 = vadd.f32 0.0, %v2634
        %2636 = vmatmul.bf16.gmra.mxu0 %v2564
        %v2637 = vpop.f32.mrf.mxu0
        %v2638 = vadd.f32 0.0, %v2637
        %v2639 = vpop.f32.mrf.mxu0
        %v2640 = vadd.f32 0.0, %v2639
        %2641 = vmatmul.bf16.gmra.mxu0 %v2567
        %v2642 = vpop.f32.mrf.mxu0
        %v2643 = vadd.f32 0.0, %v2642
        %v2644 = vpop.f32.mrf.mxu0
        %v2645 = vadd.f32 0.0, %v2644
        %2646 = vmatmul.bf16.gmra.mxu0 %v2570
        %v2647 = vpop.f32.mrf.mxu0
        %v2648 = vadd.f32 0.0, %v2647
        %v2649 = vpop.f32.mrf.mxu0
        %v2650 = vadd.f32 0.0, %v2649
        %2651 = vmatmul.bf16.gmra.mxu0 %v2573
        %v2652 = vpop.f32.mrf.mxu0
        %v2653 = vadd.f32 0.0, %v2652
        %v2654 = vpop.f32.mrf.mxu0
        %v2655 = vadd.f32 0.0, %v2654
        %2656 = vmatmul.bf16.gmra.mxu0 %v2576
        %v2657 = vpop.f32.mrf.mxu0
        %v2658 = vadd.f32 0.0, %v2657
        %v2659 = vpop.f32.mrf.mxu0
        %v2660 = vadd.f32 0.0, %v2659
        %2661 = vmatmul.bf16.gmra.mxu0 %v2579
        %v2662 = vpop.f32.mrf.mxu0
        %v2663 = vadd.f32 0.0, %v2662
        %v2664 = vpop.f32.mrf.mxu0
        %v2665 = vadd.f32 0.0, %v2664
        %2666 = vmatmul.bf16.gmra.mxu0 %v2582
        %v2667 = vpop.f32.mrf.mxu0
        %v2668 = vadd.f32 0.0, %v2667
        %v2669 = vpop.f32.mrf.mxu0
        %v2670 = vadd.f32 0.0, %v2669
        %2671 = vmatmul.bf16.gmra.mxu0 %v2585
        %v2672 = vpop.f32.mrf.mxu0
        %v2673 = vadd.f32 0.0, %v2672
        %v2674 = vpop.f32.mrf.mxu0
        %v2675 = vadd.f32 0.0, %v2674
        %2676 = vmatmul.bf16.gmra.mxu0 %v2588
        %v2677 = vpop.f32.mrf.mxu0
        %v2678 = vadd.f32 0.0, %v2677
        %v2679 = vpop.f32.mrf.mxu0
        %v2680 = vadd.f32 0.0, %v2679
        %2681 = vdwg.mxu0
        %v2682 = vadd.f32 %v2462, %v2603
        %v2683 = vadd.f32 %v2463, %v2605
        %v2684 = vadd.f32 %v2464, %v2608
        %v2685 = vadd.f32 %v2465, %v2610
        %v2686 = vadd.f32 %v2466, %v2613
        %v2687 = vadd.f32 %v2467, %v2615
        %v2688 = vadd.f32 %v2468, %v2618
        %v2689 = vadd.f32 %v2469, %v2620
        %v2690 = vadd.f32 %v2470, %v2623
        %v2691 = vadd.f32 %v2471, %v2625
        %v2692 = vadd.f32 %v2472, %v2628
        %v2693 = vadd.f32 %v2473, %v2630
        %v2694 = vadd.f32 %v2474, %v2633
        %v2695 = vadd.f32 %v2475, %v2635
        %v2696 = vadd.f32 %v2476, %v2638
        %v2697 = vadd.f32 %v2477, %v2640
        %v2698 = vadd.f32 %v2478, %v2643
        %v2699 = vadd.f32 %v2479, %v2645
        %v2700 = vadd.f32 %v2480, %v2648
        %v2701 = vadd.f32 %v2481, %v2650
        %v2702 = vadd.f32 %v2482, %v2653
        %v2703 = vadd.f32 %v2483, %v2655
        %v2704 = vadd.f32 %v2484, %v2658
        %v2705 = vadd.f32 %v2485, %v2660
        %v2706 = vadd.f32 %v2486, %v2663
        %v2707 = vadd.f32 %v2487, %v2665
        %v2708 = vadd.f32 %v2488, %v2668
        %v2709 = vadd.f32 %v2489, %v2670
        %v2710 = vadd.f32 %v2490, %v2673
        %v2711 = vadd.f32 %v2491, %v2675
        %v2712 = vadd.f32 %v2492, %v2678
        %v2713 = vadd.f32 %v2493, %v2680
        %2714 = vst.msk [vmem:[#allocation2] sm:$0xff] %vm306, %v2682
        %2715 = vst.msk [vmem:[#allocation2 + $0x8] sm:$0xff] %vm306, %v2683
        %2716 = vst.msk [vmem:[#allocation2 + $0x10] sm:$0xff] %vm306, %v2684
        %2717 = vst.msk [vmem:[#allocation2 + $0x18] sm:$0xff] %vm306, %v2685
        %2718 = vst.msk [vmem:[#allocation2 + $0x20] sm:$0xff] %vm306, %v2686
        %2719 = vst.msk [vmem:[#allocation2 + $0x28] sm:$0xff] %vm306, %v2687
        %2720 = vst.msk [vmem:[#allocation2 + $0x30] sm:$0xff] %vm306, %v2688
        %2721 = vst.msk [vmem:[#allocation2 + $0x38] sm:$0xff] %vm306, %v2689
        %2722 = vst.msk [vmem:[#allocation2 + $0x40] sm:$0xff] %vm306, %v2690
        %2723 = vst.msk [vmem:[#allocation2 + $0x48] sm:$0xff] %vm306, %v2691
        %2724 = vst.msk [vmem:[#allocation2 + $0x50] sm:$0xff] %vm306, %v2692
        %2725 = vst.msk [vmem:[#allocation2 + $0x58] sm:$0xff] %vm306, %v2693
        %2726 = vst.msk [vmem:[#allocation2 + $0x60] sm:$0xff] %vm306, %v2694
        %2727 = vst.msk [vmem:[#allocation2 + $0x68] sm:$0xff] %vm306, %v2695
        %2728 = vst.msk [vmem:[#allocation2 + $0x70] sm:$0xff] %vm306, %v2696
        %2729 = vst.msk [vmem:[#allocation2 + $0x78] sm:$0xff] %vm306, %v2697
        %2730 = vst.msk [vmem:[#allocation2 + $0x80] sm:$0xff] %vm306, %v2698
        %2731 = vst.msk [vmem:[#allocation2 + $0x88] sm:$0xff] %vm306, %v2699
        %2732 = vst.msk [vmem:[#allocation2 + $0x90] sm:$0xff] %vm306, %v2700
        %2733 = vst.msk [vmem:[#allocation2 + $0x98] sm:$0xff] %vm306, %v2701
        %2734 = vst.msk [vmem:[#allocation2 + $0xa0] sm:$0xff] %vm306, %v2702
        %2735 = vst.msk [vmem:[#allocation2 + $0xa8] sm:$0xff] %vm306, %v2703
        %2736 = vst.msk [vmem:[#allocation2 + $0xb0] sm:$0xff] %vm306, %v2704
        %2737 = vst.msk [vmem:[#allocation2 + $0xb8] sm:$0xff] %vm306, %v2705
        %2738 = vst.msk [vmem:[#allocation2 + $0xc0] sm:$0xff] %vm306, %v2706
        %2739 = vst.msk [vmem:[#allocation2 + $0xc8] sm:$0xff] %vm306, %v2707
        %2740 = vst.msk [vmem:[#allocation2 + $0xd0] sm:$0xff] %vm306, %v2708
        %2741 = vst.msk [vmem:[#allocation2 + $0xd8] sm:$0xff] %vm306, %v2709
        %2742 = vst.msk [vmem:[#allocation2 + $0xe0] sm:$0xff] %vm306, %v2710
        %2743 = vst.msk [vmem:[#allocation2 + $0xe8] sm:$0xff] %vm306, %v2711
        %2744 = vst.msk [vmem:[#allocation2 + $0xf0] sm:$0xff] %vm306, %v2712
        %2745 = vst.msk [vmem:[#allocation2 + $0xf8] sm:$0xff] %vm306, %v2713
        %vm2746 = vsmask.f32 1280
        %vm2747 = vsmask.f32 5392
        %vm2748 = vmor %vm2746, %vm2747
        %v2749 = vrot.slane %v722, 6
        %v2750 = vrot.slane %v725, 7
        %v2751 = vor.u32 %v2749, %v2750
        %v2752 = vrot.slane %v2751, 4
        %v2753 = vrot.slane %v735, 6
        %v2754 = vrot.slane %v731, 7
        %v2755 = vor.u32 %v2753, %v2754
        %v2756 = vsel %vm2748, %v2752, %v2755
        %v2757 = vrot.slane %v2755, 4
        %v2758 = vrot.slane %v1824, 6
        %v2759 = vrot.slane %v741, 7
        %v2760 = vor.u32 %v2758, %v2759
        %v2761 = vsel %vm2748, %v2757, %v2760
        %v2762 = vrot.slane %v746, 6
        %v2763 = vrot.slane %v749, 7
        %v2764 = vor.u32 %v2762, %v2763
        %v2765 = vrot.slane %v2764, 4
        %v2766 = vrot.slane %v759, 6
        %v2767 = vrot.slane %v755, 7
        %v2768 = vor.u32 %v2766, %v2767
        %v2769 = vsel %vm2748, %v2765, %v2768
        %v2770 = vrot.slane %v2768, 4
        %v2771 = vrot.slane %v1839, 6
        %v2772 = vrot.slane %v765, 7
        %v2773 = vor.u32 %v2771, %v2772
        %v2774 = vsel %vm2748, %v2770, %v2773
        %v2775 = vrot.slane %v770, 6
        %v2776 = vrot.slane %v773, 7
        %v2777 = vor.u32 %v2775, %v2776
        %v2778 = vrot.slane %v2777, 4
        %v2779 = vrot.slane %v783, 6
        %v2780 = vrot.slane %v779, 7
        %v2781 = vor.u32 %v2779, %v2780
        %v2782 = vsel %vm2748, %v2778, %v2781
        %v2783 = vrot.slane %v2781, 4
        %v2784 = vrot.slane %v1854, 6
        %v2785 = vrot.slane %v789, 7
        %v2786 = vor.u32 %v2784, %v2785
        %v2787 = vsel %vm2748, %v2783, %v2786
        %v2788 = vrot.slane %v794, 6
        %v2789 = vrot.slane %v797, 7
        %v2790 = vor.u32 %v2788, %v2789
        %v2791 = vrot.slane %v2790, 4
        %v2792 = vrot.slane %v807, 6
        %v2793 = vrot.slane %v803, 7
        %v2794 = vor.u32 %v2792, %v2793
        %v2795 = vsel %vm2748, %v2791, %v2794
        %v2796 = vrot.slane %v2794, 4
        %v2797 = vrot.slane %v1869, 6
        %v2798 = vrot.slane %v813, 7
        %v2799 = vor.u32 %v2797, %v2798
        %v2800 = vsel %vm2748, %v2796, %v2799
        %v2801 = vrot.slane %v818, 6
        %v2802 = vrot.slane %v821, 7
        %v2803 = vor.u32 %v2801, %v2802
        %v2804 = vrot.slane %v2803, 4
        %v2805 = vrot.slane %v831, 6
        %v2806 = vrot.slane %v827, 7
        %v2807 = vor.u32 %v2805, %v2806
        %v2808 = vsel %vm2748, %v2804, %v2807
        %v2809 = vrot.slane %v2807, 4
        %v2810 = vrot.slane %v1884, 6
        %v2811 = vrot.slane %v837, 7
        %v2812 = vor.u32 %v2810, %v2811
        %v2813 = vsel %vm2748, %v2809, %v2812
        %v2814 = vrot.slane %v842, 6
        %v2815 = vrot.slane %v845, 7
        %v2816 = vor.u32 %v2814, %v2815
        %v2817 = vrot.slane %v2816, 4
        %v2818 = vrot.slane %v855, 6
        %v2819 = vrot.slane %v851, 7
        %v2820 = vor.u32 %v2818, %v2819
        %v2821 = vsel %vm2748, %v2817, %v2820
        %v2822 = vrot.slane %v2820, 4
        %v2823 = vrot.slane %v1899, 6
        %v2824 = vrot.slane %v861, 7
        %v2825 = vor.u32 %v2823, %v2824
        %v2826 = vsel %vm2748, %v2822, %v2825
        %v2827 = vrot.slane %v866, 6
        %v2828 = vrot.slane %v869, 7
        %v2829 = vor.u32 %v2827, %v2828
        %v2830 = vrot.slane %v2829, 4
        %v2831 = vrot.slane %v879, 6
        %v2832 = vrot.slane %v875, 7
        %v2833 = vor.u32 %v2831, %v2832
        %v2834 = vsel %vm2748, %v2830, %v2833
        %v2835 = vrot.slane %v2833, 4
        %v2836 = vrot.slane %v1914, 6
        %v2837 = vrot.slane %v885, 7
        %v2838 = vor.u32 %v2836, %v2837
        %v2839 = vsel %vm2748, %v2835, %v2838
        %v2840 = vrot.slane %v890, 6
        %v2841 = vrot.slane %v893, 7
        %v2842 = vor.u32 %v2840, %v2841
        %v2843 = vrot.slane %v2842, 4
        %v2844 = vrot.slane %v903, 6
        %v2845 = vrot.slane %v899, 7
        %v2846 = vor.u32 %v2844, %v2845
        %v2847 = vsel %vm2748, %v2843, %v2846
        %v2848 = vrot.slane %v2846, 4
        %v2849 = vrot.slane %v1929, 6
        %v2850 = vrot.slane %v909, 7
        %v2851 = vor.u32 %v2849, %v2850
        %v2852 = vsel %vm2748, %v2848, %v2851
        %v2853 = vrot.slane %v914, 6
        %v2854 = vrot.slane %v917, 7
        %v2855 = vor.u32 %v2853, %v2854
        %v2856 = vrot.slane %v2855, 4
        %v2857 = vrot.slane %v927, 6
        %v2858 = vrot.slane %v923, 7
        %v2859 = vor.u32 %v2857, %v2858
        %v2860 = vsel %vm2748, %v2856, %v2859
        %v2861 = vrot.slane %v2859, 4
        %v2862 = vrot.slane %v1944, 6
        %v2863 = vrot.slane %v933, 7
        %v2864 = vor.u32 %v2862, %v2863
        %v2865 = vsel %vm2748, %v2861, %v2864
        %v2866 = vrot.slane %v938, 6
        %v2867 = vrot.slane %v941, 7
        %v2868 = vor.u32 %v2866, %v2867
        %v2869 = vrot.slane %v2868, 4
        %v2870 = vrot.slane %v951, 6
        %v2871 = vrot.slane %v947, 7
        %v2872 = vor.u32 %v2870, %v2871
        %v2873 = vsel %vm2748, %v2869, %v2872
        %v2874 = vrot.slane %v2872, 4
        %v2875 = vrot.slane %v1959, 6
        %v2876 = vrot.slane %v957, 7
        %v2877 = vor.u32 %v2875, %v2876
        %v2878 = vsel %vm2748, %v2874, %v2877
        %v2879 = vrot.slane %v962, 6
        %v2880 = vrot.slane %v965, 7
        %v2881 = vor.u32 %v2879, %v2880
        %v2882 = vrot.slane %v2881, 4
        %v2883 = vrot.slane %v975, 6
        %v2884 = vrot.slane %v971, 7
        %v2885 = vor.u32 %v2883, %v2884
        %v2886 = vsel %vm2748, %v2882, %v2885
        %v2887 = vrot.slane %v2885, 4
        %v2888 = vrot.slane %v1974, 6
        %v2889 = vrot.slane %v981, 7
        %v2890 = vor.u32 %v2888, %v2889
        %v2891 = vsel %vm2748, %v2887, %v2890
        %v2892 = vrot.slane %v986, 6
        %v2893 = vrot.slane %v989, 7
        %v2894 = vor.u32 %v2892, %v2893
        %v2895 = vrot.slane %v2894, 4
        %v2896 = vrot.slane %v999, 6
        %v2897 = vrot.slane %v995, 7
        %v2898 = vor.u32 %v2896, %v2897
        %v2899 = vsel %vm2748, %v2895, %v2898
        %v2900 = vrot.slane %v2898, 4
        %v2901 = vrot.slane %v1989, 6
        %v2902 = vrot.slane %v1005, 7
        %v2903 = vor.u32 %v2901, %v2902
        %v2904 = vsel %vm2748, %v2900, %v2903
        %v2905 = vrot.slane %v1010, 6
        %v2906 = vrot.slane %v1013, 7
        %v2907 = vor.u32 %v2905, %v2906
        %v2908 = vrot.slane %v2907, 4
        %v2909 = vrot.slane %v1023, 6
        %v2910 = vrot.slane %v1019, 7
        %v2911 = vor.u32 %v2909, %v2910
        %v2912 = vsel %vm2748, %v2908, %v2911
        %v2913 = vrot.slane %v2911, 4
        %v2914 = vrot.slane %v2004, 6
        %v2915 = vrot.slane %v1029, 7
        %v2916 = vor.u32 %v2914, %v2915
        %v2917 = vsel %vm2748, %v2913, %v2916
        %v2918 = vrot.slane %v1034, 6
        %v2919 = vrot.slane %v1037, 7
        %v2920 = vor.u32 %v2918, %v2919
        %v2921 = vrot.slane %v2920, 4
        %v2922 = vrot.slane %v1047, 6
        %v2923 = vrot.slane %v1043, 7
        %v2924 = vor.u32 %v2922, %v2923
        %v2925 = vsel %vm2748, %v2921, %v2924
        %v2926 = vrot.slane %v2924, 4
        %v2927 = vrot.slane %v2019, 6
        %v2928 = vrot.slane %v1053, 7
        %v2929 = vor.u32 %v2927, %v2928
        %v2930 = vsel %vm2748, %v2926, %v2929
        %v2931 = vrot.slane %v1058, 6
        %v2932 = vrot.slane %v1061, 7
        %v2933 = vor.u32 %v2931, %v2932
        %v2934 = vrot.slane %v2933, 4
        %v2935 = vrot.slane %v1071, 6
        %v2936 = vrot.slane %v1067, 7
        %v2937 = vor.u32 %v2935, %v2936
        %v2938 = vsel %vm2748, %v2934, %v2937
        %v2939 = vrot.slane %v2937, 4
        %v2940 = vrot.slane %v2034, 6
        %v2941 = vrot.slane %v1077, 7
        %v2942 = vor.u32 %v2940, %v2941
        %v2943 = vsel %vm2748, %v2939, %v2942
        %v2944 = vrot.slane %v1082, 6
        %v2945 = vrot.slane %v1085, 7
        %v2946 = vor.u32 %v2944, %v2945
        %v2947 = vrot.slane %v2946, 4
        %v2948 = vrot.slane %v1095, 6
        %v2949 = vrot.slane %v1091, 7
        %v2950 = vor.u32 %v2948, %v2949
        %v2951 = vsel %vm2748, %v2947, %v2950
        %v2952 = vrot.slane %v2950, 4
        %v2953 = vrot.slane %v2049, 6
        %v2954 = vrot.slane %v1101, 7
        %v2955 = vor.u32 %v2953, %v2954
        %v2956 = vsel %vm2748, %v2952, %v2955
        %s2957 = sadd.s32 %s397, 5
        %s2958 = smul.addr %s2957, 2
        %s2959 = scalar_lea.vmem %s1, %s2958
        %v2960 = vld [vmem:[%s2959] sm:$0x3]
        %v2961 = vld [vmem:[#allocation2] sm:$0xff]
        %v2962 = vld [vmem:[#allocation2 + $0x8] sm:$0xff]
        %v2963 = vld [vmem:[#allocation2 + $0x10] sm:$0xff]
        %v2964 = vld [vmem:[#allocation2 + $0x18] sm:$0xff]
        %v2965 = vld [vmem:[#allocation2 + $0x20] sm:$0xff]
        %v2966 = vld [vmem:[#allocation2 + $0x28] sm:$0xff]
        %v2967 = vld [vmem:[#allocation2 + $0x30] sm:$0xff]
        %v2968 = vld [vmem:[#allocation2 + $0x38] sm:$0xff]
        %v2969 = vld [vmem:[#allocation2 + $0x40] sm:$0xff]
        %v2970 = vld [vmem:[#allocation2 + $0x48] sm:$0xff]
        %v2971 = vld [vmem:[#allocation2 + $0x50] sm:$0xff]
        %v2972 = vld [vmem:[#allocation2 + $0x58] sm:$0xff]
        %v2973 = vld [vmem:[#allocation2 + $0x60] sm:$0xff]
        %v2974 = vld [vmem:[#allocation2 + $0x68] sm:$0xff]
        %v2975 = vld [vmem:[#allocation2 + $0x70] sm:$0xff]
        %v2976 = vld [vmem:[#allocation2 + $0x78] sm:$0xff]
        %v2977 = vld [vmem:[#allocation2 + $0x80] sm:$0xff]
        %v2978 = vld [vmem:[#allocation2 + $0x88] sm:$0xff]
        %v2979 = vld [vmem:[#allocation2 + $0x90] sm:$0xff]
        %v2980 = vld [vmem:[#allocation2 + $0x98] sm:$0xff]
        %v2981 = vld [vmem:[#allocation2 + $0xa0] sm:$0xff]
        %v2982 = vld [vmem:[#allocation2 + $0xa8] sm:$0xff]
        %v2983 = vld [vmem:[#allocation2 + $0xb0] sm:$0xff]
        %v2984 = vld [vmem:[#allocation2 + $0xb8] sm:$0xff]
        %v2985 = vld [vmem:[#allocation2 + $0xc0] sm:$0xff]
        %v2986 = vld [vmem:[#allocation2 + $0xc8] sm:$0xff]
        %v2987 = vld [vmem:[#allocation2 + $0xd0] sm:$0xff]
        %v2988 = vld [vmem:[#allocation2 + $0xd8] sm:$0xff]
        %v2989 = vld [vmem:[#allocation2 + $0xe0] sm:$0xff]
        %v2990 = vld [vmem:[#allocation2 + $0xe8] sm:$0xff]
        %v2991 = vld [vmem:[#allocation2 + $0xf0] sm:$0xff]
        %v2992 = vld [vmem:[#allocation2 + $0xf8] sm:$0xff]
        %v2993 = vunpack.c.l.b16 %v2756
        %v2994 = vunpack.c.l.b16 %v2761
        %v2995 = vunpack.c.l.b16 %v2769
        %v2996 = vunpack.c.l.b16 %v2774
        %v2997 = vunpack.c.l.b16 %v2782
        %v2998 = vunpack.c.l.b16 %v2787
        %v2999 = vunpack.c.l.b16 %v2795
        %v3000 = vunpack.c.l.b16 %v2800
        %v3001 = vunpack.c.l.b16 %v2808
        %v3002 = vunpack.c.l.b16 %v2813
        %v3003 = vunpack.c.l.b16 %v2821
        %v3004 = vunpack.c.l.b16 %v2826
        %v3005 = vunpack.c.l.b16 %v2834
        %v3006 = vunpack.c.l.b16 %v2839
        %v3007 = vunpack.c.l.b16 %v2847
        %v3008 = vunpack.c.l.b16 %v2852
        %v3009 = vunpack.c.l.b16 %v2860
        %v3010 = vunpack.c.l.b16 %v2865
        %v3011 = vunpack.c.l.b16 %v2873
        %v3012 = vunpack.c.l.b16 %v2878
        %v3013 = vunpack.c.l.b16 %v2886
        %v3014 = vunpack.c.l.b16 %v2891
        %v3015 = vunpack.c.l.b16 %v2899
        %v3016 = vunpack.c.l.b16 %v2904
        %v3017 = vunpack.c.l.b16 %v2912
        %v3018 = vunpack.c.l.b16 %v2917
        %v3019 = vunpack.c.l.b16 %v2925
        %v3020 = vunpack.c.l.b16 %v2930
        %v3021 = vunpack.c.l.b16 %v2938
        %v3022 = vunpack.c.l.b16 %v2943
        %v3023 = vunpack.c.l.b16 %v2951
        %v3024 = vunpack.c.l.b16 %v2956
        %v3025 = vpack.c.b16 %v2994, %v2993
        %v3026 = vpack.c.b16 %v2996, %v2995
        %v3027 = vpack.c.b16 %v2998, %v2997
        %v3028 = vpack.c.b16 %v3000, %v2999
        %v3029 = vpack.c.b16 %v3002, %v3001
        %v3030 = vpack.c.b16 %v3004, %v3003
        %v3031 = vpack.c.b16 %v3006, %v3005
        %v3032 = vpack.c.b16 %v3008, %v3007
        %v3033 = vpack.c.b16 %v3010, %v3009
        %v3034 = vpack.c.b16 %v3012, %v3011
        %v3035 = vpack.c.b16 %v3014, %v3013
        %v3036 = vpack.c.b16 %v3016, %v3015
        %v3037 = vpack.c.b16 %v3018, %v3017
        %v3038 = vpack.c.b16 %v3020, %v3019
        %v3039 = vpack.c.b16 %v3022, %v3021
        %v3040 = vpack.c.b16 %v3024, %v3023
        %v3042 = vsel %vm306, %v3025, 0
        %v3045 = vsel %vm306, %v3026, 0
        %v3048 = vsel %vm306, %v3027, 0
        %v3051 = vsel %vm306, %v3028, 0
        %v3054 = vsel %vm306, %v3029, 0
        %v3057 = vsel %vm306, %v3030, 0
        %v3060 = vsel %vm306, %v3031, 0
        %v3063 = vsel %vm306, %v3032, 0
        %v3066 = vsel %vm306, %v3033, 0
        %v3069 = vsel %vm306, %v3034, 0
        %v3072 = vsel %vm306, %v3035, 0
        %v3075 = vsel %vm306, %v3036, 0
        %v3078 = vsel %vm306, %v3037, 0
        %v3081 = vsel %vm306, %v3038, 0
        %v3084 = vsel %vm306, %v3039, 0
        %v3087 = vsel %vm306, %v3040, 0
        %v3090 = vsel %vm561, %v2960, 0
        %3092 = vmatpush.bf16.msra.mxu0 0
        %3093 = vmatpush.bf16.msra.mxu0 0
        %3094 = vmatpush.bf16.msra.mxu0 0
        %3095 = vmatpush.bf16.msra.mxu0 0
        %3096 = vmatpush.bf16.msra.mxu0 0
        %3097 = vmatpush.bf16.msra.mxu0 0
        %3098 = vmatpush.bf16.msra.mxu0 0
        %3099 = vmatpush.bf16.msra.mxu0 %v3090
        %3100 = vmatmul.bf16.gmra.mxu0 %v3042
        %v3101 = vpop.f32.mrf.mxu0
        %v3102 = vadd.f32 0.0, %v3101
        %v3103 = vpop.f32.mrf.mxu0
        %v3104 = vadd.f32 0.0, %v3103
        %3105 = vmatmul.bf16.gmra.mxu0 %v3045
        %v3106 = vpop.f32.mrf.mxu0
        %v3107 = vadd.f32 0.0, %v3106
        %v3108 = vpop.f32.mrf.mxu0
        %v3109 = vadd.f32 0.0, %v3108
        %3110 = vmatmul.bf16.gmra.mxu0 %v3048
        %v3111 = vpop.f32.mrf.mxu0
        %v3112 = vadd.f32 0.0, %v3111
        %v3113 = vpop.f32.mrf.mxu0
        %v3114 = vadd.f32 0.0, %v3113
        %3115 = vmatmul.bf16.gmra.mxu0 %v3051
        %v3116 = vpop.f32.mrf.mxu0
        %v3117 = vadd.f32 0.0, %v3116
        %v3118 = vpop.f32.mrf.mxu0
        %v3119 = vadd.f32 0.0, %v3118
        %3120 = vmatmul.bf16.gmra.mxu0 %v3054
        %v3121 = vpop.f32.mrf.mxu0
        %v3122 = vadd.f32 0.0, %v3121
        %v3123 = vpop.f32.mrf.mxu0
        %v3124 = vadd.f32 0.0, %v3123
        %3125 = vmatmul.bf16.gmra.mxu0 %v3057
        %v3126 = vpop.f32.mrf.mxu0
        %v3127 = vadd.f32 0.0, %v3126
        %v3128 = vpop.f32.mrf.mxu0
        %v3129 = vadd.f32 0.0, %v3128
        %3130 = vmatmul.bf16.gmra.mxu0 %v3060
        %v3131 = vpop.f32.mrf.mxu0
        %v3132 = vadd.f32 0.0, %v3131
        %v3133 = vpop.f32.mrf.mxu0
        %v3134 = vadd.f32 0.0, %v3133
        %3135 = vmatmul.bf16.gmra.mxu0 %v3063
        %v3136 = vpop.f32.mrf.mxu0
        %v3137 = vadd.f32 0.0, %v3136
        %v3138 = vpop.f32.mrf.mxu0
        %v3139 = vadd.f32 0.0, %v3138
        %3140 = vmatmul.bf16.gmra.mxu0 %v3066
        %v3141 = vpop.f32.mrf.mxu0
        %v3142 = vadd.f32 0.0, %v3141
        %v3143 = vpop.f32.mrf.mxu0
        %v3144 = vadd.f32 0.0, %v3143
        %3145 = vmatmul.bf16.gmra.mxu0 %v3069
        %v3146 = vpop.f32.mrf.mxu0
        %v3147 = vadd.f32 0.0, %v3146
        %v3148 = vpop.f32.mrf.mxu0
        %v3149 = vadd.f32 0.0, %v3148
        %3150 = vmatmul.bf16.gmra.mxu0 %v3072
        %v3151 = vpop.f32.mrf.mxu0
        %v3152 = vadd.f32 0.0, %v3151
        %v3153 = vpop.f32.mrf.mxu0
        %v3154 = vadd.f32 0.0, %v3153
        %3155 = vmatmul.bf16.gmra.mxu0 %v3075
        %v3156 = vpop.f32.mrf.mxu0
        %v3157 = vadd.f32 0.0, %v3156
        %v3158 = vpop.f32.mrf.mxu0
        %v3159 = vadd.f32 0.0, %v3158
        %3160 = vmatmul.bf16.gmra.mxu0 %v3078
        %v3161 = vpop.f32.mrf.mxu0
        %v3162 = vadd.f32 0.0, %v3161
        %v3163 = vpop.f32.mrf.mxu0
        %v3164 = vadd.f32 0.0, %v3163
        %3165 = vmatmul.bf16.gmra.mxu0 %v3081
        %v3166 = vpop.f32.mrf.mxu0
        %v3167 = vadd.f32 0.0, %v3166
        %v3168 = vpop.f32.mrf.mxu0
        %v3169 = vadd.f32 0.0, %v3168
        %3170 = vmatmul.bf16.gmra.mxu0 %v3084
        %v3171 = vpop.f32.mrf.mxu0
        %v3172 = vadd.f32 0.0, %v3171
        %v3173 = vpop.f32.mrf.mxu0
        %v3174 = vadd.f32 0.0, %v3173
        %3175 = vmatmul.bf16.gmra.mxu0 %v3087
        %v3176 = vpop.f32.mrf.mxu0
        %v3177 = vadd.f32 0.0, %v3176
        %v3178 = vpop.f32.mrf.mxu0
        %v3179 = vadd.f32 0.0, %v3178
        %3180 = vdwg.mxu0
        %v3181 = vadd.f32 %v2961, %v3102
        %v3182 = vadd.f32 %v2962, %v3104
        %v3183 = vadd.f32 %v2963, %v3107
        %v3184 = vadd.f32 %v2964, %v3109
        %v3185 = vadd.f32 %v2965, %v3112
        %v3186 = vadd.f32 %v2966, %v3114
        %v3187 = vadd.f32 %v2967, %v3117
        %v3188 = vadd.f32 %v2968, %v3119
        %v3189 = vadd.f32 %v2969, %v3122
        %v3190 = vadd.f32 %v2970, %v3124
        %v3191 = vadd.f32 %v2971, %v3127
        %v3192 = vadd.f32 %v2972, %v3129
        %v3193 = vadd.f32 %v2973, %v3132
        %v3194 = vadd.f32 %v2974, %v3134
        %v3195 = vadd.f32 %v2975, %v3137
        %v3196 = vadd.f32 %v2976, %v3139
        %v3197 = vadd.f32 %v2977, %v3142
        %v3198 = vadd.f32 %v2978, %v3144
        %v3199 = vadd.f32 %v2979, %v3147
        %v3200 = vadd.f32 %v2980, %v3149
        %v3201 = vadd.f32 %v2981, %v3152
        %v3202 = vadd.f32 %v2982, %v3154
        %v3203 = vadd.f32 %v2983, %v3157
        %v3204 = vadd.f32 %v2984, %v3159
        %v3205 = vadd.f32 %v2985, %v3162
        %v3206 = vadd.f32 %v2986, %v3164
        %v3207 = vadd.f32 %v2987, %v3167
        %v3208 = vadd.f32 %v2988, %v3169
        %v3209 = vadd.f32 %v2989, %v3172
        %v3210 = vadd.f32 %v2990, %v3174
        %v3211 = vadd.f32 %v2991, %v3177
        %v3212 = vadd.f32 %v2992, %v3179
        %3213 = vst.msk [vmem:[#allocation2] sm:$0xff] %vm306, %v3181
        %3214 = vst.msk [vmem:[#allocation2 + $0x8] sm:$0xff] %vm306, %v3182
        %3215 = vst.msk [vmem:[#allocation2 + $0x10] sm:$0xff] %vm306, %v3183
        %3216 = vst.msk [vmem:[#allocation2 + $0x18] sm:$0xff] %vm306, %v3184
        %3217 = vst.msk [vmem:[#allocation2 + $0x20] sm:$0xff] %vm306, %v3185
        %3218 = vst.msk [vmem:[#allocation2 + $0x28] sm:$0xff] %vm306, %v3186
        %3219 = vst.msk [vmem:[#allocation2 + $0x30] sm:$0xff] %vm306, %v3187
        %3220 = vst.msk [vmem:[#allocation2 + $0x38] sm:$0xff] %vm306, %v3188
        %3221 = vst.msk [vmem:[#allocation2 + $0x40] sm:$0xff] %vm306, %v3189
        %3222 = vst.msk [vmem:[#allocation2 + $0x48] sm:$0xff] %vm306, %v3190
        %3223 = vst.msk [vmem:[#allocation2 + $0x50] sm:$0xff] %vm306, %v3191
        %3224 = vst.msk [vmem:[#allocation2 + $0x58] sm:$0xff] %vm306, %v3192
        %3225 = vst.msk [vmem:[#allocation2 + $0x60] sm:$0xff] %vm306, %v3193
        %3226 = vst.msk [vmem:[#allocation2 + $0x68] sm:$0xff] %vm306, %v3194
        %3227 = vst.msk [vmem:[#allocation2 + $0x70] sm:$0xff] %vm306, %v3195
        %3228 = vst.msk [vmem:[#allocation2 + $0x78] sm:$0xff] %vm306, %v3196
        %3229 = vst.msk [vmem:[#allocation2 + $0x80] sm:$0xff] %vm306, %v3197
        %3230 = vst.msk [vmem:[#allocation2 + $0x88] sm:$0xff] %vm306, %v3198
        %3231 = vst.msk [vmem:[#allocation2 + $0x90] sm:$0xff] %vm306, %v3199
        %3232 = vst.msk [vmem:[#allocation2 + $0x98] sm:$0xff] %vm306, %v3200
        %3233 = vst.msk [vmem:[#allocation2 + $0xa0] sm:$0xff] %vm306, %v3201
        %3234 = vst.msk [vmem:[#allocation2 + $0xa8] sm:$0xff] %vm306, %v3202
        %3235 = vst.msk [vmem:[#allocation2 + $0xb0] sm:$0xff] %vm306, %v3203
        %3236 = vst.msk [vmem:[#allocation2 + $0xb8] sm:$0xff] %vm306, %v3204
        %3237 = vst.msk [vmem:[#allocation2 + $0xc0] sm:$0xff] %vm306, %v3205
        %3238 = vst.msk [vmem:[#allocation2 + $0xc8] sm:$0xff] %vm306, %v3206
        %3239 = vst.msk [vmem:[#allocation2 + $0xd0] sm:$0xff] %vm306, %v3207
        %3240 = vst.msk [vmem:[#allocation2 + $0xd8] sm:$0xff] %vm306, %v3208
        %3241 = vst.msk [vmem:[#allocation2 + $0xe0] sm:$0xff] %vm306, %v3209
        %3242 = vst.msk [vmem:[#allocation2 + $0xe8] sm:$0xff] %vm306, %v3210
        %3243 = vst.msk [vmem:[#allocation2 + $0xf0] sm:$0xff] %vm306, %v3211
        %3244 = vst.msk [vmem:[#allocation2 + $0xf8] sm:$0xff] %vm306, %v3212
        %vm3245 = vcmask 1040384
        %vm3246 = vcmask 1044484
        %vm3247 = vmor %vm3245, %vm3246
        %v3248 = vrot.slane %v349, 7
        %v3249 = vrot.slane %v3248, 4
        %v3250 = vrot.slane %v350, 7
        %v3251 = vsel %vm3247, %v3249, %v3250
        %v3252 = vrot.slane %v3250, 4
        %v3253 = vrot.slane %v351, 7
        %v3254 = vsel %vm3247, %v3252, %v3253
        %v3255 = vrot.slane %v352, 7
        %v3256 = vrot.slane %v3255, 4
        %v3257 = vrot.slane %v353, 7
        %v3258 = vsel %vm3247, %v3256, %v3257
        %v3259 = vrot.slane %v3257, 4
        %v3260 = vrot.slane %v354, 7
        %v3261 = vsel %vm3247, %v3259, %v3260
        %v3262 = vrot.slane %v355, 7
        %v3263 = vrot.slane %v3262, 4
        %v3264 = vrot.slane %v356, 7
        %v3265 = vsel %vm3247, %v3263, %v3264
        %v3266 = vrot.slane %v3264, 4
        %v3267 = vrot.slane %v357, 7
        %v3268 = vsel %vm3247, %v3266, %v3267
        %v3269 = vrot.slane %v358, 7
        %v3270 = vrot.slane %v3269, 4
        %v3271 = vrot.slane %v359, 7
        %v3272 = vsel %vm3247, %v3270, %v3271
        %v3273 = vrot.slane %v3271, 4
        %v3274 = vrot.slane %v360, 7
        %v3275 = vsel %vm3247, %v3273, %v3274
        %v3276 = vrot.slane %v361, 7
        %v3277 = vrot.slane %v3276, 4
        %v3278 = vrot.slane %v362, 7
        %v3279 = vsel %vm3247, %v3277, %v3278
        %v3280 = vrot.slane %v3278, 4
        %v3281 = vrot.slane %v363, 7
        %v3282 = vsel %vm3247, %v3280, %v3281
        %v3283 = vrot.slane %v364, 7
        %v3284 = vrot.slane %v3283, 4
        %v3285 = vrot.slane %v365, 7
        %v3286 = vsel %vm3247, %v3284, %v3285
        %v3287 = vrot.slane %v3285, 4
        %v3288 = vrot.slane %v366, 7
        %v3289 = vsel %vm3247, %v3287, %v3288
        %v3290 = vrot.slane %v367, 7
        %v3291 = vrot.slane %v3290, 4
        %v3292 = vrot.slane %v368, 7
        %v3293 = vsel %vm3247, %v3291, %v3292
        %v3294 = vrot.slane %v3292, 4
        %v3295 = vrot.slane %v369, 7
        %v3296 = vsel %vm3247, %v3294, %v3295
        %v3297 = vrot.slane %v370, 7
        %v3298 = vrot.slane %v3297, 4
        %v3299 = vrot.slane %v371, 7
        %v3300 = vsel %vm3247, %v3298, %v3299
        %v3301 = vrot.slane %v3299, 4
        %v3302 = vrot.slane %v372, 7
        %v3303 = vsel %vm3247, %v3301, %v3302
        %v3304 = vrot.slane %v373, 7
        %v3305 = vrot.slane %v3304, 4
        %v3306 = vrot.slane %v374, 7
        %v3307 = vsel %vm3247, %v3305, %v3306
        %v3308 = vrot.slane %v3306, 4
        %v3309 = vrot.slane %v375, 7
        %v3310 = vsel %vm3247, %v3308, %v3309
        %v3311 = vrot.slane %v376, 7
        %v3312 = vrot.slane %v3311, 4
        %v3313 = vrot.slane %v377, 7
        %v3314 = vsel %vm3247, %v3312, %v3313
        %v3315 = vrot.slane %v3313, 4
        %v3316 = vrot.slane %v378, 7
        %v3317 = vsel %vm3247, %v3315, %v3316
        %v3318 = vrot.slane %v379, 7
        %v3319 = vrot.slane %v3318, 4
        %v3320 = vrot.slane %v380, 7
        %v3321 = vsel %vm3247, %v3319, %v3320
        %v3322 = vrot.slane %v3320, 4
        %v3323 = vrot.slane %v381, 7
        %v3324 = vsel %vm3247, %v3322, %v3323
        %v3325 = vrot.slane %v382, 7
        %v3326 = vrot.slane %v3325, 4
        %v3327 = vrot.slane %v383, 7
        %v3328 = vsel %vm3247, %v3326, %v3327
        %v3329 = vrot.slane %v3327, 4
        %v3330 = vrot.slane %v384, 7
        %v3331 = vsel %vm3247, %v3329, %v3330
        %v3332 = vrot.slane %v385, 7
        %v3333 = vrot.slane %v3332, 4
        %v3334 = vrot.slane %v386, 7
        %v3335 = vsel %vm3247, %v3333, %v3334
        %v3336 = vrot.slane %v3334, 4
        %v3337 = vrot.slane %v387, 7
        %v3338 = vsel %vm3247, %v3336, %v3337
        %v3339 = vrot.slane %v388, 7
        %v3340 = vrot.slane %v3339, 4
        %v3341 = vrot.slane %v389, 7
        %v3342 = vsel %vm3247, %v3340, %v3341
        %v3343 = vrot.slane %v3341, 4
        %v3344 = vrot.slane %v390, 7
        %v3345 = vsel %vm3247, %v3343, %v3344
        %v3346 = vrot.slane %v391, 7
        %v3347 = vrot.slane %v3346, 4
        %v3348 = vrot.slane %v392, 7
        %v3349 = vsel %vm3247, %v3347, %v3348
        %v3350 = vrot.slane %v3348, 4
        %v3351 = vrot.slane %v393, 7
        %v3352 = vsel %vm3247, %v3350, %v3351
        %v3353 = vrot.slane %v394, 7
        %v3354 = vrot.slane %v3353, 4
        %v3355 = vrot.slane %v395, 7
        %v3356 = vsel %vm3247, %v3354, %v3355
        %v3357 = vrot.slane %v3355, 4
        %v3358 = vrot.slane %v396, 7
        %v3359 = vsel %vm3247, %v3357, %v3358
        %s3360 = sadd.s32 %s397, 6
        %s3361 = smul.addr %s3360, 2
        %s3362 = scalar_lea.vmem %s1, %s3361
        %v3363 = vld [vmem:[%s3362] sm:$0x3]
        %v3364 = vld [vmem:[#allocation2] sm:$0xff]
        %v3365 = vld [vmem:[#allocation2 + $0x8] sm:$0xff]
        %v3366 = vld [vmem:[#allocation2 + $0x10] sm:$0xff]
        %v3367 = vld [vmem:[#allocation2 + $0x18] sm:$0xff]
        %v3368 = vld [vmem:[#allocation2 + $0x20] sm:$0xff]
        %v3369 = vld [vmem:[#allocation2 + $0x28] sm:$0xff]
        %v3370 = vld [vmem:[#allocation2 + $0x30] sm:$0xff]
        %v3371 = vld [vmem:[#allocation2 + $0x38] sm:$0xff]
        %v3372 = vld [vmem:[#allocation2 + $0x40] sm:$0xff]
        %v3373 = vld [vmem:[#allocation2 + $0x48] sm:$0xff]
        %v3374 = vld [vmem:[#allocation2 + $0x50] sm:$0xff]
        %v3375 = vld [vmem:[#allocation2 + $0x58] sm:$0xff]
        %v3376 = vld [vmem:[#allocation2 + $0x60] sm:$0xff]
        %v3377 = vld [vmem:[#allocation2 + $0x68] sm:$0xff]
        %v3378 = vld [vmem:[#allocation2 + $0x70] sm:$0xff]
        %v3379 = vld [vmem:[#allocation2 + $0x78] sm:$0xff]
        %v3380 = vld [vmem:[#allocation2 + $0x80] sm:$0xff]
        %v3381 = vld [vmem:[#allocation2 + $0x88] sm:$0xff]
        %v3382 = vld [vmem:[#allocation2 + $0x90] sm:$0xff]
        %v3383 = vld [vmem:[#allocation2 + $0x98] sm:$0xff]
        %v3384 = vld [vmem:[#allocation2 + $0xa0] sm:$0xff]
        %v3385 = vld [vmem:[#allocation2 + $0xa8] sm:$0xff]
        %v3386 = vld [vmem:[#allocation2 + $0xb0] sm:$0xff]
        %v3387 = vld [vmem:[#allocation2 + $0xb8] sm:$0xff]
        %v3388 = vld [vmem:[#allocation2 + $0xc0] sm:$0xff]
        %v3389 = vld [vmem:[#allocation2 + $0xc8] sm:$0xff]
        %v3390 = vld [vmem:[#allocation2 + $0xd0] sm:$0xff]
        %v3391 = vld [vmem:[#allocation2 + $0xd8] sm:$0xff]
        %v3392 = vld [vmem:[#allocation2 + $0xe0] sm:$0xff]
        %v3393 = vld [vmem:[#allocation2 + $0xe8] sm:$0xff]
        %v3394 = vld [vmem:[#allocation2 + $0xf0] sm:$0xff]
        %v3395 = vld [vmem:[#allocation2 + $0xf8] sm:$0xff]
        %v3396 = vunpack.c.l.b16 %v3251
        %v3397 = vunpack.c.l.b16 %v3254
        %v3398 = vunpack.c.l.b16 %v3258
        %v3399 = vunpack.c.l.b16 %v3261
        %v3400 = vunpack.c.l.b16 %v3265
        %v3401 = vunpack.c.l.b16 %v3268
        %v3402 = vunpack.c.l.b16 %v3272
        %v3403 = vunpack.c.l.b16 %v3275
        %v3404 = vunpack.c.l.b16 %v3279
        %v3405 = vunpack.c.l.b16 %v3282
        %v3406 = vunpack.c.l.b16 %v3286
        %v3407 = vunpack.c.l.b16 %v3289
        %v3408 = vunpack.c.l.b16 %v3293
        %v3409 = vunpack.c.l.b16 %v3296
        %v3410 = vunpack.c.l.b16 %v3300
        %v3411 = vunpack.c.l.b16 %v3303
        %v3412 = vunpack.c.l.b16 %v3307
        %v3413 = vunpack.c.l.b16 %v3310
        %v3414 = vunpack.c.l.b16 %v3314
        %v3415 = vunpack.c.l.b16 %v3317
        %v3416 = vunpack.c.l.b16 %v3321
        %v3417 = vunpack.c.l.b16 %v3324
        %v3418 = vunpack.c.l.b16 %v3328
        %v3419 = vunpack.c.l.b16 %v3331
        %v3420 = vunpack.c.l.b16 %v3335
        %v3421 = vunpack.c.l.b16 %v3338
        %v3422 = vunpack.c.l.b16 %v3342
        %v3423 = vunpack.c.l.b16 %v3345
        %v3424 = vunpack.c.l.b16 %v3349
        %v3425 = vunpack.c.l.b16 %v3352
        %v3426 = vunpack.c.l.b16 %v3356
        %v3427 = vunpack.c.l.b16 %v3359
        %v3428 = vpack.c.b16 %v3397, %v3396
        %v3429 = vpack.c.b16 %v3399, %v3398
        %v3430 = vpack.c.b16 %v3401, %v3400
        %v3431 = vpack.c.b16 %v3403, %v3402
        %v3432 = vpack.c.b16 %v3405, %v3404
        %v3433 = vpack.c.b16 %v3407, %v3406
        %v3434 = vpack.c.b16 %v3409, %v3408
        %v3435 = vpack.c.b16 %v3411, %v3410
        %v3436 = vpack.c.b16 %v3413, %v3412
        %v3437 = vpack.c.b16 %v3415, %v3414
        %v3438 = vpack.c.b16 %v3417, %v3416
        %v3439 = vpack.c.b16 %v3419, %v3418
        %v3440 = vpack.c.b16 %v3421, %v3420
        %v3441 = vpack.c.b16 %v3423, %v3422
        %v3442 = vpack.c.b16 %v3425, %v3424
        %v3443 = vpack.c.b16 %v3427, %v3426
        %v3445 = vsel %vm306, %v3428, 0
        %v3448 = vsel %vm306, %v3429, 0
        %v3451 = vsel %vm306, %v3430, 0
        %v3454 = vsel %vm306, %v3431, 0
        %v3457 = vsel %vm306, %v3432, 0
        %v3460 = vsel %vm306, %v3433, 0
        %v3463 = vsel %vm306, %v3434, 0
        %v3466 = vsel %vm306, %v3435, 0
        %v3469 = vsel %vm306, %v3436, 0
        %v3472 = vsel %vm306, %v3437, 0
        %v3475 = vsel %vm306, %v3438, 0
        %v3478 = vsel %vm306, %v3439, 0
        %v3481 = vsel %vm306, %v3440, 0
        %v3484 = vsel %vm306, %v3441, 0
        %v3487 = vsel %vm306, %v3442, 0
        %v3490 = vsel %vm306, %v3443, 0
        %v3493 = vsel %vm561, %v3363, 0
        %3495 = vmatpush.bf16.msra.mxu0 0
        %3496 = vmatpush.bf16.msra.mxu0 0
        %3497 = vmatpush.bf16.msra.mxu0 0
        %3498 = vmatpush.bf16.msra.mxu0 0
        %3499 = vmatpush.bf16.msra.mxu0 0
        %3500 = vmatpush.bf16.msra.mxu0 0
        %3501 = vmatpush.bf16.msra.mxu0 0
        %3502 = vmatpush.bf16.msra.mxu0 %v3493
        %3503 = vmatmul.bf16.gmra.mxu0 %v3445
        %v3504 = vpop.f32.mrf.mxu0
        %v3505 = vadd.f32 0.0, %v3504
        %v3506 = vpop.f32.mrf.mxu0
        %v3507 = vadd.f32 0.0, %v3506
        %3508 = vmatmul.bf16.gmra.mxu0 %v3448
        %v3509 = vpop.f32.mrf.mxu0
        %v3510 = vadd.f32 0.0, %v3509
        %v3511 = vpop.f32.mrf.mxu0
        %v3512 = vadd.f32 0.0, %v3511
        %3513 = vmatmul.bf16.gmra.mxu0 %v3451
        %v3514 = vpop.f32.mrf.mxu0
        %v3515 = vadd.f32 0.0, %v3514
        %v3516 = vpop.f32.mrf.mxu0
        %v3517 = vadd.f32 0.0, %v3516
        %3518 = vmatmul.bf16.gmra.mxu0 %v3454
        %v3519 = vpop.f32.mrf.mxu0
        %v3520 = vadd.f32 0.0, %v3519
        %v3521 = vpop.f32.mrf.mxu0
        %v3522 = vadd.f32 0.0, %v3521
        %3523 = vmatmul.bf16.gmra.mxu0 %v3457
        %v3524 = vpop.f32.mrf.mxu0
        %v3525 = vadd.f32 0.0, %v3524
        %v3526 = vpop.f32.mrf.mxu0
        %v3527 = vadd.f32 0.0, %v3526
        %3528 = vmatmul.bf16.gmra.mxu0 %v3460
        %v3529 = vpop.f32.mrf.mxu0
        %v3530 = vadd.f32 0.0, %v3529
        %v3531 = vpop.f32.mrf.mxu0
        %v3532 = vadd.f32 0.0, %v3531
        %3533 = vmatmul.bf16.gmra.mxu0 %v3463
        %v3534 = vpop.f32.mrf.mxu0
        %v3535 = vadd.f32 0.0, %v3534
        %v3536 = vpop.f32.mrf.mxu0
        %v3537 = vadd.f32 0.0, %v3536
        %3538 = vmatmul.bf16.gmra.mxu0 %v3466
        %v3539 = vpop.f32.mrf.mxu0
        %v3540 = vadd.f32 0.0, %v3539
        %v3541 = vpop.f32.mrf.mxu0
        %v3542 = vadd.f32 0.0, %v3541
        %3543 = vmatmul.bf16.gmra.mxu0 %v3469
        %v3544 = vpop.f32.mrf.mxu0
        %v3545 = vadd.f32 0.0, %v3544
        %v3546 = vpop.f32.mrf.mxu0
        %v3547 = vadd.f32 0.0, %v3546
        %3548 = vmatmul.bf16.gmra.mxu0 %v3472
        %v3549 = vpop.f32.mrf.mxu0
        %v3550 = vadd.f32 0.0, %v3549
        %v3551 = vpop.f32.mrf.mxu0
        %v3552 = vadd.f32 0.0, %v3551
        %3553 = vmatmul.bf16.gmra.mxu0 %v3475
        %v3554 = vpop.f32.mrf.mxu0
        %v3555 = vadd.f32 0.0, %v3554
        %v3556 = vpop.f32.mrf.mxu0
        %v3557 = vadd.f32 0.0, %v3556
        %3558 = vmatmul.bf16.gmra.mxu0 %v3478
        %v3559 = vpop.f32.mrf.mxu0
        %v3560 = vadd.f32 0.0, %v3559
        %v3561 = vpop.f32.mrf.mxu0
        %v3562 = vadd.f32 0.0, %v3561
        %3563 = vmatmul.bf16.gmra.mxu0 %v3481
        %v3564 = vpop.f32.mrf.mxu0
        %v3565 = vadd.f32 0.0, %v3564
        %v3566 = vpop.f32.mrf.mxu0
        %v3567 = vadd.f32 0.0, %v3566
        %3568 = vmatmul.bf16.gmra.mxu0 %v3484
        %v3569 = vpop.f32.mrf.mxu0
        %v3570 = vadd.f32 0.0, %v3569
        %v3571 = vpop.f32.mrf.mxu0
        %v3572 = vadd.f32 0.0, %v3571
        %3573 = vmatmul.bf16.gmra.mxu0 %v3487
        %v3574 = vpop.f32.mrf.mxu0
        %v3575 = vadd.f32 0.0, %v3574
        %v3576 = vpop.f32.mrf.mxu0
        %v3577 = vadd.f32 0.0, %v3576
        %3578 = vmatmul.bf16.gmra.mxu0 %v3490
        %v3579 = vpop.f32.mrf.mxu0
        %v3580 = vadd.f32 0.0, %v3579
        %v3581 = vpop.f32.mrf.mxu0
        %v3582 = vadd.f32 0.0, %v3581
        %3583 = vdwg.mxu0
        %v3584 = vadd.f32 %v3364, %v3505
        %v3585 = vadd.f32 %v3365, %v3507
        %v3586 = vadd.f32 %v3366, %v3510
        %v3587 = vadd.f32 %v3367, %v3512
        %v3588 = vadd.f32 %v3368, %v3515
        %v3589 = vadd.f32 %v3369, %v3517
        %v3590 = vadd.f32 %v3370, %v3520
        %v3591 = vadd.f32 %v3371, %v3522
        %v3592 = vadd.f32 %v3372, %v3525
        %v3593 = vadd.f32 %v3373, %v3527
        %v3594 = vadd.f32 %v3374, %v3530
        %v3595 = vadd.f32 %v3375, %v3532
        %v3596 = vadd.f32 %v3376, %v3535
        %v3597 = vadd.f32 %v3377, %v3537
        %v3598 = vadd.f32 %v3378, %v3540
        %v3599 = vadd.f32 %v3379, %v3542
        %v3600 = vadd.f32 %v3380, %v3545
        %v3601 = vadd.f32 %v3381, %v3547
        %v3602 = vadd.f32 %v3382, %v3550
        %v3603 = vadd.f32 %v3383, %v3552
        %v3604 = vadd.f32 %v3384, %v3555
        %v3605 = vadd.f32 %v3385, %v3557
        %v3606 = vadd.f32 %v3386, %v3560
        %v3607 = vadd.f32 %v3387, %v3562
        %v3608 = vadd.f32 %v3388, %v3565
        %v3609 = vadd.f32 %v3389, %v3567
        %v3610 = vadd.f32 %v3390, %v3570
        %v3611 = vadd.f32 %v3391, %v3572
        %v3612 = vadd.f32 %v3392, %v3575
        %v3613 = vadd.f32 %v3393, %v3577
        %v3614 = vadd.f32 %v3394, %v3580
        %v3615 = vadd.f32 %v3395, %v3582
        %3616 = vst.msk [vmem:[#allocation2] sm:$0xff] %vm306, %v3584
        %3617 = vst.msk [vmem:[#allocation2 + $0x8] sm:$0xff] %vm306, %v3585
        %3618 = vst.msk [vmem:[#allocation2 + $0x10] sm:$0xff] %vm306, %v3586
        %3619 = vst.msk [vmem:[#allocation2 + $0x18] sm:$0xff] %vm306, %v3587
        %3620 = vst.msk [vmem:[#allocation2 + $0x20] sm:$0xff] %vm306, %v3588
        %3621 = vst.msk [vmem:[#allocation2 + $0x28] sm:$0xff] %vm306, %v3589
        %3622 = vst.msk [vmem:[#allocation2 + $0x30] sm:$0xff] %vm306, %v3590
        %3623 = vst.msk [vmem:[#allocation2 + $0x38] sm:$0xff] %vm306, %v3591
        %3624 = vst.msk [vmem:[#allocation2 + $0x40] sm:$0xff] %vm306, %v3592
        %3625 = vst.msk [vmem:[#allocation2 + $0x48] sm:$0xff] %vm306, %v3593
        %3626 = vst.msk [vmem:[#allocation2 + $0x50] sm:$0xff] %vm306, %v3594
        %3627 = vst.msk [vmem:[#allocation2 + $0x58] sm:$0xff] %vm306, %v3595
        %3628 = vst.msk [vmem:[#allocation2 + $0x60] sm:$0xff] %vm306, %v3596
        %3629 = vst.msk [vmem:[#allocation2 + $0x68] sm:$0xff] %vm306, %v3597
        %3630 = vst.msk [vmem:[#allocation2 + $0x70] sm:$0xff] %vm306, %v3598
        %3631 = vst.msk [vmem:[#allocation2 + $0x78] sm:$0xff] %vm306, %v3599
        %3632 = vst.msk [vmem:[#allocation2 + $0x80] sm:$0xff] %vm306, %v3600
        %3633 = vst.msk [vmem:[#allocation2 + $0x88] sm:$0xff] %vm306, %v3601
        %3634 = vst.msk [vmem:[#allocation2 + $0x90] sm:$0xff] %vm306, %v3602
        %3635 = vst.msk [vmem:[#allocation2 + $0x98] sm:$0xff] %vm306, %v3603
        %3636 = vst.msk [vmem:[#allocation2 + $0xa0] sm:$0xff] %vm306, %v3604
        %3637 = vst.msk [vmem:[#allocation2 + $0xa8] sm:$0xff] %vm306, %v3605
        %3638 = vst.msk [vmem:[#allocation2 + $0xb0] sm:$0xff] %vm306, %v3606
        %3639 = vst.msk [vmem:[#allocation2 + $0xb8] sm:$0xff] %vm306, %v3607
        %3640 = vst.msk [vmem:[#allocation2 + $0xc0] sm:$0xff] %vm306, %v3608
        %3641 = vst.msk [vmem:[#allocation2 + $0xc8] sm:$0xff] %vm306, %v3609
        %3642 = vst.msk [vmem:[#allocation2 + $0xd0] sm:$0xff] %vm306, %v3610
        %3643 = vst.msk [vmem:[#allocation2 + $0xd8] sm:$0xff] %vm306, %v3611
        %3644 = vst.msk [vmem:[#allocation2 + $0xe0] sm:$0xff] %vm306, %v3612
        %3645 = vst.msk [vmem:[#allocation2 + $0xe8] sm:$0xff] %vm306, %v3613
        %3646 = vst.msk [vmem:[#allocation2 + $0xf0] sm:$0xff] %vm306, %v3614
        %3647 = vst.msk [vmem:[#allocation2 + $0xf8] sm:$0xff] %vm306, %v3615
      $region53: #{tpu_custom_call.1} parent=47 // loop_footer
        %s344 = sadd.s32 1, %s340
      $region54: #{tpu_custom_call.1} parent=47 // loop_footer_branch
        %339 = sbr.rel target = $region50
      $region55: #{tpu_custom_call.1} parent=47 // loop_exit
        _
      %v3648 = vld [vmem:[#allocation2] sm:$0xff]
      %v3649 = vld [vmem:[#allocation2 + $0x8] sm:$0xff]
      %v3650 = vld [vmem:[#allocation2 + $0x10] sm:$0xff]
      %v3651 = vld [vmem:[#allocation2 + $0x18] sm:$0xff]
      %v3652 = vld [vmem:[#allocation2 + $0x20] sm:$0xff]
      %v3653 = vld [vmem:[#allocation2 + $0x28] sm:$0xff]
      %v3654 = vld [vmem:[#allocation2 + $0x30] sm:$0xff]
      %v3655 = vld [vmem:[#allocation2 + $0x38] sm:$0xff]
      %v3656 = vld [vmem:[#allocation2 + $0x40] sm:$0xff]
      %v3657 = vld [vmem:[#allocation2 + $0x48] sm:$0xff]
      %v3658 = vld [vmem:[#allocation2 + $0x50] sm:$0xff]
      %v3659 = vld [vmem:[#allocation2 + $0x58] sm:$0xff]
      %v3660 = vld [vmem:[#allocation2 + $0x60] sm:$0xff]
      %v3661 = vld [vmem:[#allocation2 + $0x68] sm:$0xff]
      %v3662 = vld [vmem:[#allocation2 + $0x70] sm:$0xff]
      %v3663 = vld [vmem:[#allocation2 + $0x78] sm:$0xff]
      %v3664 = vld [vmem:[#allocation2 + $0x80] sm:$0xff]
      %v3665 = vld [vmem:[#allocation2 + $0x88] sm:$0xff]
      %v3666 = vld [vmem:[#allocation2 + $0x90] sm:$0xff]
      %v3667 = vld [vmem:[#allocation2 + $0x98] sm:$0xff]
      %v3668 = vld [vmem:[#allocation2 + $0xa0] sm:$0xff]
      %v3669 = vld [vmem:[#allocation2 + $0xa8] sm:$0xff]
      %v3670 = vld [vmem:[#allocation2 + $0xb0] sm:$0xff]
      %v3671 = vld [vmem:[#allocation2 + $0xb8] sm:$0xff]
      %v3672 = vld [vmem:[#allocation2 + $0xc0] sm:$0xff]
      %v3673 = vld [vmem:[#allocation2 + $0xc8] sm:$0xff]
      %v3674 = vld [vmem:[#allocation2 + $0xd0] sm:$0xff]
      %v3675 = vld [vmem:[#allocation2 + $0xd8] sm:$0xff]
      %v3676 = vld [vmem:[#allocation2 + $0xe0] sm:$0xff]
      %v3677 = vld [vmem:[#allocation2 + $0xe8] sm:$0xff]
      %v3678 = vld [vmem:[#allocation2 + $0xf0] sm:$0xff]
      %v3679 = vld [vmem:[#allocation2 + $0xf8] sm:$0xff]
      %v3680 = vld [vmem:[%s2] sm:$0x1]
      %v3682 = vperm.slane %v3680, 0
      %v3684 = vmul.f32 %v3648, %v3682
      %v3685 = vmul.f32 %v3649, %v3682
      %v3686 = vmul.f32 %v3650, %v3682
      %v3687 = vmul.f32 %v3651, %v3682
      %v3688 = vmul.f32 %v3652, %v3682
      %v3689 = vmul.f32 %v3653, %v3682
      %v3690 = vmul.f32 %v3654, %v3682
      %v3691 = vmul.f32 %v3655, %v3682
      %v3692 = vmul.f32 %v3656, %v3682
      %v3693 = vmul.f32 %v3657, %v3682
      %v3694 = vmul.f32 %v3658, %v3682
      %v3695 = vmul.f32 %v3659, %v3682
      %v3696 = vmul.f32 %v3660, %v3682
      %v3697 = vmul.f32 %v3661, %v3682
      %v3698 = vmul.f32 %v3662, %v3682
      %v3699 = vmul.f32 %v3663, %v3682
      %v3700 = vmul.f32 %v3664, %v3682
      %v3701 = vmul.f32 %v3665, %v3682
      %v3702 = vmul.f32 %v3666, %v3682
      %v3703 = vmul.f32 %v3667, %v3682
      %v3704 = vmul.f32 %v3668, %v3682
      %v3705 = vmul.f32 %v3669, %v3682
      %v3706 = vmul.f32 %v3670, %v3682
      %v3707 = vmul.f32 %v3671, %v3682
      %v3708 = vmul.f32 %v3672, %v3682
      %v3709 = vmul.f32 %v3673, %v3682
      %v3710 = vmul.f32 %v3674, %v3682
      %v3711 = vmul.f32 %v3675, %v3682
      %v3712 = vmul.f32 %v3676, %v3682
      %v3713 = vmul.f32 %v3677, %v3682
      %v3714 = vmul.f32 %v3678, %v3682
      %v3715 = vmul.f32 %v3679, %v3682
      %v3716 = vld [vmem:[%s3] sm:$0x1]
      %v3718 = vperm.slane %v3716, 0
      %v3720 = vadd.f32 %v3684, %v3718
      %v3721 = vadd.f32 %v3685, %v3718
      %v3722 = vadd.f32 %v3686, %v3718
      %v3723 = vadd.f32 %v3687, %v3718
      %v3724 = vadd.f32 %v3688, %v3718
      %v3725 = vadd.f32 %v3689, %v3718
      %v3726 = vadd.f32 %v3690, %v3718
      %v3727 = vadd.f32 %v3691, %v3718
      %v3728 = vadd.f32 %v3692, %v3718
      %v3729 = vadd.f32 %v3693, %v3718
      %v3730 = vadd.f32 %v3694, %v3718
      %v3731 = vadd.f32 %v3695, %v3718
      %v3732 = vadd.f32 %v3696, %v3718
      %v3733 = vadd.f32 %v3697, %v3718
      %v3734 = vadd.f32 %v3698, %v3718
      %v3735 = vadd.f32 %v3699, %v3718
      %v3736 = vadd.f32 %v3700, %v3718
      %v3737 = vadd.f32 %v3701, %v3718
      %v3738 = vadd.f32 %v3702, %v3718
      %v3739 = vadd.f32 %v3703, %v3718
      %v3740 = vadd.f32 %v3704, %v3718
      %v3741 = vadd.f32 %v3705, %v3718
      %v3742 = vadd.f32 %v3706, %v3718
      %v3743 = vadd.f32 %v3707, %v3718
      %v3744 = vadd.f32 %v3708, %v3718
      %v3745 = vadd.f32 %v3709, %v3718
      %v3746 = vadd.f32 %v3710, %v3718
      %v3747 = vadd.f32 %v3711, %v3718
      %v3748 = vadd.f32 %v3712, %v3718
      %v3749 = vadd.f32 %v3713, %v3718
      %v3750 = vadd.f32 %v3714, %v3718
      %v3751 = vadd.f32 %v3715, %v3718
      %v3752 = vmax.f32 %v3720, 0.0
      %v3753 = vmax.f32 %v3721, 0.0
      %v3754 = vmax.f32 %v3722, 0.0
      %v3755 = vmax.f32 %v3723, 0.0
      %v3756 = vmax.f32 %v3724, 0.0
      %v3757 = vmax.f32 %v3725, 0.0
      %v3758 = vmax.f32 %v3726, 0.0
      %v3759 = vmax.f32 %v3727, 0.0
      %v3760 = vmax.f32 %v3728, 0.0
      %v3761 = vmax.f32 %v3729, 0.0
      %v3762 = vmax.f32 %v3730, 0.0
      %v3763 = vmax.f32 %v3731, 0.0
      %v3764 = vmax.f32 %v3732, 0.0
      %v3765 = vmax.f32 %v3733, 0.0
      %v3766 = vmax.f32 %v3734, 0.0
      %v3767 = vmax.f32 %v3735, 0.0
      %v3768 = vmax.f32 %v3736, 0.0
      %v3769 = vmax.f32 %v3737, 0.0
      %v3770 = vmax.f32 %v3738, 0.0
      %v3771 = vmax.f32 %v3739, 0.0
      %v3772 = vmax.f32 %v3740, 0.0
      %v3773 = vmax.f32 %v3741, 0.0
      %v3774 = vmax.f32 %v3742, 0.0
      %v3775 = vmax.f32 %v3743, 0.0
      %v3776 = vmax.f32 %v3744, 0.0
      %v3777 = vmax.f32 %v3745, 0.0
      %v3778 = vmax.f32 %v3746, 0.0
      %v3779 = vmax.f32 %v3747, 0.0
      %v3780 = vmax.f32 %v3748, 0.0
      %v3781 = vmax.f32 %v3749, 0.0
      %v3782 = vmax.f32 %v3750, 0.0
      %v3783 = vmax.f32 %v3751, 0.0
      %v3784 = vpack.c.bf16 %v3753, %v3752
      %v3785 = vpack.c.bf16 %v3755, %v3754
      %v3786 = vpack.c.bf16 %v3757, %v3756
      %v3787 = vpack.c.bf16 %v3759, %v3758
      %v3788 = vpack.c.bf16 %v3761, %v3760
      %v3789 = vpack.c.bf16 %v3763, %v3762
      %v3790 = vpack.c.bf16 %v3765, %v3764
      %v3791 = vpack.c.bf16 %v3767, %v3766
      %v3792 = vpack.c.bf16 %v3769, %v3768
      %v3793 = vpack.c.bf16 %v3771, %v3770
      %v3794 = vpack.c.bf16 %v3773, %v3772
      %v3795 = vpack.c.bf16 %v3775, %v3774
      %v3796 = vpack.c.bf16 %v3777, %v3776
      %v3797 = vpack.c.bf16 %v3779, %v3778
      %v3798 = vpack.c.bf16 %v3781, %v3780
      %v3799 = vpack.c.bf16 %v3783, %v3782
      %v3800 = vld [vmem:[%s4] sm:$0x3]
      %v3802 = vsel %vm306, %v3784, 0
      %v3805 = vsel %vm306, %v3785, 0
      %v3808 = vsel %vm306, %v3786, 0
      %v3811 = vsel %vm306, %v3787, 0
      %v3814 = vsel %vm306, %v3788, 0
      %v3817 = vsel %vm306, %v3789, 0
      %v3820 = vsel %vm306, %v3790, 0
      %v3823 = vsel %vm306, %v3791, 0
      %v3826 = vsel %vm306, %v3792, 0
      %v3829 = vsel %vm306, %v3793, 0
      %v3832 = vsel %vm306, %v3794, 0
      %v3835 = vsel %vm306, %v3795, 0
      %v3838 = vsel %vm306, %v3796, 0
      %v3841 = vsel %vm306, %v3797, 0
      %v3844 = vsel %vm306, %v3798, 0
      %v3847 = vsel %vm306, %v3799, 0
      %vm3849 = vcmask 1041408
      %v3851 = vsel %vm3849, %v3800, 0
      %3853 = vmatpush.bf16.msra.mxu0 0
      %3854 = vmatpush.bf16.msra.mxu0 0
      %3855 = vmatpush.bf16.msra.mxu0 0
      %3856 = vmatpush.bf16.msra.mxu0 0
      %3857 = vmatpush.bf16.msra.mxu0 0
      %3858 = vmatpush.bf16.msra.mxu0 0
      %3859 = vmatpush.bf16.msra.mxu0 0
      %3860 = vmatpush.bf16.msra.mxu0 %v3851
      %3861 = vmatmul.bf16.gmra.mxu0 %v3802
      %v3862 = vpop.f32.mrf.mxu0
      %v3863 = vadd.f32 0.0, %v3862
      %v3864 = vpop.f32.mrf.mxu0
      %v3865 = vadd.f32 0.0, %v3864
      %3866 = vmatmul.bf16.gmra.mxu0 %v3805
      %v3867 = vpop.f32.mrf.mxu0
      %v3868 = vadd.f32 0.0, %v3867
      %v3869 = vpop.f32.mrf.mxu0
      %v3870 = vadd.f32 0.0, %v3869
      %3871 = vmatmul.bf16.gmra.mxu0 %v3808
      %v3872 = vpop.f32.mrf.mxu0
      %v3873 = vadd.f32 0.0, %v3872
      %v3874 = vpop.f32.mrf.mxu0
      %v3875 = vadd.f32 0.0, %v3874
      %3876 = vmatmul.bf16.gmra.mxu0 %v3811
      %v3877 = vpop.f32.mrf.mxu0
      %v3878 = vadd.f32 0.0, %v3877
      %v3879 = vpop.f32.mrf.mxu0
      %v3880 = vadd.f32 0.0, %v3879
      %3881 = vmatmul.bf16.gmra.mxu0 %v3814
      %v3882 = vpop.f32.mrf.mxu0
      %v3883 = vadd.f32 0.0, %v3882
      %v3884 = vpop.f32.mrf.mxu0
      %v3885 = vadd.f32 0.0, %v3884
      %3886 = vmatmul.bf16.gmra.mxu0 %v3817
      %v3887 = vpop.f32.mrf.mxu0
      %v3888 = vadd.f32 0.0, %v3887
      %v3889 = vpop.f32.mrf.mxu0
      %v3890 = vadd.f32 0.0, %v3889
      %3891 = vmatmul.bf16.gmra.mxu0 %v3820
      %v3892 = vpop.f32.mrf.mxu0
      %v3893 = vadd.f32 0.0, %v3892
      %v3894 = vpop.f32.mrf.mxu0
      %v3895 = vadd.f32 0.0, %v3894
      %3896 = vmatmul.bf16.gmra.mxu0 %v3823
      %v3897 = vpop.f32.mrf.mxu0
      %v3898 = vadd.f32 0.0, %v3897
      %v3899 = vpop.f32.mrf.mxu0
      %v3900 = vadd.f32 0.0, %v3899
      %3901 = vmatmul.bf16.gmra.mxu0 %v3826
      %v3902 = vpop.f32.mrf.mxu0
      %v3903 = vadd.f32 0.0, %v3902
      %v3904 = vpop.f32.mrf.mxu0
      %v3905 = vadd.f32 0.0, %v3904
      %3906 = vmatmul.bf16.gmra.mxu0 %v3829
      %v3907 = vpop.f32.mrf.mxu0
      %v3908 = vadd.f32 0.0, %v3907
      %v3909 = vpop.f32.mrf.mxu0
      %v3910 = vadd.f32 0.0, %v3909
      %3911 = vmatmul.bf16.gmra.mxu0 %v3832
      %v3912 = vpop.f32.mrf.mxu0
      %v3913 = vadd.f32 0.0, %v3912
      %v3914 = vpop.f32.mrf.mxu0
      %v3915 = vadd.f32 0.0, %v3914
      %3916 = vmatmul.bf16.gmra.mxu0 %v3835
      %v3917 = vpop.f32.mrf.mxu0
      %v3918 = vadd.f32 0.0, %v3917
      %v3919 = vpop.f32.mrf.mxu0
      %v3920 = vadd.f32 0.0, %v3919
      %3921 = vmatmul.bf16.gmra.mxu0 %v3838
      %v3922 = vpop.f32.mrf.mxu0
      %v3923 = vadd.f32 0.0, %v3922
      %v3924 = vpop.f32.mrf.mxu0
      %v3925 = vadd.f32 0.0, %v3924
      %3926 = vmatmul.bf16.gmra.mxu0 %v3841
      %v3927 = vpop.f32.mrf.mxu0
      %v3928 = vadd.f32 0.0, %v3927
      %v3929 = vpop.f32.mrf.mxu0
      %v3930 = vadd.f32 0.0, %v3929
      %3931 = vmatmul.bf16.gmra.mxu0 %v3844
      %v3932 = vpop.f32.mrf.mxu0
      %v3933 = vadd.f32 0.0, %v3932
      %v3934 = vpop.f32.mrf.mxu0
      %v3935 = vadd.f32 0.0, %v3934
      %3936 = vmatmul.bf16.gmra.mxu0 %v3847
      %v3937 = vpop.f32.mrf.mxu0
      %v3938 = vadd.f32 0.0, %v3937
      %v3939 = vpop.f32.mrf.mxu0
      %v3940 = vadd.f32 0.0, %v3939
      %3941 = vdwg.mxu0
      %v3942 = vld [vmem:[%s5] sm:$0x1]
      %v3944 = vperm.slane %v3942, 0
      %v3946 = vmul.f32 %v3863, %v3944
      %v3947 = vmul.f32 %v3865, %v3944
      %v3948 = vmul.f32 %v3868, %v3944
      %v3949 = vmul.f32 %v3870, %v3944
      %v3950 = vmul.f32 %v3873, %v3944
      %v3951 = vmul.f32 %v3875, %v3944
      %v3952 = vmul.f32 %v3878, %v3944
      %v3953 = vmul.f32 %v3880, %v3944
      %v3954 = vmul.f32 %v3883, %v3944
      %v3955 = vmul.f32 %v3885, %v3944
      %v3956 = vmul.f32 %v3888, %v3944
      %v3957 = vmul.f32 %v3890, %v3944
      %v3958 = vmul.f32 %v3893, %v3944
      %v3959 = vmul.f32 %v3895, %v3944
      %v3960 = vmul.f32 %v3898, %v3944
      %v3961 = vmul.f32 %v3900, %v3944
      %v3962 = vmul.f32 %v3903, %v3944
      %v3963 = vmul.f32 %v3905, %v3944
      %v3964 = vmul.f32 %v3908, %v3944
      %v3965 = vmul.f32 %v3910, %v3944
      %v3966 = vmul.f32 %v3913, %v3944
      %v3967 = vmul.f32 %v3915, %v3944
      %v3968 = vmul.f32 %v3918, %v3944
      %v3969 = vmul.f32 %v3920, %v3944
      %v3970 = vmul.f32 %v3923, %v3944
      %v3971 = vmul.f32 %v3925, %v3944
      %v3972 = vmul.f32 %v3928, %v3944
      %v3973 = vmul.f32 %v3930, %v3944
      %v3974 = vmul.f32 %v3933, %v3944
      %v3975 = vmul.f32 %v3935, %v3944
      %v3976 = vmul.f32 %v3938, %v3944
      %v3977 = vmul.f32 %v3940, %v3944
      %v3978 = vld [vmem:[%s6] sm:$0x1]
      %v3980 = vperm.slane %v3978, 0
      %v3982 = vadd.f32 %v3946, %v3980
      %v3983 = vadd.f32 %v3947, %v3980
      %v3984 = vadd.f32 %v3948, %v3980
      %v3985 = vadd.f32 %v3949, %v3980
      %v3986 = vadd.f32 %v3950, %v3980
      %v3987 = vadd.f32 %v3951, %v3980
      %v3988 = vadd.f32 %v3952, %v3980
      %v3989 = vadd.f32 %v3953, %v3980
      %v3990 = vadd.f32 %v3954, %v3980
      %v3991 = vadd.f32 %v3955, %v3980
      %v3992 = vadd.f32 %v3956, %v3980
      %v3993 = vadd.f32 %v3957, %v3980
      %v3994 = vadd.f32 %v3958, %v3980
      %v3995 = vadd.f32 %v3959, %v3980
      %v3996 = vadd.f32 %v3960, %v3980
      %v3997 = vadd.f32 %v3961, %v3980
      %v3998 = vadd.f32 %v3962, %v3980
      %v3999 = vadd.f32 %v3963, %v3980
      %v4000 = vadd.f32 %v3964, %v3980
      %v4001 = vadd.f32 %v3965, %v3980
      %v4002 = vadd.f32 %v3966, %v3980
      %v4003 = vadd.f32 %v3967, %v3980
      %v4004 = vadd.f32 %v3968, %v3980
      %v4005 = vadd.f32 %v3969, %v3980
      %v4006 = vadd.f32 %v3970, %v3980
      %v4007 = vadd.f32 %v3971, %v3980
      %v4008 = vadd.f32 %v3972, %v3980
      %v4009 = vadd.f32 %v3973, %v3980
      %v4010 = vadd.f32 %v3974, %v3980
      %v4011 = vadd.f32 %v3975, %v3980
      %v4012 = vadd.f32 %v3976, %v3980
      %v4013 = vadd.f32 %v3977, %v3980
      %v4014 = vmax.f32 %v3982, 0.0
      %v4015 = vmax.f32 %v3983, 0.0
      %v4016 = vmax.f32 %v3984, 0.0
      %v4017 = vmax.f32 %v3985, 0.0
      %v4018 = vmax.f32 %v3986, 0.0
      %v4019 = vmax.f32 %v3987, 0.0
      %v4020 = vmax.f32 %v3988, 0.0
      %v4021 = vmax.f32 %v3989, 0.0
      %v4022 = vmax.f32 %v3990, 0.0
      %v4023 = vmax.f32 %v3991, 0.0
      %v4024 = vmax.f32 %v3992, 0.0
      %v4025 = vmax.f32 %v3993, 0.0
      %v4026 = vmax.f32 %v3994, 0.0
      %v4027 = vmax.f32 %v3995, 0.0
      %v4028 = vmax.f32 %v3996, 0.0
      %v4029 = vmax.f32 %v3997, 0.0
      %v4030 = vmax.f32 %v3998, 0.0
      %v4031 = vmax.f32 %v3999, 0.0
      %v4032 = vmax.f32 %v4000, 0.0
      %v4033 = vmax.f32 %v4001, 0.0
      %v4034 = vmax.f32 %v4002, 0.0
      %v4035 = vmax.f32 %v4003, 0.0
      %v4036 = vmax.f32 %v4004, 0.0
      %v4037 = vmax.f32 %v4005, 0.0
      %v4038 = vmax.f32 %v4006, 0.0
      %v4039 = vmax.f32 %v4007, 0.0
      %v4040 = vmax.f32 %v4008, 0.0
      %v4041 = vmax.f32 %v4009, 0.0
      %v4042 = vmax.f32 %v4010, 0.0
      %v4043 = vmax.f32 %v4011, 0.0
      %v4044 = vmax.f32 %v4012, 0.0
      %v4045 = vmax.f32 %v4013, 0.0
      %vm4046 = vcmask 64512
      %4047 = vst.msk [vmem:[%s302] sm:$0xff] %vm4046, %v4014
      %4048 = vst.msk [vmem:[%s302 + $0x8] sm:$0xff] %vm4046, %v4015
      %4049 = vst.msk [vmem:[%s302 + $0x10] sm:$0xff] %vm4046, %v4016
      %4050 = vst.msk [vmem:[%s302 + $0x18] sm:$0xff] %vm4046, %v4017
      %4051 = vst.msk [vmem:[%s302 + $0x20] sm:$0xff] %vm4046, %v4018
      %4052 = vst.msk [vmem:[%s302 + $0x28] sm:$0xff] %vm4046, %v4019
      %4053 = vst.msk [vmem:[%s302 + $0x30] sm:$0xff] %vm4046, %v4020
      %4054 = vst.msk [vmem:[%s302 + $0x38] sm:$0xff] %vm4046, %v4021
      %4055 = vst.msk [vmem:[%s302 + $0x40] sm:$0xff] %vm4046, %v4022
      %4056 = vst.msk [vmem:[%s302 + $0x48] sm:$0xff] %vm4046, %v4023
      %4057 = vst.msk [vmem:[%s302 + $0x50] sm:$0xff] %vm4046, %v4024
      %4058 = vst.msk [vmem:[%s302 + $0x58] sm:$0xff] %vm4046, %v4025
      %4059 = vst.msk [vmem:[%s302 + $0x60] sm:$0xff] %vm4046, %v4026
      %4060 = vst.msk [vmem:[%s302 + $0x68] sm:$0xff] %vm4046, %v4027
      %4061 = vst.msk [vmem:[%s302 + $0x70] sm:$0xff] %vm4046, %v4028
      %4062 = vst.msk [vmem:[%s302 + $0x78] sm:$0xff] %vm4046, %v4029
      %4063 = vst.msk [vmem:[%s302 + $0x80] sm:$0xff] %vm4046, %v4030
      %4064 = vst.msk [vmem:[%s302 + $0x88] sm:$0xff] %vm4046, %v4031
      %4065 = vst.msk [vmem:[%s302 + $0x90] sm:$0xff] %vm4046, %v4032
      %4066 = vst.msk [vmem:[%s302 + $0x98] sm:$0xff] %vm4046, %v4033
      %4067 = vst.msk [vmem:[%s302 + $0xa0] sm:$0xff] %vm4046, %v4034
      %4068 = vst.msk [vmem:[%s302 + $0xa8] sm:$0xff] %vm4046, %v4035
      %4069 = vst.msk [vmem:[%s302 + $0xb0] sm:$0xff] %vm4046, %v4036
      %4070 = vst.msk [vmem:[%s302 + $0xb8] sm:$0xff] %vm4046, %v4037
      %4071 = vst.msk [vmem:[%s302 + $0xc0] sm:$0xff] %vm4046, %v4038
      %4072 = vst.msk [vmem:[%s302 + $0xc8] sm:$0xff] %vm4046, %v4039
      %4073 = vst.msk [vmem:[%s302 + $0xd0] sm:$0xff] %vm4046, %v4040
      %4074 = vst.msk [vmem:[%s302 + $0xd8] sm:$0xff] %vm4046, %v4041
      %4075 = vst.msk [vmem:[%s302 + $0xe0] sm:$0xff] %vm4046, %v4042
      %4076 = vst.msk [vmem:[%s302 + $0xe8] sm:$0xff] %vm4046, %v4043
      %4077 = vst.msk [vmem:[%s302 + $0xf0] sm:$0xff] %vm4046, %v4044
      %4078 = vst.msk [vmem:[%s302 + $0xf8] sm:$0xff] %vm4046, %v4045
      %s4079 = smul.u32 16, %s23
      %p4080 = scmp.lt.s32.totalorder %s22, 1
      %s4081 = scalar_select %p4080, %s22, 1
      %p4082 = scmp.lt.s32.totalorder %s4079, 15
      %s4083 = scalar_select %p4082, %s4079, 15
      %s4084 = smul.addr %s4083, 2
      %s4085 = smul.addr %s4081, 32
      %s4086 = sadd.s32 %s4084, %s4085
      %s4087 = smul.addr %s4086, 8
      %s4088 = scalar_lea.vmem %s7, %s4087
      // Predicated region
      $region56: #{tpu_custom_call.1} parent=47 // pred_check
        %p4089 = pneg %p202
      $region57: #{tpu_custom_call.1} parent=47 // pred_check_branch
        %4091 = sbr.rel (%p4089) target = $region59
      $region58: #{tpu_custom_call.1} parent=47 // pred_region
        %s4092 = smul.u32 16, %s23
      $region59: #{tpu_custom_call.1} parent=47 // pred_fallthru
        _
    $region48: #{tpu_custom_call.1} parent=5 // pred_fallthru
      _
    %p4093 = scmp.le.s32.totalorder 2, %s13
    // Predicated region
    $region60: #{tpu_custom_call.1} parent=5 // pred_check
      %p4094 = pneg %p4093
    $region61: #{tpu_custom_call.1} parent=5 // pred_check_branch
      %4096 = sbr.rel (%p4094) target = $region63
    $region62: #{tpu_custom_call.1} parent=5 // pred_region
      %s4097 = ssub.s32 %s13, 2
      // Predicated region
      $region64: #{tpu_custom_call.1} parent=62 // pred_check
        %p4098 = pneg %p208
      $region65: #{tpu_custom_call.1} parent=62 // pred_check_branch
        %4100 = sbr.rel (%p4098) target = $region67
      $region66: #{tpu_custom_call.1} parent=62 // pred_region
        %s4101 = smul.u32 16, %s25
        %p4102 = scmp.lt.s32.totalorder %s24, 1
        %s4103 = scalar_select %p4102, %s24, 1
        %p4104 = scmp.lt.s32.totalorder %s4101, 15
        %s4105 = scalar_select %p4104, %s4101, 15
        %s4106 = smul.addr %s4105, 2
        %s4107 = smul.addr %s4103, 32
        %s4108 = sadd.s32 %s4106, %s4107
        %s4109 = smul.addr %s4108, 8
        %s4110 = scalar_lea.vmem %s7, %s4109
      $region67: #{tpu_custom_call.1} parent=62 // pred_fallthru
        _
    $region63: #{tpu_custom_call.1} parent=5 // pred_fallthru
      _
  $region6: #{tpu_custom_call.1} parent=0 // loop_footer
    %s17 = sadd.s32 1, %s13
  $region7: #{tpu_custom_call.1} parent=0 // loop_footer_branch
    %12 = sbr.rel target = $region3
  $region8: #{tpu_custom_call.1} parent=0 // loop_exit
    _

</llo_original>
